<compile_context>
chip_gen: v7x
topology: tpu7x:2x2x1
jax: 0.10.0
libtpu: 0.0.40
codegen_flags: <defaults>
</compile_context>

<pallas_src>
import functools

import jax
import jax.numpy as jnp
from jax.experimental import pallas as pl
from jax.experimental.pallas import tpu as pltpu

DIM = 3
KERNEL = 4
IN_FEATURES = KERNEL * DIM   # 12
IN_PADDED = 16               # pad contraction dim 12 -> 16 (zeros)
HIDDEN = 512
V = 128                      # stand-in for the undefined global `V`


def mlp_kernel(x_ref, w1_ref, b1_ref, w2_ref, b2_ref, w3_ref, b3_ref, o_ref):
    # Layer 1: relu(x @ W1 + b1)   (bf16 inputs, f32 accumulate)
    h = jnp.dot(x_ref[...], w1_ref[...], preferred_element_type=jnp.float32)
    h = jnp.maximum(h + b1_ref[...], 0.0)
    # Layer 2: relu(h @ W2 + b2)
    h = jnp.dot(h.astype(jnp.bfloat16), w2_ref[...],
                preferred_element_type=jnp.float32)
    h = jnp.maximum(h + b2_ref[...], 0.0)
    # Layer 3: relu(h @ W3 + b3)   (final ReLU is in the original module)
    o = jnp.dot(h.astype(jnp.bfloat16), w3_ref[...],
                preferred_element_type=jnp.float32)
    o_ref[...] = jnp.maximum(o + b3_ref[...], 0.0).astype(o_ref.dtype)


@functools.partial(jax.jit, static_argnames=("block_b",))
def mlp_forward(x, w1, b1, w2, b2, w3, b3, *, block_b=256):
    B, F = x.shape
    assert F == IN_FEATURES
    block_b = min(block_b, B)
    assert B % block_b == 0, "B must be a multiple of block_b"
    assert block_b % 8 == 0, "block_b must be a multiple of 8"
    grid = (B // block_b,)

    # Cast to bf16 for the MXU; zero-pad the layer-1 contraction dim 12 -> 16.
    x_p = jnp.pad(x.astype(jnp.bfloat16), ((0, 0), (0, IN_PADDED - F)))
    w1_p = jnp.pad(w1.astype(jnp.bfloat16), ((0, IN_PADDED - F), (0, 0)))
    w2_b = w2.astype(jnp.bfloat16)
    w3_b = w3.astype(jnp.bfloat16)

    flops = 2 * B * (IN_PADDED * HIDDEN + HIDDEN * HIDDEN + HIDDEN * V)
    bytes_accessed = (
        x_p.size * 2 + w1_p.size * 2 + w2_b.size * 2 + w3_b.size * 2
        + b1.size * 4 + b2.size * 4 + b3.size * 4 + B * V * 4)

    return pl.pallas_call(
        mlp_kernel,
        out_shape=jax.ShapeDtypeStruct((B, V), jnp.float32),
        grid_spec=pltpu.PrefetchScalarGridSpec(
            num_scalar_prefetch=0,
            grid=grid,
            in_specs=[
                pl.BlockSpec((block_b, IN_PADDED), lambda i: (i, 0)),  # x tile
                pl.BlockSpec((IN_PADDED, HIDDEN), lambda i: (0, 0)),   # W1
                pl.BlockSpec((1, HIDDEN), lambda i: (0, 0)),           # b1
                pl.BlockSpec((HIDDEN, HIDDEN), lambda i: (0, 0)),      # W2
                pl.BlockSpec((1, HIDDEN), lambda i: (0, 0)),           # b2
                pl.BlockSpec((HIDDEN, V), lambda i: (0, 0)),           # W3
                pl.BlockSpec((1, V), lambda i: (0, 0)),                # b3
            ],
            out_specs=pl.BlockSpec((block_b, V), lambda i: (i, 0)),
        ),
        compiler_params=pltpu.CompilerParams(
            dimension_semantics=("parallel",)),
        cost_estimate=pl.CostEstimate(
            flops=flops, transcendentals=0, bytes_accessed=bytes_accessed),
    )(x_p, w1_p, b1, w2_b, b2, w3_b, b3)


def init_linear(key, fan_in, fan_out):
    """PyTorch nn.Linear-style uniform init, stored as (in, out)."""
    kw, kb = jax.random.split(key)
    bound = 1.0 / jnp.sqrt(fan_in)
    w = jax.random.uniform(kw, (fan_in, fan_out), jnp.float32, -bound, bound)
    b = jax.random.uniform(kb, (1, fan_out), jnp.float32, -bound, bound)
    return w, b


def reference_forward(x, w1, b1, w2, b2, w3, b3):
    """Pure-JAX reference with the same bf16 matmul / f32 accumulate recipe."""
    h = jnp.dot(x.astype(jnp.bfloat16), w1.astype(jnp.bfloat16),
                preferred_element_type=jnp.float32)
    h = jnp.maximum(h + b1, 0.0)
    h = jnp.dot(h.astype(jnp.bfloat16), w2.astype(jnp.bfloat16),
                preferred_element_type=jnp.float32)
    h = jnp.maximum(h + b2, 0.0)
    o = jnp.dot(h.astype(jnp.bfloat16), w3.astype(jnp.bfloat16),
                preferred_element_type=jnp.float32)
    return jnp.maximum(o + b3, 0.0)


if __name__ == "__main__":
    key = jax.random.PRNGKey(0)
    kx, k1, k2, k3 = jax.random.split(key, 4)

    # B=512 with block_b=256 -> grid of 2 steps (both TCs busy on v7x),
    # while each step still does ~0.3 GFLOP on the MXU.
    B = 512
    x = jax.random.normal(kx, (B, IN_FEATURES), jnp.float32)
    w1, b1 = init_linear(k1, IN_FEATURES, HIDDEN)
    w2, b2 = init_linear(k2, HIDDEN, HIDDEN)
    w3, b3 = init_linear(k3, HIDDEN, V)

    out = mlp_forward(x, w1, b1, w2, b2, w3, b3, block_b=256)
    out = jax.block_until_ready(out)

    ref = reference_forward(x, w1, b1, w2, b2, w3, b3)
    assert out.shape == (B, V)
    assert jnp.allclose(out, ref, atol=2e-2, rtol=2e-2), "mismatch vs reference"

    print("KERNEL_OK")
</pallas_src>

<mosaic_0001>
module attributes {stable_mosaic.version = 11 : i64} {
  func.func @mlp_kernel(%arg0: i32, %arg1: memref<256x16xbf16, #tpu.memory_space<vmem>>, %arg2: memref<16x512xbf16, #tpu.memory_space<vmem>>, %arg3: memref<1x512xf32, #tpu.memory_space<vmem>>, %arg4: memref<512x512xbf16, #tpu.memory_space<vmem>>, %arg5: memref<1x512xf32, #tpu.memory_space<vmem>>, %arg6: memref<512x128xbf16, #tpu.memory_space<vmem>>, %arg7: memref<1x128xf32, #tpu.memory_space<vmem>>, %arg8: memref<256x128xf32, #tpu.memory_space<vmem>>) attributes {dimension_semantics = [#tpu.dimension_semantics<parallel>], iteration_bounds = array<i64: 2>, scalar_prefetch = 0 : i64, scratch_operands = 0 : i64, tpu.core_type = #tpu.core_type<tc>, window_params = [{transform_indices = @transform_0, window_bounds = array<i64: 256, 16>}, {pipeline_mode = #tpu.pipeline_mode<synchronous>, transform_indices = @transform_1, window_bounds = array<i64: 16, 512>}, {pipeline_mode = #tpu.pipeline_mode<synchronous>, transform_indices = @transform_2, window_bounds = array<i64: 1, 512>}, {pipeline_mode = #tpu.pipeline_mode<synchronous>, transform_indices = @transform_3, window_bounds = array<i64: 512, 512>}, {pipeline_mode = #tpu.pipeline_mode<synchronous>, transform_indices = @transform_4, window_bounds = array<i64: 1, 512>}, {pipeline_mode = #tpu.pipeline_mode<synchronous>, transform_indices = @transform_5, window_bounds = array<i64: 512, 128>}, {pipeline_mode = #tpu.pipeline_mode<synchronous>, transform_indices = @transform_6, window_bounds = array<i64: 1, 128>}, {transform_indices = @transform_7, window_bounds = array<i64: 256, 128>}]} {
    %c0 = arith.constant 0 : index
    %c0_0 = arith.constant 0 : index
    %0 = vector.load %arg1[%c0, %c0_0] : memref<256x16xbf16, #tpu.memory_space<vmem>>, vector<256x16xbf16>
    %c0_1 = arith.constant 0 : index
    %c0_2 = arith.constant 0 : index
    %1 = vector.load %arg2[%c0_1, %c0_2] : memref<16x512xbf16, #tpu.memory_space<vmem>>, vector<16x512xbf16>
    %cst = arith.constant dense<0.000000e+00> : vector<256x512xf32>
    %2 = tpu.matmul %0, %1, %cst {dimension_numbers = #tpu.dot_dimension_numbers<[1], [0], [0], [1], [0, 0, 1, 1], [], []>} : vector<256x16xbf16>, vector<16x512xbf16>, vector<256x512xf32> -> vector<256x512xf32>
    %c0_3 = arith.constant 0 : index
    %c0_4 = arith.constant 0 : index
    %3 = vector.load %arg3[%c0_3, %c0_4] : memref<1x512xf32, #tpu.memory_space<vmem>>, vector<1x512xf32>
    %4 = vector.broadcast %3 : vector<1x512xf32> to vector<256x512xf32>
    %5 = arith.addf %2, %4 : vector<256x512xf32>
    %cst_5 = arith.constant 0.000000e+00 : f32
    %6 = vector.broadcast %cst_5 : f32 to vector<256x512xf32>
    %7 = arith.maximumf %5, %6 : vector<256x512xf32>
    %8 = arith.truncf %7 : vector<256x512xf32> to vector<256x512xbf16>
    %c0_6 = arith.constant 0 : index
    %c0_7 = arith.constant 0 : index
    %9 = vector.load %arg4[%c0_6, %c0_7] : memref<512x512xbf16, #tpu.memory_space<vmem>>, vector<512x512xbf16>
    %cst_8 = arith.constant dense<0.000000e+00> : vector<256x512xf32>
    %10 = tpu.matmul %8, %9, %cst_8 {dimension_numbers = #tpu.dot_dimension_numbers<[1], [0], [0], [1], [0, 0, 1, 1], [], []>} : vector<256x512xbf16>, vector<512x512xbf16>, vector<256x512xf32> -> vector<256x512xf32>
    %c0_9 = arith.constant 0 : index
    %c0_10 = arith.constant 0 : index
    %11 = vector.load %arg5[%c0_9, %c0_10] : memref<1x512xf32, #tpu.memory_space<vmem>>, vector<1x512xf32>
    %12 = vector.broadcast %11 : vector<1x512xf32> to vector<256x512xf32>
    %13 = arith.addf %10, %12 : vector<256x512xf32>
    %cst_11 = arith.constant 0.000000e+00 : f32
    %14 = vector.broadcast %cst_11 : f32 to vector<256x512xf32>
    %15 = arith.maximumf %13, %14 : vector<256x512xf32>
    %16 = arith.truncf %15 : vector<256x512xf32> to vector<256x512xbf16>
    %c0_12 = arith.constant 0 : index
    %c0_13 = arith.constant 0 : index
    %17 = vector.load %arg6[%c0_12, %c0_13] : memref<512x128xbf16, #tpu.memory_space<vmem>>, vector<512x128xbf16>
    %cst_14 = arith.constant dense<0.000000e+00> : vector<256x128xf32>
    %18 = tpu.matmul %16, %17, %cst_14 {dimension_numbers = #tpu.dot_dimension_numbers<[1], [0], [0], [1], [0, 0, 1, 1], [], []>} : vector<256x512xbf16>, vector<512x128xbf16>, vector<256x128xf32> -> vector<256x128xf32>
    %c0_15 = arith.constant 0 : index
    %c0_16 = arith.constant 0 : index
    %19 = vector.load %arg7[%c0_15, %c0_16] : memref<1x128xf32, #tpu.memory_space<vmem>>, vector<1x128xf32>
    %20 = vector.broadcast %19 : vector<1x128xf32> to vector<256x128xf32>
    %21 = arith.addf %18, %20 : vector<256x128xf32>
    %cst_17 = arith.constant 0.000000e+00 : f32
    %22 = vector.broadcast %cst_17 : f32 to vector<256x128xf32>
    %23 = arith.maximumf %21, %22 : vector<256x128xf32>
    %c0_18 = arith.constant 0 : index
    %c0_19 = arith.constant 0 : index
    %24 = vector.load %arg8[%c0_18, %c0_19] : memref<256x128xf32, #tpu.memory_space<vmem>>, vector<256x128xf32>
    tpu.vector_store %arg8[%c0_18, %c0_19], %23 {strides = array<i32>} : memref<256x128xf32, #tpu.memory_space<vmem>>, vector<256x128xf32>,
    return
  }
  func.func @transform_0(%arg0: i32) -> (i32, i32) {
    %c0_i32 = arith.constant 0 : i32
    %c0_i32_0 = arith.constant 0 : i32
    return %arg0, %c0_i32 : i32, i32
  }
  func.func @transform_1(%arg0: i32) -> (i32, i32) {
    %c0_i32 = arith.constant 0 : i32
    %c0_i32_0 = arith.constant 0 : i32
    %c0_i32_1 = arith.constant 0 : i32
    return %c0_i32, %c0_i32_0 : i32, i32
  }
  func.func @transform_2(%arg0: i32) -> (i32, i32) {
    %c0_i32 = arith.constant 0 : i32
    %c0_i32_0 = arith.constant 0 : i32
    %c0_i32_1 = arith.constant 0 : i32
    return %c0_i32, %c0_i32_0 : i32, i32
  }
  func.func @transform_3(%arg0: i32) -> (i32, i32) {
    %c0_i32 = arith.constant 0 : i32
    %c0_i32_0 = arith.constant 0 : i32
    %c0_i32_1 = arith.constant 0 : i32
    return %c0_i32, %c0_i32_0 : i32, i32
  }
  func.func @transform_4(%arg0: i32) -> (i32, i32) {
    %c0_i32 = arith.constant 0 : i32
    %c0_i32_0 = arith.constant 0 : i32
    %c0_i32_1 = arith.constant 0 : i32
    return %c0_i32, %c0_i32_0 : i32, i32
  }
  func.func @transform_5(%arg0: i32) -> (i32, i32) {
    %c0_i32 = arith.constant 0 : i32
    %c0_i32_0 = arith.constant 0 : i32
    %c0_i32_1 = arith.constant 0 : i32
    return %c0_i32, %c0_i32_0 : i32, i32
  }
  func.func @transform_6(%arg0: i32) -> (i32, i32) {
    %c0_i32 = arith.constant 0 : i32
    %c0_i32_0 = arith.constant 0 : i32
    %c0_i32_1 = arith.constant 0 : i32
    return %c0_i32, %c0_i32_0 : i32, i32
  }
  func.func @transform_7(%arg0: i32) -> (i32, i32) {
    %c0_i32 = arith.constant 0 : i32
    %c0_i32_0 = arith.constant 0 : i32
    return %arg0, %c0_i32 : i32, i32
  }
}

</mosaic_0001>

<llo_original>
// kernel: mlp_forward.1
$region0: #{mlp_forward.1}
  #allocation0 [shape = 'u32[]', space=smem, size = 0x4, offset = 0x4, fixed_abs, tag = 'smem constant byte address 0x4 - core index']
  #allocation1 [shape = 'u32[144,128]{1,0:T(1,128)}', space=vmem, size = 0x12000, scoped, tag = 'internal scratch']
  %s0 = inlined_call_operand.vmem [shape: bf16[512,16], index: 0, kind: input, shape index: {}]
  %s1 = inlined_call_operand.vmem [shape: bf16[16,512], index: 1, kind: input, shape index: {}]
  %s2 = inlined_call_operand.vmem [shape: f32[1,512], index: 2, kind: input, shape index: {}]
  %s3 = inlined_call_operand.vmem [shape: bf16[512,512], index: 3, kind: input, shape index: {}]
  %s4 = inlined_call_operand.vmem [shape: f32[1,512], index: 4, kind: input, shape index: {}]
  %s5 = inlined_call_operand.vmem [shape: bf16[512,128], index: 5, kind: input, shape index: {}]
  %s6 = inlined_call_operand.vmem [shape: f32[1,128], index: 6, kind: input, shape index: {}]
  %s7 = inlined_call_operand.hbm [shape: f32[512,128], index: 7, kind: output, shape index: {}]
  %s8 = sld [smem:[#allocation0]]
  $region61: #{mlp_forward.1} parent=0
    _
  %s10 = ssub.s32 1, %s8
  %s11 = scalar_select 0, %s10, %s8
  $region1: #{mlp_forward.1} parent=0
    #allocation2 [shape = 'u8[262144]{0}', space=vmem, size = 0x40000, scoped, tag = 'output window, operand 0']
    #allocation3 [shape = 's32[2]{0}', space=sflag, size = 0x8, scoped, tag = 'scoped memory for mlp_forward.1']
    %12 = vsyncpa [#allocation3], 0
    %s13 = scalar_lea.sflag [#allocation3], 1
    %14 = vsyncpa %s13, 0
    loop: start=0, step=1, limit=4
    $region2: #{mlp_forward.1} parent=1 // loop_pre_header
      _
    $region3: #{mlp_forward.1} parent=1 // loop_header
      %s16 = sphi 0, %s20
      %p17 = scmp.ge.s32.totalorder %s16, 4
      %s26 = sphi 0, %s28
      %s29 = sphi 0, %s26
      %s30 = sphi 0, %s29
      %s46 = sphi 0, %s30
      %s50 = sphi 0, %s50
      %s52 = sphi 0, %s50
      %s53 = sphi 0, %s52
      %s67 = sphi 0, %s53
      %s71 = sphi 0, %s71
      %s73 = sphi 0, %s71
      %s74 = sphi 0, %s73
      %s88 = sphi 0, %s74
      %s92 = sphi 0, %s92
      %s94 = sphi 0, %s92
      %s95 = sphi 0, %s94
      %s109 = sphi 0, %s95
      %s113 = sphi 0, %s113
      %s115 = sphi 0, %s113
      %s116 = sphi 0, %s115
      %s130 = sphi 0, %s116
      %s134 = sphi 0, %s134
      %s136 = sphi 0, %s134
      %s137 = sphi 0, %s136
      %s151 = sphi 0, %s137
      %s155 = sphi 0, %s155
      %s157 = sphi 0, %s155
      %s158 = sphi 0, %s157
      %s172 = sphi 0, %s158
      %s178 = sphi 0, %s180
      %s181 = sphi 0, %s178
      %s182 = sphi 0, %s181
      %s198 = sphi 0, %s182
    $region4: #{mlp_forward.1} parent=1 // loop_header_branch
      %19 = sbr.rel (%p17) target = $region8
    $region5: #{mlp_forward.1} parent=1 // loop_body
      %s21 = ssub.s32 %s16, 1
      %s22 = ssub.s32 %s16, 2
      %s23 = sadd.s32 %s16, 1
      %s24 = ssub.s32 %s16, %s23
      %p25 = scmp.eq.s32.totalorder %s24, 0
      %s27 = sadd.s32 %s26, 1
      %s28 = scalar_select %p25, %s26, %s27
      %p31 = pneg %p25
      %p32 = scmp.eq.s32.totalorder %s16, 1
      %p33 = por %p31, %p32
      %p34 = scmp.ne.s32.totalorder %s26, %s29
      %p35 = scmp.eq.s32.totalorder %s16, 0
      %p36 = por %p34, %p35
      %p37 = scmp.ne.s32.totalorder %s26, %s29
      %p38 = scmp.eq.s32.totalorder %s21, 1
      %p39 = por %p37, %p38
      %p40 = scmp.ne.s32.totalorder %s29, %s30
      %p41 = scmp.eq.s32.totalorder %s21, 0
      %p42 = por %p40, %p41
      %p43 = scmp.ne.s32.totalorder %s29, %s30
      %p44 = scmp.eq.s32.totalorder %s22, 1
      %p45 = por %p43, %p44
      %p47 = scmp.ne.s32.totalorder %s30, %s46
      %p48 = scmp.eq.s32.totalorder %s22, 0
      %p49 = por %p47, %p48
      %s51 = sadd.s32 %s50, 1
      %p54 = scmp.eq.s32.totalorder %s16, 1
      %p55 = scmp.ne.s32.totalorder %s50, %s52
      %p56 = scmp.eq.s32.totalorder %s16, 0
      %p57 = por %p55, %p56
      %p58 = scmp.ne.s32.totalorder %s50, %s52
      %p59 = scmp.eq.s32.totalorder %s21, 1
      %p60 = por %p58, %p59
      %p61 = scmp.ne.s32.totalorder %s52, %s53
      %p62 = scmp.eq.s32.totalorder %s21, 0
      %p63 = por %p61, %p62
      %p64 = scmp.ne.s32.totalorder %s52, %s53
      %p65 = scmp.eq.s32.totalorder %s22, 1
      %p66 = por %p64, %p65
      %p68 = scmp.ne.s32.totalorder %s53, %s67
      %p69 = scmp.eq.s32.totalorder %s22, 0
      %p70 = por %p68, %p69
      %s72 = sadd.s32 %s71, 1
      %p75 = scmp.eq.s32.totalorder %s16, 1
      %p76 = scmp.ne.s32.totalorder %s71, %s73
      %p77 = scmp.eq.s32.totalorder %s16, 0
      %p78 = por %p76, %p77
      %p79 = scmp.ne.s32.totalorder %s71, %s73
      %p80 = scmp.eq.s32.totalorder %s21, 1
      %p81 = por %p79, %p80
      %p82 = scmp.ne.s32.totalorder %s73, %s74
      %p83 = scmp.eq.s32.totalorder %s21, 0
      %p84 = por %p82, %p83
      %p85 = scmp.ne.s32.totalorder %s73, %s74
      %p86 = scmp.eq.s32.totalorder %s22, 1
      %p87 = por %p85, %p86
      %p89 = scmp.ne.s32.totalorder %s74, %s88
      %p90 = scmp.eq.s32.totalorder %s22, 0
      %p91 = por %p89, %p90
      %s93 = sadd.s32 %s92, 1
      %p96 = scmp.eq.s32.totalorder %s16, 1
      %p97 = scmp.ne.s32.totalorder %s92, %s94
      %p98 = scmp.eq.s32.totalorder %s16, 0
      %p99 = por %p97, %p98
      %p100 = scmp.ne.s32.totalorder %s92, %s94
      %p101 = scmp.eq.s32.totalorder %s21, 1
      %p102 = por %p100, %p101
      %p103 = scmp.ne.s32.totalorder %s94, %s95
      %p104 = scmp.eq.s32.totalorder %s21, 0
      %p105 = por %p103, %p104
      %p106 = scmp.ne.s32.totalorder %s94, %s95
      %p107 = scmp.eq.s32.totalorder %s22, 1
      %p108 = por %p106, %p107
      %p110 = scmp.ne.s32.totalorder %s95, %s109
      %p111 = scmp.eq.s32.totalorder %s22, 0
      %p112 = por %p110, %p111
      %s114 = sadd.s32 %s113, 1
      %p117 = scmp.eq.s32.totalorder %s16, 1
      %p118 = scmp.ne.s32.totalorder %s113, %s115
      %p119 = scmp.eq.s32.totalorder %s16, 0
      %p120 = por %p118, %p119
      %p121 = scmp.ne.s32.totalorder %s113, %s115
      %p122 = scmp.eq.s32.totalorder %s21, 1
      %p123 = por %p121, %p122
      %p124 = scmp.ne.s32.totalorder %s115, %s116
      %p125 = scmp.eq.s32.totalorder %s21, 0
      %p126 = por %p124, %p125
      %p127 = scmp.ne.s32.totalorder %s115, %s116
      %p128 = scmp.eq.s32.totalorder %s22, 1
      %p129 = por %p127, %p128
      %p131 = scmp.ne.s32.totalorder %s116, %s130
      %p132 = scmp.eq.s32.totalorder %s22, 0
      %p133 = por %p131, %p132
      %s135 = sadd.s32 %s134, 1
      %p138 = scmp.eq.s32.totalorder %s16, 1
      %p139 = scmp.ne.s32.totalorder %s134, %s136
      %p140 = scmp.eq.s32.totalorder %s16, 0
      %p141 = por %p139, %p140
      %p142 = scmp.ne.s32.totalorder %s134, %s136
      %p143 = scmp.eq.s32.totalorder %s21, 1
      %p144 = por %p142, %p143
      %p145 = scmp.ne.s32.totalorder %s136, %s137
      %p146 = scmp.eq.s32.totalorder %s21, 0
      %p147 = por %p145, %p146
      %p148 = scmp.ne.s32.totalorder %s136, %s137
      %p149 = scmp.eq.s32.totalorder %s22, 1
      %p150 = por %p148, %p149
      %p152 = scmp.ne.s32.totalorder %s137, %s151
      %p153 = scmp.eq.s32.totalorder %s22, 0
      %p154 = por %p152, %p153
      %s156 = sadd.s32 %s155, 1
      %p159 = scmp.eq.s32.totalorder %s16, 1
      %p160 = scmp.ne.s32.totalorder %s155, %s157
      %p161 = scmp.eq.s32.totalorder %s16, 0
      %p162 = por %p160, %p161
      %p163 = scmp.ne.s32.totalorder %s155, %s157
      %p164 = scmp.eq.s32.totalorder %s21, 1
      %p165 = por %p163, %p164
      %p166 = scmp.ne.s32.totalorder %s157, %s158
      %p167 = scmp.eq.s32.totalorder %s21, 0
      %p168 = por %p166, %p167
      %p169 = scmp.ne.s32.totalorder %s157, %s158
      %p170 = scmp.eq.s32.totalorder %s22, 1
      %p171 = por %p169, %p170
      %p173 = scmp.ne.s32.totalorder %s158, %s172
      %p174 = scmp.eq.s32.totalorder %s22, 0
      %p175 = por %p173, %p174
      %s176 = ssub.s32 %s16, %s23
      %p177 = scmp.eq.s32.totalorder %s176, 0
      %s179 = sadd.s32 %s178, 1
      %s180 = scalar_select %p177, %s178, %s179
      %p183 = pneg %p177
      %p184 = scmp.eq.s32.totalorder %s16, 1
      %p185 = por %p183, %p184
      %p186 = scmp.ne.s32.totalorder %s178, %s181
      %p187 = scmp.eq.s32.totalorder %s16, 0
      %p188 = por %p186, %p187
      %p189 = scmp.ne.s32.totalorder %s178, %s181
      %p190 = scmp.eq.s32.totalorder %s21, 1
      %p191 = por %p189, %p190
      %p192 = scmp.ne.s32.totalorder %s181, %s182
      %p193 = scmp.eq.s32.totalorder %s21, 0
      %p194 = por %p192, %p193
      %p195 = scmp.ne.s32.totalorder %s181, %s182
      %p196 = scmp.eq.s32.totalorder %s22, 1
      %p197 = por %p195, %p196
      %p199 = scmp.ne.s32.totalorder %s182, %s198
      %p200 = scmp.eq.s32.totalorder %s22, 0
      %p201 = por %p199, %p200
      %p202 = scmp.le.s32.totalorder 1, %s16
      %p203 = scmp.lt.s32.totalorder %s16, 3
      %p204 = pnand %p202, %p203
      %p205 = pneg %p204
      // Predicated region
      $region9: #{mlp_forward.1} parent=5 // pred_check
        _
      $region10: #{mlp_forward.1} parent=5 // pred_check_branch
        %207 = sbr.rel (%p204) target = $region12
      $region11: #{mlp_forward.1} parent=5 // pred_region
        %s208 = ssub.s32 %s16, 1
        // Predicated region
        $region13: #{mlp_forward.1} parent=11 // pred_check
          %p209 = pneg %p63
        $region14: #{mlp_forward.1} parent=11 // pred_check_branch
          %211 = sbr.rel (%p209) target = $region16
        $region15: #{mlp_forward.1} parent=11 // pred_region
          _
        $region16: #{mlp_forward.1} parent=11 // pred_fallthru
          _
        // Predicated region
        $region17: #{mlp_forward.1} parent=11 // pred_check
          %p212 = pneg %p84
        $region18: #{mlp_forward.1} parent=11 // pred_check_branch
          %214 = sbr.rel (%p212) target = $region20
        $region19: #{mlp_forward.1} parent=11 // pred_region
          _
        $region20: #{mlp_forward.1} parent=11 // pred_fallthru
          _
        // Predicated region
        $region21: #{mlp_forward.1} parent=11 // pred_check
          %p215 = pneg %p105
        $region22: #{mlp_forward.1} parent=11 // pred_check_branch
          %217 = sbr.rel (%p215) target = $region24
        $region23: #{mlp_forward.1} parent=11 // pred_region
          _
        $region24: #{mlp_forward.1} parent=11 // pred_fallthru
          _
        // Predicated region
        $region25: #{mlp_forward.1} parent=11 // pred_check
          %p218 = pneg %p126
        $region26: #{mlp_forward.1} parent=11 // pred_check_branch
          %220 = sbr.rel (%p218) target = $region28
        $region27: #{mlp_forward.1} parent=11 // pred_region
          _
        $region28: #{mlp_forward.1} parent=11 // pred_fallthru
          _
        // Predicated region
        $region29: #{mlp_forward.1} parent=11 // pred_check
          %p221 = pneg %p147
        $region30: #{mlp_forward.1} parent=11 // pred_check_branch
          %223 = sbr.rel (%p221) target = $region32
        $region31: #{mlp_forward.1} parent=11 // pred_region
          _
        $region32: #{mlp_forward.1} parent=11 // pred_fallthru
          _
        // Predicated region
        $region33: #{mlp_forward.1} parent=11 // pred_check
          %p224 = pneg %p168
        $region34: #{mlp_forward.1} parent=11 // pred_check_branch
          %226 = sbr.rel (%p224) target = $region36
        $region35: #{mlp_forward.1} parent=11 // pred_region
          _
        $region36: #{mlp_forward.1} parent=11 // pred_fallthru
          _
      $region12: #{mlp_forward.1} parent=5 // pred_fallthru
        _
      %p227 = scmp.lt.s32.totalorder %s16, 2
      // Predicated region
      $region37: #{mlp_forward.1} parent=5 // pred_check
        %p228 = pneg %p227
      $region38: #{mlp_forward.1} parent=5 // pred_check_branch
        %230 = sbr.rel (%p228) target = $region40
      $region39: #{mlp_forward.1} parent=5 // pred_region
        // Predicated region
        $region41: #{mlp_forward.1} parent=39 // pred_check
          %p231 = pneg %p36
        $region42: #{mlp_forward.1} parent=39 // pred_check_branch
          %233 = sbr.rel (%p231) target = $region44
        $region43: #{mlp_forward.1} parent=39 // pred_region
          %s234 = smul.u32 32, %s16
          %p235 = scmp.lt.s32.totalorder %s234, 63
          %s236 = scalar_select %p235, %s234, 63
          %s237 = smul.addr %s236, 4
          %s238 = scalar_lea.vmem %s0, %s237
          %s239 = smul.u32 32, %s16
        $region44: #{mlp_forward.1} parent=39 // pred_fallthru
          _
      $region40: #{mlp_forward.1} parent=5 // pred_fallthru
        _
      %p240 = scmp.le.s32.totalorder 1, %s16
      %p241 = scmp.lt.s32.totalorder %s16, 3
      %p242 = pnand %p240, %p241
      %p243 = pneg %p242
      // Predicated region
      $region45: #{mlp_forward.1} parent=5 // pred_check
        _
      $region46: #{mlp_forward.1} parent=5 // pred_check_branch
        %245 = sbr.rel (%p242) target = $region48
      $region47: #{mlp_forward.1} parent=5 // pred_region
        %s246 = ssub.s32 %s16, 1
        %s247 = smul.u32 32, %s21
        %p248 = scmp.lt.s32.totalorder %s247, 63
        %s249 = scalar_select %p248, %s247, 63
        %s250 = smul.addr %s249, 4
        %s251 = scalar_lea.vmem %s0, %s250
        %p252 = pneg %p42
        %p253 = pneg %p39
        %p254 = pneg %p63
        %p255 = pneg %p60
        %p256 = pneg %p84
        %p257 = pneg %p81
        %p258 = pneg %p105
        %p259 = pneg %p102
        %p260 = pneg %p126
        %p261 = pneg %p123
        %p262 = pneg %p147
        %p263 = pneg %p144
        %p264 = pneg %p168
        %p265 = pneg %p165
        %p266 = pneg %p194
        %p267 = pneg %p191
        %s268 = sand.u32 %s181, 1
        %s269 = scalar_lea.sflag [#allocation3], %s268
        %s270 = sand.u32 %s181, 1
        %s271 = smul.addr %s270, 256
        %s272 = scalar_lea.vmem [#allocation2], %s271
        %s273 = smul.u32 32, %s21
        %p274 = scmp.lt.s32.totalorder %s273, 63
        %s275 = scalar_select %p274, %s273, 63
        %s276 = smul.addr %s275, 4
        %s277 = scalar_lea.vmem %s0, %s276
        %s278 = smul.u32 32, %s21
        %s279 = smul.u32 32, %s21
        %v281 = vld [vmem:[%s277] sm:$0xf]
        %v282 = vld [vmem:[%s277 + $0x4] sm:$0xf]
        %v283 = vld [vmem:[%s277 + $0x8] sm:$0xf]
        %v284 = vld [vmem:[%s277 + $0xc] sm:$0xf]
        %v285 = vld [vmem:[%s277 + $0x10] sm:$0xf]
        %v286 = vld [vmem:[%s277 + $0x14] sm:$0xf]
        %v287 = vld [vmem:[%s277 + $0x18] sm:$0xf]
        %v288 = vld [vmem:[%s277 + $0x1c] sm:$0xf]
        %v289 = vld [vmem:[%s277 + $0x20] sm:$0xf]
        %v290 = vld [vmem:[%s277 + $0x24] sm:$0xf]
        %v291 = vld [vmem:[%s277 + $0x28] sm:$0xf]
        %v292 = vld [vmem:[%s277 + $0x2c] sm:$0xf]
        %v293 = vld [vmem:[%s277 + $0x30] sm:$0xf]
        %v294 = vld [vmem:[%s277 + $0x34] sm:$0xf]
        %v295 = vld [vmem:[%s277 + $0x38] sm:$0xf]
        %v296 = vld [vmem:[%s277 + $0x3c] sm:$0xf]
        %v297 = vld [vmem:[%s277 + $0x40] sm:$0xf]
        %v298 = vld [vmem:[%s277 + $0x44] sm:$0xf]
        %v299 = vld [vmem:[%s277 + $0x48] sm:$0xf]
        %v300 = vld [vmem:[%s277 + $0x4c] sm:$0xf]
        %v301 = vld [vmem:[%s277 + $0x50] sm:$0xf]
        %v302 = vld [vmem:[%s277 + $0x54] sm:$0xf]
        %v303 = vld [vmem:[%s277 + $0x58] sm:$0xf]
        %v304 = vld [vmem:[%s277 + $0x5c] sm:$0xf]
        %v305 = vld [vmem:[%s277 + $0x60] sm:$0xf]
        %v306 = vld [vmem:[%s277 + $0x64] sm:$0xf]
        %v307 = vld [vmem:[%s277 + $0x68] sm:$0xf]
        %v308 = vld [vmem:[%s277 + $0x6c] sm:$0xf]
        %v309 = vld [vmem:[%s277 + $0x70] sm:$0xf]
        %v310 = vld [vmem:[%s277 + $0x74] sm:$0xf]
        %v311 = vld [vmem:[%s277 + $0x78] sm:$0xf]
        %v312 = vld [vmem:[%s277 + $0x7c] sm:$0xf]
        %v313 = vld [vmem:[%s1] sm:$0xff]
        %v314 = vld [vmem:[%s1 + $0x8] sm:$0xff]
        %v315 = vld [vmem:[%s1 + $0x10] sm:$0xff]
        %v316 = vld [vmem:[%s1 + $0x18] sm:$0xff]
        %v317 = vld [vmem:[%s2] sm:$0xf]
        %v319 = vlaneseq
        %v320 = vshrl.u32 %v319, 7
        %v321 = vsub.s32 0, %v320
        %v322 = vrot.slane %v317, %v321
        %v323 = vlaneseq
        %v324 = vshrl.u32 %v323, 7
        %v325 = vsub.s32 1, %v324
        %v326 = vrot.slane %v317, %v325
        %v327 = vlaneseq
        %v328 = vshrl.u32 %v327, 7
        %v329 = vsub.s32 2, %v328
        %v330 = vrot.slane %v317, %v329
        %v331 = vlaneseq
        %v332 = vshrl.u32 %v331, 7
        %v333 = vsub.s32 3, %v332
        %v334 = vrot.slane %v317, %v333
        %v371 = vunpack.c.l.b16 %v281
        %v372 = vunpack.c.l.b16 %v282
        %v373 = vunpack.c.l.b16 %v283
        %v374 = vunpack.c.l.b16 %v284
        %v375 = vunpack.c.l.b16 %v285
        %v376 = vunpack.c.l.b16 %v286
        %v377 = vunpack.c.l.b16 %v287
        %v378 = vunpack.c.l.b16 %v288
        %v379 = vunpack.c.l.b16 %v289
        %v380 = vunpack.c.l.b16 %v290
        %v381 = vunpack.c.l.b16 %v291
        %v382 = vunpack.c.l.b16 %v292
        %v383 = vunpack.c.l.b16 %v293
        %v384 = vunpack.c.l.b16 %v294
        %v385 = vunpack.c.l.b16 %v295
        %v386 = vunpack.c.l.b16 %v296
        %v387 = vunpack.c.l.b16 %v297
        %v388 = vunpack.c.l.b16 %v298
        %v389 = vunpack.c.l.b16 %v299
        %v390 = vunpack.c.l.b16 %v300
        %v391 = vunpack.c.l.b16 %v301
        %v392 = vunpack.c.l.b16 %v302
        %v393 = vunpack.c.l.b16 %v303
        %v394 = vunpack.c.l.b16 %v304
        %v395 = vunpack.c.l.b16 %v305
        %v396 = vunpack.c.l.b16 %v306
        %v397 = vunpack.c.l.b16 %v307
        %v398 = vunpack.c.l.b16 %v308
        %v399 = vunpack.c.l.b16 %v309
        %v400 = vunpack.c.l.b16 %v310
        %v401 = vunpack.c.l.b16 %v311
        %v402 = vunpack.c.l.b16 %v312
        %v403 = vpack.c.b16 %v372, %v371
        %v404 = vpack.c.b16 %v374, %v373
        %v405 = vpack.c.b16 %v376, %v375
        %v406 = vpack.c.b16 %v378, %v377
        %v407 = vpack.c.b16 %v380, %v379
        %v408 = vpack.c.b16 %v382, %v381
        %v409 = vpack.c.b16 %v384, %v383
        %v410 = vpack.c.b16 %v386, %v385
        %v411 = vpack.c.b16 %v388, %v387
        %v412 = vpack.c.b16 %v390, %v389
        %v413 = vpack.c.b16 %v392, %v391
        %v414 = vpack.c.b16 %v394, %v393
        %v415 = vpack.c.b16 %v396, %v395
        %v416 = vpack.c.b16 %v398, %v397
        %v417 = vpack.c.b16 %v400, %v399
        %v418 = vpack.c.b16 %v402, %v401
        %v423 = vunpack.c.l.b16 %v313
        %v424 = vunpack.c.h.b16 %v313
        %v425 = vunpack.c.l.b16 %v314
        %v426 = vunpack.c.h.b16 %v314
        %v427 = vunpack.c.l.b16 %v315
        %v428 = vunpack.c.h.b16 %v315
        %v429 = vunpack.c.l.b16 %v316
        %v430 = vunpack.c.h.b16 %v316
        %v431 = vpack.c.b16 %v427, %v423
        %v432 = vpack.c.b16 %v428, %v424
        %v433 = vpack.c.b16 %v429, %v425
        %v434 = vpack.c.b16 %v430, %v426
        %vm439 = vcmask 130048
        %v441 = vsel %vm439, %v403, 0
        %v444 = vsel %vm439, %v404, 0
        %v447 = vsel %vm439, %v405, 0
        %v450 = vsel %vm439, %v406, 0
        %v453 = vsel %vm439, %v407, 0
        %v456 = vsel %vm439, %v408, 0
        %v459 = vsel %vm439, %v409, 0
        %v462 = vsel %vm439, %v410, 0
        %v465 = vsel %vm439, %v411, 0
        %v468 = vsel %vm439, %v412, 0
        %v471 = vsel %vm439, %v413, 0
        %v474 = vsel %vm439, %v414, 0
        %v477 = vsel %vm439, %v415, 0
        %v480 = vsel %vm439, %v416, 0
        %v483 = vsel %vm439, %v417, 0
        %v486 = vsel %vm439, %v418, 0
        %488 = vmatprep.subr.bf16.mxu0 %v432
        %489 = vmatpush1.bf16.msra.mxu0 %v431
        %490 = vmatprep.subr.bf16.mxu0 0
        %491 = vmatpush1.bf16.msra.mxu0 0
        %492 = vmatprep.subr.bf16.mxu0 0
        %493 = vmatpush1.bf16.msra.mxu0 0
        %494 = vmatprep.subr.bf16.mxu0 0
        %495 = vmatpush1.bf16.msra.mxu0 0
        %496 = vmatprep.subr.bf16.mxu0 0
        %497 = vmatpush1.bf16.msra.mxu0 0
        %498 = vmatprep.subr.bf16.mxu0 0
        %499 = vmatpush1.bf16.msra.mxu0 0
        %500 = vmatprep.subr.bf16.mxu0 0
        %501 = vmatpush1.bf16.msra.mxu0 0
        %502 = vmatprep.subr.bf16.mxu0 0
        %503 = vmatpush1.bf16.msra.mxu0 0
        %504 = vmatprep.subr.bf16.mxu0 0
        %505 = vmatpush1.bf16.msra.mxu0 0
        %506 = vmatprep.subr.bf16.mxu0 0
        %507 = vmatpush1.bf16.msra.mxu0 0
        %508 = vmatprep.subr.bf16.mxu0 0
        %509 = vmatpush1.bf16.msra.mxu0 0
        %510 = vmatprep.subr.bf16.mxu0 0
        %511 = vmatpush1.bf16.msra.mxu0 0
        %512 = vmatprep.subr.bf16.mxu0 0
        %513 = vmatpush1.bf16.msra.mxu0 0
        %514 = vmatprep.subr.bf16.mxu0 0
        %515 = vmatpush1.bf16.msra.mxu0 0
        %516 = vmatprep.subr.bf16.mxu0 0
        %517 = vmatpush1.bf16.msra.mxu0 0
        %518 = vmatprep.subr.bf16.mxu0 0
        %519 = vmatpush1.bf16.msra.mxu0 0
        %520 = vmatprep.mubr.bf16.mxu0 0
        %521 = vmatmul.mubr.bf16.gmra.mrb[0].mxu0 %v441
        %v522 = vpop.f32.mrb[0].mxu0
        %v523 = vadd.f32 %v322, %v522
        %v524 = vpop.f32.mrb[0].mxu0
        %v525 = vadd.f32 %v326, %v524
        %v526 = vpop.f32.mrb[0].mxu0
        %v527 = vadd.f32 %v322, %v526
        %v528 = vpop.f32.mrb[0].mxu0
        %v529 = vadd.f32 %v326, %v528
        %530 = vmatprep.mubr.bf16.mxu0 0
        %531 = vmatmul.mubr.bf16.gmra.mrb[0].mxu0 %v444
        %v532 = vpop.f32.mrb[0].mxu0
        %v533 = vadd.f32 %v322, %v532
        %v534 = vpop.f32.mrb[0].mxu0
        %v535 = vadd.f32 %v326, %v534
        %v536 = vpop.f32.mrb[0].mxu0
        %v537 = vadd.f32 %v322, %v536
        %v538 = vpop.f32.mrb[0].mxu0
        %v539 = vadd.f32 %v326, %v538
        %540 = vmatprep.mubr.bf16.mxu0 0
        %541 = vmatmul.mubr.bf16.gmra.mrb[0].mxu0 %v447
        %v542 = vpop.f32.mrb[0].mxu0
        %v543 = vadd.f32 %v322, %v542
        %v544 = vpop.f32.mrb[0].mxu0
        %v545 = vadd.f32 %v326, %v544
        %v546 = vpop.f32.mrb[0].mxu0
        %v547 = vadd.f32 %v322, %v546
        %v548 = vpop.f32.mrb[0].mxu0
        %v549 = vadd.f32 %v326, %v548
        %550 = vmatprep.mubr.bf16.mxu0 0
        %551 = vmatmul.mubr.bf16.gmra.mrb[0].mxu0 %v450
        %v552 = vpop.f32.mrb[0].mxu0
        %v553 = vadd.f32 %v322, %v552
        %v554 = vpop.f32.mrb[0].mxu0
        %v555 = vadd.f32 %v326, %v554
        %v556 = vpop.f32.mrb[0].mxu0
        %v557 = vadd.f32 %v322, %v556
        %v558 = vpop.f32.mrb[0].mxu0
        %v559 = vadd.f32 %v326, %v558
        %560 = vmatprep.mubr.bf16.mxu0 0
        %561 = vmatmul.mubr.bf16.gmra.mrb[0].mxu0 %v453
        %v562 = vpop.f32.mrb[0].mxu0
        %v563 = vadd.f32 %v322, %v562
        %v564 = vpop.f32.mrb[0].mxu0
        %v565 = vadd.f32 %v326, %v564
        %v566 = vpop.f32.mrb[0].mxu0
        %v567 = vadd.f32 %v322, %v566
        %v568 = vpop.f32.mrb[0].mxu0
        %v569 = vadd.f32 %v326, %v568
        %570 = vmatprep.mubr.bf16.mxu0 0
        %571 = vmatmul.mubr.bf16.gmra.mrb[0].mxu0 %v456
        %v572 = vpop.f32.mrb[0].mxu0
        %v573 = vadd.f32 %v322, %v572
        %v574 = vpop.f32.mrb[0].mxu0
        %v575 = vadd.f32 %v326, %v574
        %v576 = vpop.f32.mrb[0].mxu0
        %v577 = vadd.f32 %v322, %v576
        %v578 = vpop.f32.mrb[0].mxu0
        %v579 = vadd.f32 %v326, %v578
        %580 = vmatprep.mubr.bf16.mxu0 0
        %581 = vmatmul.mubr.bf16.gmra.mrb[0].mxu0 %v459
        %v582 = vpop.f32.mrb[0].mxu0
        %v583 = vadd.f32 %v322, %v582
        %v584 = vpop.f32.mrb[0].mxu0
        %v585 = vadd.f32 %v326, %v584
        %v586 = vpop.f32.mrb[0].mxu0
        %v587 = vadd.f32 %v322, %v586
        %v588 = vpop.f32.mrb[0].mxu0
        %v589 = vadd.f32 %v326, %v588
        %590 = vmatprep.mubr.bf16.mxu0 0
        %591 = vmatmul.mubr.bf16.gmra.mrb[0].mxu0 %v462
        %v592 = vpop.f32.mrb[0].mxu0
        %v593 = vadd.f32 %v322, %v592
        %v594 = vpop.f32.mrb[0].mxu0
        %v595 = vadd.f32 %v326, %v594
        %v596 = vpop.f32.mrb[0].mxu0
        %v597 = vadd.f32 %v322, %v596
        %v598 = vpop.f32.mrb[0].mxu0
        %v599 = vadd.f32 %v326, %v598
        %600 = vmatprep.mubr.bf16.mxu0 0
        %601 = vmatmul.mubr.bf16.gmra.mrb[0].mxu0 %v465
        %v602 = vpop.f32.mrb[0].mxu0
        %v603 = vadd.f32 %v322, %v602
        %v604 = vpop.f32.mrb[0].mxu0
        %v605 = vadd.f32 %v326, %v604
        %v606 = vpop.f32.mrb[0].mxu0
        %v607 = vadd.f32 %v322, %v606
        %v608 = vpop.f32.mrb[0].mxu0
        %v609 = vadd.f32 %v326, %v608
        %610 = vmatprep.mubr.bf16.mxu0 0
        %611 = vmatmul.mubr.bf16.gmra.mrb[0].mxu0 %v468
        %v612 = vpop.f32.mrb[0].mxu0
        %v613 = vadd.f32 %v322, %v612
        %v614 = vpop.f32.mrb[0].mxu0
        %v615 = vadd.f32 %v326, %v614
        %v616 = vpop.f32.mrb[0].mxu0
        %v617 = vadd.f32 %v322, %v616
        %v618 = vpop.f32.mrb[0].mxu0
        %v619 = vadd.f32 %v326, %v618
        %620 = vmatprep.mubr.bf16.mxu0 0
        %621 = vmatmul.mubr.bf16.gmra.mrb[0].mxu0 %v471
        %v622 = vpop.f32.mrb[0].mxu0
        %v623 = vadd.f32 %v322, %v622
        %v624 = vpop.f32.mrb[0].mxu0
        %v625 = vadd.f32 %v326, %v624
        %v626 = vpop.f32.mrb[0].mxu0
        %v627 = vadd.f32 %v322, %v626
        %v628 = vpop.f32.mrb[0].mxu0
        %v629 = vadd.f32 %v326, %v628
        %630 = vmatprep.mubr.bf16.mxu0 0
        %631 = vmatmul.mubr.bf16.gmra.mrb[0].mxu0 %v474
        %v632 = vpop.f32.mrb[0].mxu0
        %v633 = vadd.f32 %v322, %v632
        %v634 = vpop.f32.mrb[0].mxu0
        %v635 = vadd.f32 %v326, %v634
        %v636 = vpop.f32.mrb[0].mxu0
        %v637 = vadd.f32 %v322, %v636
        %v638 = vpop.f32.mrb[0].mxu0
        %v639 = vadd.f32 %v326, %v638
        %640 = vmatprep.mubr.bf16.mxu0 0
        %641 = vmatmul.mubr.bf16.gmra.mrb[0].mxu0 %v477
        %v642 = vpop.f32.mrb[0].mxu0
        %v643 = vadd.f32 %v322, %v642
        %v644 = vpop.f32.mrb[0].mxu0
        %v645 = vadd.f32 %v326, %v644
        %v646 = vpop.f32.mrb[0].mxu0
        %v647 = vadd.f32 %v322, %v646
        %v648 = vpop.f32.mrb[0].mxu0
        %v649 = vadd.f32 %v326, %v648
        %650 = vmatprep.mubr.bf16.mxu0 0
        %651 = vmatmul.mubr.bf16.gmra.mrb[0].mxu0 %v480
        %v652 = vpop.f32.mrb[0].mxu0
        %v653 = vadd.f32 %v322, %v652
        %v654 = vpop.f32.mrb[0].mxu0
        %v655 = vadd.f32 %v326, %v654
        %v656 = vpop.f32.mrb[0].mxu0
        %v657 = vadd.f32 %v322, %v656
        %v658 = vpop.f32.mrb[0].mxu0
        %v659 = vadd.f32 %v326, %v658
        %660 = vmatprep.mubr.bf16.mxu0 0
        %661 = vmatmul.mubr.bf16.gmra.mrb[0].mxu0 %v483
        %v662 = vpop.f32.mrb[0].mxu0
        %v663 = vadd.f32 %v322, %v662
        %v664 = vpop.f32.mrb[0].mxu0
        %v665 = vadd.f32 %v326, %v664
        %v666 = vpop.f32.mrb[0].mxu0
        %v667 = vadd.f32 %v322, %v666
        %v668 = vpop.f32.mrb[0].mxu0
        %v669 = vadd.f32 %v326, %v668
        %670 = vmatprep.mubr.bf16.mxu0 0
        %671 = vmatmul.mubr.bf16.gmra.mrb[0].mxu0 %v486
        %v672 = vpop.f32.mrb[0].mxu0
        %v673 = vadd.f32 %v322, %v672
        %v674 = vpop.f32.mrb[0].mxu0
        %v675 = vadd.f32 %v326, %v674
        %v676 = vpop.f32.mrb[0].mxu0
        %v677 = vadd.f32 %v322, %v676
        %v678 = vpop.f32.mrb[0].mxu0
        %v679 = vadd.f32 %v326, %v678
        %680 = vdwg.mxu0
        %681 = vmatprep.subr.bf16.mxu0 %v434
        %682 = vmatpush1.bf16.msra.mxu0 %v433
        %683 = vmatprep.subr.bf16.mxu0 0
        %684 = vmatpush1.bf16.msra.mxu0 0
        %685 = vmatprep.subr.bf16.mxu0 0
        %686 = vmatpush1.bf16.msra.mxu0 0
        %687 = vmatprep.subr.bf16.mxu0 0
        %688 = vmatpush1.bf16.msra.mxu0 0
        %689 = vmatprep.subr.bf16.mxu0 0
        %690 = vmatpush1.bf16.msra.mxu0 0
        %691 = vmatprep.subr.bf16.mxu0 0
        %692 = vmatpush1.bf16.msra.mxu0 0
        %693 = vmatprep.subr.bf16.mxu0 0
        %694 = vmatpush1.bf16.msra.mxu0 0
        %695 = vmatprep.subr.bf16.mxu0 0
        %696 = vmatpush1.bf16.msra.mxu0 0
        %697 = vmatprep.subr.bf16.mxu0 0
        %698 = vmatpush1.bf16.msra.mxu0 0
        %699 = vmatprep.subr.bf16.mxu0 0
        %700 = vmatpush1.bf16.msra.mxu0 0
        %701 = vmatprep.subr.bf16.mxu0 0
        %702 = vmatpush1.bf16.msra.mxu0 0
        %703 = vmatprep.subr.bf16.mxu0 0
        %704 = vmatpush1.bf16.msra.mxu0 0
        %705 = vmatprep.subr.bf16.mxu0 0
        %706 = vmatpush1.bf16.msra.mxu0 0
        %707 = vmatprep.subr.bf16.mxu0 0
        %708 = vmatpush1.bf16.msra.mxu0 0
        %709 = vmatprep.subr.bf16.mxu0 0
        %710 = vmatpush1.bf16.msra.mxu0 0
        %711 = vmatprep.subr.bf16.mxu0 0
        %712 = vmatpush1.bf16.msra.mxu0 0
        %713 = vmatprep.mubr.bf16.mxu0 0
        %714 = vmatmul.mubr.bf16.gmra.mrb[0].mxu0 %v441
        %v715 = vpop.f32.mrb[0].mxu0
        %v716 = vadd.f32 %v330, %v715
        %v717 = vpop.f32.mrb[0].mxu0
        %v718 = vadd.f32 %v334, %v717
        %v719 = vpop.f32.mrb[0].mxu0
        %v720 = vadd.f32 %v330, %v719
        %v721 = vpop.f32.mrb[0].mxu0
        %v722 = vadd.f32 %v334, %v721
        %723 = vmatprep.mubr.bf16.mxu0 0
        %724 = vmatmul.mubr.bf16.gmra.mrb[0].mxu0 %v444
        %v725 = vpop.f32.mrb[0].mxu0
        %v726 = vadd.f32 %v330, %v725
        %v727 = vpop.f32.mrb[0].mxu0
        %v728 = vadd.f32 %v334, %v727
        %v729 = vpop.f32.mrb[0].mxu0
        %v730 = vadd.f32 %v330, %v729
        %v731 = vpop.f32.mrb[0].mxu0
        %v732 = vadd.f32 %v334, %v731
        %733 = vmatprep.mubr.bf16.mxu0 0
        %734 = vmatmul.mubr.bf16.gmra.mrb[0].mxu0 %v447
        %v735 = vpop.f32.mrb[0].mxu0
        %v736 = vadd.f32 %v330, %v735
        %v737 = vpop.f32.mrb[0].mxu0
        %v738 = vadd.f32 %v334, %v737
        %v739 = vpop.f32.mrb[0].mxu0
        %v740 = vadd.f32 %v330, %v739
        %v741 = vpop.f32.mrb[0].mxu0
        %v742 = vadd.f32 %v334, %v741
        %743 = vmatprep.mubr.bf16.mxu0 0
        %744 = vmatmul.mubr.bf16.gmra.mrb[0].mxu0 %v450
        %v745 = vpop.f32.mrb[0].mxu0
        %v746 = vadd.f32 %v330, %v745
        %v747 = vpop.f32.mrb[0].mxu0
        %v748 = vadd.f32 %v334, %v747
        %v749 = vpop.f32.mrb[0].mxu0
        %v750 = vadd.f32 %v330, %v749
        %v751 = vpop.f32.mrb[0].mxu0
        %v752 = vadd.f32 %v334, %v751
        %753 = vmatprep.mubr.bf16.mxu0 0
        %754 = vmatmul.mubr.bf16.gmra.mrb[0].mxu0 %v453
        %v755 = vpop.f32.mrb[0].mxu0
        %v756 = vadd.f32 %v330, %v755
        %v757 = vpop.f32.mrb[0].mxu0
        %v758 = vadd.f32 %v334, %v757
        %v759 = vpop.f32.mrb[0].mxu0
        %v760 = vadd.f32 %v330, %v759
        %v761 = vpop.f32.mrb[0].mxu0
        %v762 = vadd.f32 %v334, %v761
        %763 = vmatprep.mubr.bf16.mxu0 0
        %764 = vmatmul.mubr.bf16.gmra.mrb[0].mxu0 %v456
        %v765 = vpop.f32.mrb[0].mxu0
        %v766 = vadd.f32 %v330, %v765
        %v767 = vpop.f32.mrb[0].mxu0
        %v768 = vadd.f32 %v334, %v767
        %v769 = vpop.f32.mrb[0].mxu0
        %v770 = vadd.f32 %v330, %v769
        %v771 = vpop.f32.mrb[0].mxu0
        %v772 = vadd.f32 %v334, %v771
        %773 = vmatprep.mubr.bf16.mxu0 0
        %774 = vmatmul.mubr.bf16.gmra.mrb[0].mxu0 %v459
        %v775 = vpop.f32.mrb[0].mxu0
        %v776 = vadd.f32 %v330, %v775
        %v777 = vpop.f32.mrb[0].mxu0
        %v778 = vadd.f32 %v334, %v777
        %v779 = vpop.f32.mrb[0].mxu0
        %v780 = vadd.f32 %v330, %v779
        %v781 = vpop.f32.mrb[0].mxu0
        %v782 = vadd.f32 %v334, %v781
        %783 = vmatprep.mubr.bf16.mxu0 0
        %784 = vmatmul.mubr.bf16.gmra.mrb[0].mxu0 %v462
        %v785 = vpop.f32.mrb[0].mxu0
        %v786 = vadd.f32 %v330, %v785
        %v787 = vpop.f32.mrb[0].mxu0
        %v788 = vadd.f32 %v334, %v787
        %v789 = vpop.f32.mrb[0].mxu0
        %v790 = vadd.f32 %v330, %v789
        %v791 = vpop.f32.mrb[0].mxu0
        %v792 = vadd.f32 %v334, %v791
        %793 = vmatprep.mubr.bf16.mxu0 0
        %794 = vmatmul.mubr.bf16.gmra.mrb[0].mxu0 %v465
        %v795 = vpop.f32.mrb[0].mxu0
        %v796 = vadd.f32 %v330, %v795
        %v797 = vpop.f32.mrb[0].mxu0
        %v798 = vadd.f32 %v334, %v797
        %v799 = vpop.f32.mrb[0].mxu0
        %v800 = vadd.f32 %v330, %v799
        %v801 = vpop.f32.mrb[0].mxu0
        %v802 = vadd.f32 %v334, %v801
        %803 = vmatprep.mubr.bf16.mxu0 0
        %804 = vmatmul.mubr.bf16.gmra.mrb[0].mxu0 %v468
        %v805 = vpop.f32.mrb[0].mxu0
        %v806 = vadd.f32 %v330, %v805
        %v807 = vpop.f32.mrb[0].mxu0
        %v808 = vadd.f32 %v334, %v807
        %v809 = vpop.f32.mrb[0].mxu0
        %v810 = vadd.f32 %v330, %v809
        %v811 = vpop.f32.mrb[0].mxu0
        %v812 = vadd.f32 %v334, %v811
        %813 = vmatprep.mubr.bf16.mxu0 0
        %814 = vmatmul.mubr.bf16.gmra.mrb[0].mxu0 %v471
        %v815 = vpop.f32.mrb[0].mxu0
        %v816 = vadd.f32 %v330, %v815
        %v817 = vpop.f32.mrb[0].mxu0
        %v818 = vadd.f32 %v334, %v817
        %v819 = vpop.f32.mrb[0].mxu0
        %v820 = vadd.f32 %v330, %v819
        %v821 = vpop.f32.mrb[0].mxu0
        %v822 = vadd.f32 %v334, %v821
        %823 = vmatprep.mubr.bf16.mxu0 0
        %824 = vmatmul.mubr.bf16.gmra.mrb[0].mxu0 %v474
        %v825 = vpop.f32.mrb[0].mxu0
        %v826 = vadd.f32 %v330, %v825
        %v827 = vpop.f32.mrb[0].mxu0
        %v828 = vadd.f32 %v334, %v827
        %v829 = vpop.f32.mrb[0].mxu0
        %v830 = vadd.f32 %v330, %v829
        %v831 = vpop.f32.mrb[0].mxu0
        %v832 = vadd.f32 %v334, %v831
        %833 = vmatprep.mubr.bf16.mxu0 0
        %834 = vmatmul.mubr.bf16.gmra.mrb[0].mxu0 %v477
        %v835 = vpop.f32.mrb[0].mxu0
        %v836 = vadd.f32 %v330, %v835
        %v837 = vpop.f32.mrb[0].mxu0
        %v838 = vadd.f32 %v334, %v837
        %v839 = vpop.f32.mrb[0].mxu0
        %v840 = vadd.f32 %v330, %v839
        %v841 = vpop.f32.mrb[0].mxu0
        %v842 = vadd.f32 %v334, %v841
        %843 = vmatprep.mubr.bf16.mxu0 0
        %844 = vmatmul.mubr.bf16.gmra.mrb[0].mxu0 %v480
        %v845 = vpop.f32.mrb[0].mxu0
        %v846 = vadd.f32 %v330, %v845
        %v847 = vpop.f32.mrb[0].mxu0
        %v848 = vadd.f32 %v334, %v847
        %v849 = vpop.f32.mrb[0].mxu0
        %v850 = vadd.f32 %v330, %v849
        %v851 = vpop.f32.mrb[0].mxu0
        %v852 = vadd.f32 %v334, %v851
        %853 = vmatprep.mubr.bf16.mxu0 0
        %854 = vmatmul.mubr.bf16.gmra.mrb[0].mxu0 %v483
        %v855 = vpop.f32.mrb[0].mxu0
        %v856 = vadd.f32 %v330, %v855
        %v857 = vpop.f32.mrb[0].mxu0
        %v858 = vadd.f32 %v334, %v857
        %v859 = vpop.f32.mrb[0].mxu0
        %v860 = vadd.f32 %v330, %v859
        %v861 = vpop.f32.mrb[0].mxu0
        %v862 = vadd.f32 %v334, %v861
        %863 = vmatprep.mubr.bf16.mxu0 0
        %864 = vmatmul.mubr.bf16.gmra.mrb[0].mxu0 %v486
        %v865 = vpop.f32.mrb[0].mxu0
        %v866 = vadd.f32 %v330, %v865
        %v867 = vpop.f32.mrb[0].mxu0
        %v868 = vadd.f32 %v334, %v867
        %v869 = vpop.f32.mrb[0].mxu0
        %v870 = vadd.f32 %v330, %v869
        %v871 = vpop.f32.mrb[0].mxu0
        %v872 = vadd.f32 %v334, %v871
        %873 = vdwg.mxu0
        %v874 = vmax.f32 %v523, 0.0
        %v875 = vmax.f32 %v525, 0.0
        %v876 = vmax.f32 %v716, 0.0
        %v877 = vmax.f32 %v718, 0.0
        %v878 = vmax.f32 %v527, 0.0
        %v879 = vmax.f32 %v529, 0.0
        %v880 = vmax.f32 %v720, 0.0
        %v881 = vmax.f32 %v722, 0.0
        %v882 = vmax.f32 %v533, 0.0
        %v883 = vmax.f32 %v535, 0.0
        %v884 = vmax.f32 %v726, 0.0
        %v885 = vmax.f32 %v728, 0.0
        %v886 = vmax.f32 %v537, 0.0
        %v887 = vmax.f32 %v539, 0.0
        %v888 = vmax.f32 %v730, 0.0
        %v889 = vmax.f32 %v732, 0.0
        %v890 = vmax.f32 %v543, 0.0
        %v891 = vmax.f32 %v545, 0.0
        %v892 = vmax.f32 %v736, 0.0
        %v893 = vmax.f32 %v738, 0.0
        %v894 = vmax.f32 %v547, 0.0
        %v895 = vmax.f32 %v549, 0.0
        %v896 = vmax.f32 %v740, 0.0
        %v897 = vmax.f32 %v742, 0.0
        %v898 = vmax.f32 %v553, 0.0
        %v899 = vmax.f32 %v555, 0.0
        %v900 = vmax.f32 %v746, 0.0
        %v901 = vmax.f32 %v748, 0.0
        %v902 = vmax.f32 %v557, 0.0
        %v903 = vmax.f32 %v559, 0.0
        %v904 = vmax.f32 %v750, 0.0
        %v905 = vmax.f32 %v752, 0.0
        %v906 = vmax.f32 %v563, 0.0
        %v907 = vmax.f32 %v565, 0.0
        %v908 = vmax.f32 %v756, 0.0
        %v909 = vmax.f32 %v758, 0.0
        %v910 = vmax.f32 %v567, 0.0
        %v911 = vmax.f32 %v569, 0.0
        %v912 = vmax.f32 %v760, 0.0
        %v913 = vmax.f32 %v762, 0.0
        %v914 = vmax.f32 %v573, 0.0
        %v915 = vmax.f32 %v575, 0.0
        %v916 = vmax.f32 %v766, 0.0
        %v917 = vmax.f32 %v768, 0.0
        %v918 = vmax.f32 %v577, 0.0
        %v919 = vmax.f32 %v579, 0.0
        %v920 = vmax.f32 %v770, 0.0
        %v921 = vmax.f32 %v772, 0.0
        %v922 = vmax.f32 %v583, 0.0
        %v923 = vmax.f32 %v585, 0.0
        %v924 = vmax.f32 %v776, 0.0
        %v925 = vmax.f32 %v778, 0.0
        %v926 = vmax.f32 %v587, 0.0
        %v927 = vmax.f32 %v589, 0.0
        %v928 = vmax.f32 %v780, 0.0
        %v929 = vmax.f32 %v782, 0.0
        %v930 = vmax.f32 %v593, 0.0
        %v931 = vmax.f32 %v595, 0.0
        %v932 = vmax.f32 %v786, 0.0
        %v933 = vmax.f32 %v788, 0.0
        %v934 = vmax.f32 %v597, 0.0
        %v935 = vmax.f32 %v599, 0.0
        %v936 = vmax.f32 %v790, 0.0
        %v937 = vmax.f32 %v792, 0.0
        %v938 = vmax.f32 %v603, 0.0
        %v939 = vmax.f32 %v605, 0.0
        %v940 = vmax.f32 %v796, 0.0
        %v941 = vmax.f32 %v798, 0.0
        %v942 = vmax.f32 %v607, 0.0
        %v943 = vmax.f32 %v609, 0.0
        %v944 = vmax.f32 %v800, 0.0
        %v945 = vmax.f32 %v802, 0.0
        %v946 = vmax.f32 %v613, 0.0
        %v947 = vmax.f32 %v615, 0.0
        %v948 = vmax.f32 %v806, 0.0
        %v949 = vmax.f32 %v808, 0.0
        %v950 = vmax.f32 %v617, 0.0
        %v951 = vmax.f32 %v619, 0.0
        %v952 = vmax.f32 %v810, 0.0
        %v953 = vmax.f32 %v812, 0.0
        %v954 = vmax.f32 %v623, 0.0
        %v955 = vmax.f32 %v625, 0.0
        %v956 = vmax.f32 %v816, 0.0
        %v957 = vmax.f32 %v818, 0.0
        %v958 = vmax.f32 %v627, 0.0
        %v959 = vmax.f32 %v629, 0.0
        %v960 = vmax.f32 %v820, 0.0
        %v961 = vmax.f32 %v822, 0.0
        %v962 = vmax.f32 %v633, 0.0
        %v963 = vmax.f32 %v635, 0.0
        %v964 = vmax.f32 %v826, 0.0
        %v965 = vmax.f32 %v828, 0.0
        %v966 = vmax.f32 %v637, 0.0
        %v967 = vmax.f32 %v639, 0.0
        %v968 = vmax.f32 %v830, 0.0
        %v969 = vmax.f32 %v832, 0.0
        %v970 = vmax.f32 %v643, 0.0
        %v971 = vmax.f32 %v645, 0.0
        %v972 = vmax.f32 %v836, 0.0
        %v973 = vmax.f32 %v838, 0.0
        %v974 = vmax.f32 %v647, 0.0
        %v975 = vmax.f32 %v649, 0.0
        %v976 = vmax.f32 %v840, 0.0
        %v977 = vmax.f32 %v842, 0.0
        %v978 = vmax.f32 %v653, 0.0
        %v979 = vmax.f32 %v655, 0.0
        %v980 = vmax.f32 %v846, 0.0
        %v981 = vmax.f32 %v848, 0.0
        %v982 = vmax.f32 %v657, 0.0
        %v983 = vmax.f32 %v659, 0.0
        %v984 = vmax.f32 %v850, 0.0
        %v985 = vmax.f32 %v852, 0.0
        %v986 = vmax.f32 %v663, 0.0
        %v987 = vmax.f32 %v665, 0.0
        %v988 = vmax.f32 %v856, 0.0
        %v989 = vmax.f32 %v858, 0.0
        %v990 = vmax.f32 %v667, 0.0
        %v991 = vmax.f32 %v669, 0.0
        %v992 = vmax.f32 %v860, 0.0
        %v993 = vmax.f32 %v862, 0.0
        %v994 = vmax.f32 %v673, 0.0
        %v995 = vmax.f32 %v675, 0.0
        %v996 = vmax.f32 %v866, 0.0
        %v997 = vmax.f32 %v868, 0.0
        %v998 = vmax.f32 %v677, 0.0
        %v999 = vmax.f32 %v679, 0.0
        %v1000 = vmax.f32 %v870, 0.0
        %v1001 = vmax.f32 %v872, 0.0
        %v1002 = vpack.c.bf16 %v878, %v874
        %v1003 = vpack.c.bf16 %v879, %v875
        %v1004 = vpack.c.bf16 %v880, %v876
        %v1005 = vpack.c.bf16 %v881, %v877
        %v1006 = vpack.c.bf16 %v886, %v882
        %v1007 = vpack.c.bf16 %v887, %v883
        %v1008 = vpack.c.bf16 %v888, %v884
        %v1009 = vpack.c.bf16 %v889, %v885
        %v1010 = vpack.c.bf16 %v894, %v890
        %v1011 = vpack.c.bf16 %v895, %v891
        %v1012 = vpack.c.bf16 %v896, %v892
        %v1013 = vpack.c.bf16 %v897, %v893
        %v1014 = vpack.c.bf16 %v902, %v898
        %v1015 = vpack.c.bf16 %v903, %v899
        %v1016 = vpack.c.bf16 %v904, %v900
        %v1017 = vpack.c.bf16 %v905, %v901
        %v1018 = vpack.c.bf16 %v910, %v906
        %v1019 = vpack.c.bf16 %v911, %v907
        %v1020 = vpack.c.bf16 %v912, %v908
        %v1021 = vpack.c.bf16 %v913, %v909
        %v1022 = vpack.c.bf16 %v918, %v914
        %v1023 = vpack.c.bf16 %v919, %v915
        %v1024 = vpack.c.bf16 %v920, %v916
        %v1025 = vpack.c.bf16 %v921, %v917
        %v1026 = vpack.c.bf16 %v926, %v922
        %v1027 = vpack.c.bf16 %v927, %v923
        %v1028 = vpack.c.bf16 %v928, %v924
        %v1029 = vpack.c.bf16 %v929, %v925
        %v1030 = vpack.c.bf16 %v934, %v930
        %v1031 = vpack.c.bf16 %v935, %v931
        %v1032 = vpack.c.bf16 %v936, %v932
        %v1033 = vpack.c.bf16 %v937, %v933
        %v1034 = vpack.c.bf16 %v942, %v938
        %v1035 = vpack.c.bf16 %v943, %v939
        %v1036 = vpack.c.bf16 %v944, %v940
        %v1037 = vpack.c.bf16 %v945, %v941
        %v1038 = vpack.c.bf16 %v950, %v946
        %v1039 = vpack.c.bf16 %v951, %v947
        %v1040 = vpack.c.bf16 %v952, %v948
        %v1041 = vpack.c.bf16 %v953, %v949
        %v1042 = vpack.c.bf16 %v958, %v954
        %v1043 = vpack.c.bf16 %v959, %v955
        %v1044 = vpack.c.bf16 %v960, %v956
        %v1045 = vpack.c.bf16 %v961, %v957
        %v1046 = vpack.c.bf16 %v966, %v962
        %v1047 = vpack.c.bf16 %v967, %v963
        %v1048 = vpack.c.bf16 %v968, %v964
        %v1049 = vpack.c.bf16 %v969, %v965
        %v1050 = vpack.c.bf16 %v974, %v970
        %v1051 = vpack.c.bf16 %v975, %v971
        %v1052 = vpack.c.bf16 %v976, %v972
        %v1053 = vpack.c.bf16 %v977, %v973
        %v1054 = vpack.c.bf16 %v982, %v978
        %v1055 = vpack.c.bf16 %v983, %v979
        %v1056 = vpack.c.bf16 %v984, %v980
        %v1057 = vpack.c.bf16 %v985, %v981
        %v1058 = vpack.c.bf16 %v990, %v986
        %v1059 = vpack.c.bf16 %v991, %v987
        %v1060 = vpack.c.bf16 %v992, %v988
        %v1061 = vpack.c.bf16 %v993, %v989
        %v1062 = vpack.c.bf16 %v998, %v994
        %v1063 = vpack.c.bf16 %v999, %v995
        %v1064 = vpack.c.bf16 %v1000, %v996
        %v1065 = vpack.c.bf16 %v1001, %v997
        %v1066 = vld [vmem:[%s3] sm:$0xff]
        %v1067 = vld [vmem:[%s3 + $0x8] sm:$0xff]
        %v1068 = vld [vmem:[%s3 + $0x10] sm:$0xff]
        %v1069 = vld [vmem:[%s3 + $0x18] sm:$0xff]
        %v1070 = vld [vmem:[%s3 + $0x20] sm:$0xff]
        %v1071 = vld [vmem:[%s3 + $0x28] sm:$0xff]
        %v1072 = vld [vmem:[%s3 + $0x30] sm:$0xff]
        %v1073 = vld [vmem:[%s3 + $0x38] sm:$0xff]
        %v1074 = vld [vmem:[%s3 + $0x40] sm:$0xff]
        %v1075 = vld [vmem:[%s3 + $0x48] sm:$0xff]
        %v1076 = vld [vmem:[%s3 + $0x50] sm:$0xff]
        %v1077 = vld [vmem:[%s3 + $0x58] sm:$0xff]
        %v1078 = vld [vmem:[%s3 + $0x60] sm:$0xff]
        %v1079 = vld [vmem:[%s3 + $0x68] sm:$0xff]
        %v1080 = vld [vmem:[%s3 + $0x70] sm:$0xff]
        %v1081 = vld [vmem:[%s3 + $0x78] sm:$0xff]
        %v1082 = vld [vmem:[%s3 + $0x80] sm:$0xff]
        %v1083 = vld [vmem:[%s3 + $0x88] sm:$0xff]
        %v1084 = vld [vmem:[%s3 + $0x90] sm:$0xff]
        %v1085 = vld [vmem:[%s3 + $0x98] sm:$0xff]
        %v1086 = vld [vmem:[%s3 + $0xa0] sm:$0xff]
        %v1087 = vld [vmem:[%s3 + $0xa8] sm:$0xff]
        %v1088 = vld [vmem:[%s3 + $0xb0] sm:$0xff]
        %v1089 = vld [vmem:[%s3 + $0xb8] sm:$0xff]
        %v1090 = vld [vmem:[%s3 + $0xc0] sm:$0xff]
        %v1091 = vld [vmem:[%s3 + $0xc8] sm:$0xff]
        %v1092 = vld [vmem:[%s3 + $0xd0] sm:$0xff]
        %v1093 = vld [vmem:[%s3 + $0xd8] sm:$0xff]
        %v1094 = vld [vmem:[%s3 + $0xe0] sm:$0xff]
        %v1095 = vld [vmem:[%s3 + $0xe8] sm:$0xff]
        %v1096 = vld [vmem:[%s3 + $0xf0] sm:$0xff]
        %v1097 = vld [vmem:[%s3 + $0xf8] sm:$0xff]
        %v1098 = vld [vmem:[%s3 + $0x100] sm:$0xff]
        %v1099 = vld [vmem:[%s3 + $0x108] sm:$0xff]
        %v1100 = vld [vmem:[%s3 + $0x110] sm:$0xff]
        %v1101 = vld [vmem:[%s3 + $0x118] sm:$0xff]
        %v1102 = vld [vmem:[%s3 + $0x120] sm:$0xff]
        %v1103 = vld [vmem:[%s3 + $0x128] sm:$0xff]
        %v1104 = vld [vmem:[%s3 + $0x130] sm:$0xff]
        %v1105 = vld [vmem:[%s3 + $0x138] sm:$0xff]
        %v1106 = vld [vmem:[%s3 + $0x140] sm:$0xff]
        %v1107 = vld [vmem:[%s3 + $0x148] sm:$0xff]
        %v1108 = vld [vmem:[%s3 + $0x150] sm:$0xff]
        %v1109 = vld [vmem:[%s3 + $0x158] sm:$0xff]
        %v1110 = vld [vmem:[%s3 + $0x160] sm:$0xff]
        %v1111 = vld [vmem:[%s3 + $0x168] sm:$0xff]
        %v1112 = vld [vmem:[%s3 + $0x170] sm:$0xff]
        %v1113 = vld [vmem:[%s3 + $0x178] sm:$0xff]
        %v1114 = vld [vmem:[%s3 + $0x180] sm:$0xff]
        %v1115 = vld [vmem:[%s3 + $0x188] sm:$0xff]
        %v1116 = vld [vmem:[%s3 + $0x190] sm:$0xff]
        %v1117 = vld [vmem:[%s3 + $0x198] sm:$0xff]
        %v1118 = vld [vmem:[%s3 + $0x1a0] sm:$0xff]
        %v1119 = vld [vmem:[%s3 + $0x1a8] sm:$0xff]
        %v1120 = vld [vmem:[%s3 + $0x1b0] sm:$0xff]
        %v1121 = vld [vmem:[%s3 + $0x1b8] sm:$0xff]
        %v1122 = vld [vmem:[%s3 + $0x1c0] sm:$0xff]
        %v1123 = vld [vmem:[%s3 + $0x1c8] sm:$0xff]
        %v1124 = vld [vmem:[%s3 + $0x1d0] sm:$0xff]
        %v1125 = vld [vmem:[%s3 + $0x1d8] sm:$0xff]
        %v1126 = vld [vmem:[%s3 + $0x1e0] sm:$0xff]
        %v1127 = vld [vmem:[%s3 + $0x1e8] sm:$0xff]
        %v1128 = vld [vmem:[%s3 + $0x1f0] sm:$0xff]
        %v1129 = vld [vmem:[%s3 + $0x1f8] sm:$0xff]
        %v1130 = vld [vmem:[%s3 + $0x200] sm:$0xff]
        %v1131 = vld [vmem:[%s3 + $0x208] sm:$0xff]
        %v1132 = vld [vmem:[%s3 + $0x210] sm:$0xff]
        %v1133 = vld [vmem:[%s3 + $0x218] sm:$0xff]
        %v1134 = vld [vmem:[%s3 + $0x220] sm:$0xff]
        %v1135 = vld [vmem:[%s3 + $0x228] sm:$0xff]
        %v1136 = vld [vmem:[%s3 + $0x230] sm:$0xff]
        %v1137 = vld [vmem:[%s3 + $0x238] sm:$0xff]
        %v1138 = vld [vmem:[%s3 + $0x240] sm:$0xff]
        %v1139 = vld [vmem:[%s3 + $0x248] sm:$0xff]
        %v1140 = vld [vmem:[%s3 + $0x250] sm:$0xff]
        %v1141 = vld [vmem:[%s3 + $0x258] sm:$0xff]
        %v1142 = vld [vmem:[%s3 + $0x260] sm:$0xff]
        %v1143 = vld [vmem:[%s3 + $0x268] sm:$0xff]
        %v1144 = vld [vmem:[%s3 + $0x270] sm:$0xff]
        %v1145 = vld [vmem:[%s3 + $0x278] sm:$0xff]
        %v1146 = vld [vmem:[%s3 + $0x280] sm:$0xff]
        %v1147 = vld [vmem:[%s3 + $0x288] sm:$0xff]
        %v1148 = vld [vmem:[%s3 + $0x290] sm:$0xff]
        %v1149 = vld [vmem:[%s3 + $0x298] sm:$0xff]
        %v1150 = vld [vmem:[%s3 + $0x2a0] sm:$0xff]
        %v1151 = vld [vmem:[%s3 + $0x2a8] sm:$0xff]
        %v1152 = vld [vmem:[%s3 + $0x2b0] sm:$0xff]
        %v1153 = vld [vmem:[%s3 + $0x2b8] sm:$0xff]
        %v1154 = vld [vmem:[%s3 + $0x2c0] sm:$0xff]
        %v1155 = vld [vmem:[%s3 + $0x2c8] sm:$0xff]
        %v1156 = vld [vmem:[%s3 + $0x2d0] sm:$0xff]
        %v1157 = vld [vmem:[%s3 + $0x2d8] sm:$0xff]
        %v1158 = vld [vmem:[%s3 + $0x2e0] sm:$0xff]
        %v1159 = vld [vmem:[%s3 + $0x2e8] sm:$0xff]
        %v1160 = vld [vmem:[%s3 + $0x2f0] sm:$0xff]
        %v1161 = vld [vmem:[%s3 + $0x2f8] sm:$0xff]
        %v1162 = vld [vmem:[%s3 + $0x300] sm:$0xff]
        %v1163 = vld [vmem:[%s3 + $0x308] sm:$0xff]
        %v1164 = vld [vmem:[%s3 + $0x310] sm:$0xff]
        %v1165 = vld [vmem:[%s3 + $0x318] sm:$0xff]
        %v1166 = vld [vmem:[%s3 + $0x320] sm:$0xff]
        %v1167 = vld [vmem:[%s3 + $0x328] sm:$0xff]
        %v1168 = vld [vmem:[%s3 + $0x330] sm:$0xff]
        %v1169 = vld [vmem:[%s3 + $0x338] sm:$0xff]
        %v1170 = vld [vmem:[%s3 + $0x340] sm:$0xff]
        %v1171 = vld [vmem:[%s3 + $0x348] sm:$0xff]
        %v1172 = vld [vmem:[%s3 + $0x350] sm:$0xff]
        %v1173 = vld [vmem:[%s3 + $0x358] sm:$0xff]
        %v1174 = vld [vmem:[%s3 + $0x360] sm:$0xff]
        %v1175 = vld [vmem:[%s3 + $0x368] sm:$0xff]
        %v1176 = vld [vmem:[%s3 + $0x370] sm:$0xff]
        %v1177 = vld [vmem:[%s3 + $0x378] sm:$0xff]
        %v1178 = vld [vmem:[%s3 + $0x380] sm:$0xff]
        %v1179 = vld [vmem:[%s3 + $0x388] sm:$0xff]
        %v1180 = vld [vmem:[%s3 + $0x390] sm:$0xff]
        %v1181 = vld [vmem:[%s3 + $0x398] sm:$0xff]
        %v1182 = vld [vmem:[%s3 + $0x3a0] sm:$0xff]
        %v1183 = vld [vmem:[%s3 + $0x3a8] sm:$0xff]
        %v1184 = vld [vmem:[%s3 + $0x3b0] sm:$0xff]
        %v1185 = vld [vmem:[%s3 + $0x3b8] sm:$0xff]
        %v1186 = vld [vmem:[%s3 + $0x3c0] sm:$0xff]
        %v1187 = vld [vmem:[%s3 + $0x3c8] sm:$0xff]
        %v1188 = vld [vmem:[%s3 + $0x3d0] sm:$0xff]
        %v1189 = vld [vmem:[%s3 + $0x3d8] sm:$0xff]
        %v1190 = vld [vmem:[%s3 + $0x3e0] sm:$0xff]
        %v1191 = vld [vmem:[%s3 + $0x3e8] sm:$0xff]
        %v1192 = vld [vmem:[%s3 + $0x3f0] sm:$0xff]
        %v1193 = vld [vmem:[%s3 + $0x3f8] sm:$0xff]
        %v1194 = vld [vmem:[%s4] sm:$0xf]
        %v1196 = vlaneseq
        %v1197 = vshrl.u32 %v1196, 7
        %v1198 = vsub.s32 0, %v1197
        %v1199 = vrot.slane %v1194, %v1198
        %v1200 = vlaneseq
        %v1201 = vshrl.u32 %v1200, 7
        %v1202 = vsub.s32 1, %v1201
        %v1203 = vrot.slane %v1194, %v1202
        %v1204 = vlaneseq
        %v1205 = vshrl.u32 %v1204, 7
        %v1206 = vsub.s32 2, %v1205
        %v1207 = vrot.slane %v1194, %v1206
        %v1208 = vlaneseq
        %v1209 = vshrl.u32 %v1208, 7
        %v1210 = vsub.s32 3, %v1209
        %v1211 = vrot.slane %v1194, %v1210
        %v1344 = vunpack.c.l.b16 %v1066
        %v1345 = vunpack.c.h.b16 %v1066
        %v1346 = vunpack.c.l.b16 %v1067
        %v1347 = vunpack.c.h.b16 %v1067
        %v1348 = vunpack.c.l.b16 %v1068
        %v1349 = vunpack.c.h.b16 %v1068
        %v1350 = vunpack.c.l.b16 %v1069
        %v1351 = vunpack.c.h.b16 %v1069
        %v1352 = vunpack.c.l.b16 %v1070
        %v1353 = vunpack.c.h.b16 %v1070
        %v1354 = vunpack.c.l.b16 %v1071
        %v1355 = vunpack.c.h.b16 %v1071
        %v1356 = vunpack.c.l.b16 %v1072
        %v1357 = vunpack.c.h.b16 %v1072
        %v1358 = vunpack.c.l.b16 %v1073
        %v1359 = vunpack.c.h.b16 %v1073
        %v1360 = vunpack.c.l.b16 %v1074
        %v1361 = vunpack.c.h.b16 %v1074
        %v1362 = vunpack.c.l.b16 %v1075
        %v1363 = vunpack.c.h.b16 %v1075
        %v1364 = vunpack.c.l.b16 %v1076
        %v1365 = vunpack.c.h.b16 %v1076
        %v1366 = vunpack.c.l.b16 %v1077
        %v1367 = vunpack.c.h.b16 %v1077
        %v1368 = vunpack.c.l.b16 %v1078
        %v1369 = vunpack.c.h.b16 %v1078
        %v1370 = vunpack.c.l.b16 %v1079
        %v1371 = vunpack.c.h.b16 %v1079
        %v1372 = vunpack.c.l.b16 %v1080
        %v1373 = vunpack.c.h.b16 %v1080
        %v1374 = vunpack.c.l.b16 %v1081
        %v1375 = vunpack.c.h.b16 %v1081
        %v1376 = vunpack.c.l.b16 %v1082
        %v1377 = vunpack.c.h.b16 %v1082
        %v1378 = vunpack.c.l.b16 %v1083
        %v1379 = vunpack.c.h.b16 %v1083
        %v1380 = vunpack.c.l.b16 %v1084
        %v1381 = vunpack.c.h.b16 %v1084
        %v1382 = vunpack.c.l.b16 %v1085
        %v1383 = vunpack.c.h.b16 %v1085
        %v1384 = vunpack.c.l.b16 %v1086
        %v1385 = vunpack.c.h.b16 %v1086
        %v1386 = vunpack.c.l.b16 %v1087
        %v1387 = vunpack.c.h.b16 %v1087
        %v1388 = vunpack.c.l.b16 %v1088
        %v1389 = vunpack.c.h.b16 %v1088
        %v1390 = vunpack.c.l.b16 %v1089
        %v1391 = vunpack.c.h.b16 %v1089
        %v1392 = vunpack.c.l.b16 %v1090
        %v1393 = vunpack.c.h.b16 %v1090
        %v1394 = vunpack.c.l.b16 %v1091
        %v1395 = vunpack.c.h.b16 %v1091
        %v1396 = vunpack.c.l.b16 %v1092
        %v1397 = vunpack.c.h.b16 %v1092
        %v1398 = vunpack.c.l.b16 %v1093
        %v1399 = vunpack.c.h.b16 %v1093
        %v1400 = vunpack.c.l.b16 %v1094
        %v1401 = vunpack.c.h.b16 %v1094
        %v1402 = vunpack.c.l.b16 %v1095
        %v1403 = vunpack.c.h.b16 %v1095
        %v1404 = vunpack.c.l.b16 %v1096
        %v1405 = vunpack.c.h.b16 %v1096
        %v1406 = vunpack.c.l.b16 %v1097
        %v1407 = vunpack.c.h.b16 %v1097
        %v1408 = vunpack.c.l.b16 %v1098
        %v1409 = vunpack.c.h.b16 %v1098
        %v1410 = vunpack.c.l.b16 %v1099
        %v1411 = vunpack.c.h.b16 %v1099
        %v1412 = vunpack.c.l.b16 %v1100
        %v1413 = vunpack.c.h.b16 %v1100
        %v1414 = vunpack.c.l.b16 %v1101
        %v1415 = vunpack.c.h.b16 %v1101
        %v1416 = vunpack.c.l.b16 %v1102
        %v1417 = vunpack.c.h.b16 %v1102
        %v1418 = vunpack.c.l.b16 %v1103
        %v1419 = vunpack.c.h.b16 %v1103
        %v1420 = vunpack.c.l.b16 %v1104
        %v1421 = vunpack.c.h.b16 %v1104
        %v1422 = vunpack.c.l.b16 %v1105
        %v1423 = vunpack.c.h.b16 %v1105
        %v1424 = vunpack.c.l.b16 %v1106
        %v1425 = vunpack.c.h.b16 %v1106
        %v1426 = vunpack.c.l.b16 %v1107
        %v1427 = vunpack.c.h.b16 %v1107
        %v1428 = vunpack.c.l.b16 %v1108
        %v1429 = vunpack.c.h.b16 %v1108
        %v1430 = vunpack.c.l.b16 %v1109
        %v1431 = vunpack.c.h.b16 %v1109
        %v1432 = vunpack.c.l.b16 %v1110
        %v1433 = vunpack.c.h.b16 %v1110
        %v1434 = vunpack.c.l.b16 %v1111
        %v1435 = vunpack.c.h.b16 %v1111
        %v1436 = vunpack.c.l.b16 %v1112
        %v1437 = vunpack.c.h.b16 %v1112
        %v1438 = vunpack.c.l.b16 %v1113
        %v1439 = vunpack.c.h.b16 %v1113
        %v1440 = vunpack.c.l.b16 %v1114
        %v1441 = vunpack.c.h.b16 %v1114
        %v1442 = vunpack.c.l.b16 %v1115
        %v1443 = vunpack.c.h.b16 %v1115
        %v1444 = vunpack.c.l.b16 %v1116
        %v1445 = vunpack.c.h.b16 %v1116
        %v1446 = vunpack.c.l.b16 %v1117
        %v1447 = vunpack.c.h.b16 %v1117
        %v1448 = vunpack.c.l.b16 %v1118
        %v1449 = vunpack.c.h.b16 %v1118
        %v1450 = vunpack.c.l.b16 %v1119
        %v1451 = vunpack.c.h.b16 %v1119
        %v1452 = vunpack.c.l.b16 %v1120
        %v1453 = vunpack.c.h.b16 %v1120
        %v1454 = vunpack.c.l.b16 %v1121
        %v1455 = vunpack.c.h.b16 %v1121
        %v1456 = vunpack.c.l.b16 %v1122
        %v1457 = vunpack.c.h.b16 %v1122
        %v1458 = vunpack.c.l.b16 %v1123
        %v1459 = vunpack.c.h.b16 %v1123
        %v1460 = vunpack.c.l.b16 %v1124
        %v1461 = vunpack.c.h.b16 %v1124
        %v1462 = vunpack.c.l.b16 %v1125
        %v1463 = vunpack.c.h.b16 %v1125
        %v1464 = vunpack.c.l.b16 %v1126
        %v1465 = vunpack.c.h.b16 %v1126
        %v1466 = vunpack.c.l.b16 %v1127
        %v1467 = vunpack.c.h.b16 %v1127
        %v1468 = vunpack.c.l.b16 %v1128
        %v1469 = vunpack.c.h.b16 %v1128
        %v1470 = vunpack.c.l.b16 %v1129
        %v1471 = vunpack.c.h.b16 %v1129
        %v1472 = vunpack.c.l.b16 %v1130
        %v1473 = vunpack.c.h.b16 %v1130
        %v1474 = vunpack.c.l.b16 %v1131
        %v1475 = vunpack.c.h.b16 %v1131
        %v1476 = vunpack.c.l.b16 %v1132
        %v1477 = vunpack.c.h.b16 %v1132
        %v1478 = vunpack.c.l.b16 %v1133
        %v1479 = vunpack.c.h.b16 %v1133
        %v1480 = vunpack.c.l.b16 %v1134
        %v1481 = vunpack.c.h.b16 %v1134
        %v1482 = vunpack.c.l.b16 %v1135
        %v1483 = vunpack.c.h.b16 %v1135
        %v1484 = vunpack.c.l.b16 %v1136
        %v1485 = vunpack.c.h.b16 %v1136
        %v1486 = vunpack.c.l.b16 %v1137
        %v1487 = vunpack.c.h.b16 %v1137
        %v1488 = vunpack.c.l.b16 %v1138
        %v1489 = vunpack.c.h.b16 %v1138
        %v1490 = vunpack.c.l.b16 %v1139
        %v1491 = vunpack.c.h.b16 %v1139
        %v1492 = vunpack.c.l.b16 %v1140
        %v1493 = vunpack.c.h.b16 %v1140
        %v1494 = vunpack.c.l.b16 %v1141
        %v1495 = vunpack.c.h.b16 %v1141
        %v1496 = vunpack.c.l.b16 %v1142
        %v1497 = vunpack.c.h.b16 %v1142
        %v1498 = vunpack.c.l.b16 %v1143
        %v1499 = vunpack.c.h.b16 %v1143
        %v1500 = vunpack.c.l.b16 %v1144
        %v1501 = vunpack.c.h.b16 %v1144
        %v1502 = vunpack.c.l.b16 %v1145
        %v1503 = vunpack.c.h.b16 %v1145
        %v1504 = vunpack.c.l.b16 %v1146
        %v1505 = vunpack.c.h.b16 %v1146
        %v1506 = vunpack.c.l.b16 %v1147
        %v1507 = vunpack.c.h.b16 %v1147
        %v1508 = vunpack.c.l.b16 %v1148
        %v1509 = vunpack.c.h.b16 %v1148
        %v1510 = vunpack.c.l.b16 %v1149
        %v1511 = vunpack.c.h.b16 %v1149
        %v1512 = vunpack.c.l.b16 %v1150
        %v1513 = vunpack.c.h.b16 %v1150
        %v1514 = vunpack.c.l.b16 %v1151
        %v1515 = vunpack.c.h.b16 %v1151
        %v1516 = vunpack.c.l.b16 %v1152
        %v1517 = vunpack.c.h.b16 %v1152
        %v1518 = vunpack.c.l.b16 %v1153
        %v1519 = vunpack.c.h.b16 %v1153
        %v1520 = vunpack.c.l.b16 %v1154
        %v1521 = vunpack.c.h.b16 %v1154
        %v1522 = vunpack.c.l.b16 %v1155
        %v1523 = vunpack.c.h.b16 %v1155
        %v1524 = vunpack.c.l.b16 %v1156
        %v1525 = vunpack.c.h.b16 %v1156
        %v1526 = vunpack.c.l.b16 %v1157
        %v1527 = vunpack.c.h.b16 %v1157
        %v1528 = vunpack.c.l.b16 %v1158
        %v1529 = vunpack.c.h.b16 %v1158
        %v1530 = vunpack.c.l.b16 %v1159
        %v1531 = vunpack.c.h.b16 %v1159
        %v1532 = vunpack.c.l.b16 %v1160
        %v1533 = vunpack.c.h.b16 %v1160
        %v1534 = vunpack.c.l.b16 %v1161
        %v1535 = vunpack.c.h.b16 %v1161
        %v1536 = vunpack.c.l.b16 %v1162
        %v1537 = vunpack.c.h.b16 %v1162
        %v1538 = vunpack.c.l.b16 %v1163
        %v1539 = vunpack.c.h.b16 %v1163
        %v1540 = vunpack.c.l.b16 %v1164
        %v1541 = vunpack.c.h.b16 %v1164
        %v1542 = vunpack.c.l.b16 %v1165
        %v1543 = vunpack.c.h.b16 %v1165
        %v1544 = vunpack.c.l.b16 %v1166
        %v1545 = vunpack.c.h.b16 %v1166
        %v1546 = vunpack.c.l.b16 %v1167
        %v1547 = vunpack.c.h.b16 %v1167
        %v1548 = vunpack.c.l.b16 %v1168
        %v1549 = vunpack.c.h.b16 %v1168
        %v1550 = vunpack.c.l.b16 %v1169
        %v1551 = vunpack.c.h.b16 %v1169
        %v1552 = vunpack.c.l.b16 %v1170
        %v1553 = vunpack.c.h.b16 %v1170
        %v1554 = vunpack.c.l.b16 %v1171
        %v1555 = vunpack.c.h.b16 %v1171
        %v1556 = vunpack.c.l.b16 %v1172
        %v1557 = vunpack.c.h.b16 %v1172
        %v1558 = vunpack.c.l.b16 %v1173
        %v1559 = vunpack.c.h.b16 %v1173
        %v1560 = vunpack.c.l.b16 %v1174
        %v1561 = vunpack.c.h.b16 %v1174
        %v1562 = vunpack.c.l.b16 %v1175
        %v1563 = vunpack.c.h.b16 %v1175
        %v1564 = vunpack.c.l.b16 %v1176
        %v1565 = vunpack.c.h.b16 %v1176
        %v1566 = vunpack.c.l.b16 %v1177
        %v1567 = vunpack.c.h.b16 %v1177
        %v1568 = vunpack.c.l.b16 %v1178
        %v1569 = vunpack.c.h.b16 %v1178
        %v1570 = vunpack.c.l.b16 %v1179
        %v1571 = vunpack.c.h.b16 %v1179
        %v1572 = vunpack.c.l.b16 %v1180
        %v1573 = vunpack.c.h.b16 %v1180
        %v1574 = vunpack.c.l.b16 %v1181
        %v1575 = vunpack.c.h.b16 %v1181
        %v1576 = vunpack.c.l.b16 %v1182
        %v1577 = vunpack.c.h.b16 %v1182
        %v1578 = vunpack.c.l.b16 %v1183
        %v1579 = vunpack.c.h.b16 %v1183
        %v1580 = vunpack.c.l.b16 %v1184
        %v1581 = vunpack.c.h.b16 %v1184
        %v1582 = vunpack.c.l.b16 %v1185
        %v1583 = vunpack.c.h.b16 %v1185
        %v1584 = vunpack.c.l.b16 %v1186
        %v1585 = vunpack.c.h.b16 %v1186
        %v1586 = vunpack.c.l.b16 %v1187
        %v1587 = vunpack.c.h.b16 %v1187
        %v1588 = vunpack.c.l.b16 %v1188
        %v1589 = vunpack.c.h.b16 %v1188
        %v1590 = vunpack.c.l.b16 %v1189
        %v1591 = vunpack.c.h.b16 %v1189
        %v1592 = vunpack.c.l.b16 %v1190
        %v1593 = vunpack.c.h.b16 %v1190
        %v1594 = vunpack.c.l.b16 %v1191
        %v1595 = vunpack.c.h.b16 %v1191
        %v1596 = vunpack.c.l.b16 %v1192
        %v1597 = vunpack.c.h.b16 %v1192
        %v1598 = vunpack.c.l.b16 %v1193
        %v1599 = vunpack.c.h.b16 %v1193
        %v1600 = vpack.c.b16 %v1348, %v1344
        %v1601 = vpack.c.b16 %v1349, %v1345
        %v1602 = vpack.c.b16 %v1350, %v1346
        %v1603 = vpack.c.b16 %v1351, %v1347
        %v1604 = vpack.c.b16 %v1356, %v1352
        %v1605 = vpack.c.b16 %v1357, %v1353
        %v1606 = vpack.c.b16 %v1358, %v1354
        %v1607 = vpack.c.b16 %v1359, %v1355
        %v1608 = vpack.c.b16 %v1364, %v1360
        %v1609 = vpack.c.b16 %v1365, %v1361
        %v1610 = vpack.c.b16 %v1366, %v1362
        %v1611 = vpack.c.b16 %v1367, %v1363
        %v1612 = vpack.c.b16 %v1372, %v1368
        %v1613 = vpack.c.b16 %v1373, %v1369
        %v1614 = vpack.c.b16 %v1374, %v1370
        %v1615 = vpack.c.b16 %v1375, %v1371
        %v1616 = vpack.c.b16 %v1380, %v1376
        %v1617 = vpack.c.b16 %v1381, %v1377
        %v1618 = vpack.c.b16 %v1382, %v1378
        %v1619 = vpack.c.b16 %v1383, %v1379
        %v1620 = vpack.c.b16 %v1388, %v1384
        %v1621 = vpack.c.b16 %v1389, %v1385
        %v1622 = vpack.c.b16 %v1390, %v1386
        %v1623 = vpack.c.b16 %v1391, %v1387
        %v1624 = vpack.c.b16 %v1396, %v1392
        %v1625 = vpack.c.b16 %v1397, %v1393
        %v1626 = vpack.c.b16 %v1398, %v1394
        %v1627 = vpack.c.b16 %v1399, %v1395
        %v1628 = vpack.c.b16 %v1404, %v1400
        %v1629 = vpack.c.b16 %v1405, %v1401
        %v1630 = vpack.c.b16 %v1406, %v1402
        %v1631 = vpack.c.b16 %v1407, %v1403
        %v1632 = vpack.c.b16 %v1412, %v1408
        %v1633 = vpack.c.b16 %v1413, %v1409
        %v1634 = vpack.c.b16 %v1414, %v1410
        %v1635 = vpack.c.b16 %v1415, %v1411
        %v1636 = vpack.c.b16 %v1420, %v1416
        %v1637 = vpack.c.b16 %v1421, %v1417
        %v1638 = vpack.c.b16 %v1422, %v1418
        %v1639 = vpack.c.b16 %v1423, %v1419
        %v1640 = vpack.c.b16 %v1428, %v1424
        %v1641 = vpack.c.b16 %v1429, %v1425
        %v1642 = vpack.c.b16 %v1430, %v1426
        %v1643 = vpack.c.b16 %v1431, %v1427
        %v1644 = vpack.c.b16 %v1436, %v1432
        %v1645 = vpack.c.b16 %v1437, %v1433
        %v1646 = vpack.c.b16 %v1438, %v1434
        %v1647 = vpack.c.b16 %v1439, %v1435
        %v1648 = vpack.c.b16 %v1444, %v1440
        %v1649 = vpack.c.b16 %v1445, %v1441
        %v1650 = vpack.c.b16 %v1446, %v1442
        %v1651 = vpack.c.b16 %v1447, %v1443
        %v1652 = vpack.c.b16 %v1452, %v1448
        %v1653 = vpack.c.b16 %v1453, %v1449
        %v1654 = vpack.c.b16 %v1454, %v1450
        %v1655 = vpack.c.b16 %v1455, %v1451
        %v1656 = vpack.c.b16 %v1460, %v1456
        %v1657 = vpack.c.b16 %v1461, %v1457
        %v1658 = vpack.c.b16 %v1462, %v1458
        %v1659 = vpack.c.b16 %v1463, %v1459
        %v1660 = vpack.c.b16 %v1468, %v1464
        %v1661 = vpack.c.b16 %v1469, %v1465
        %v1662 = vpack.c.b16 %v1470, %v1466
        %v1663 = vpack.c.b16 %v1471, %v1467
        %v1664 = vpack.c.b16 %v1476, %v1472
        %v1665 = vpack.c.b16 %v1477, %v1473
        %v1666 = vpack.c.b16 %v1478, %v1474
        %v1667 = vpack.c.b16 %v1479, %v1475
        %v1668 = vpack.c.b16 %v1484, %v1480
        %v1669 = vpack.c.b16 %v1485, %v1481
        %v1670 = vpack.c.b16 %v1486, %v1482
        %v1671 = vpack.c.b16 %v1487, %v1483
        %v1672 = vpack.c.b16 %v1492, %v1488
        %v1673 = vpack.c.b16 %v1493, %v1489
        %v1674 = vpack.c.b16 %v1494, %v1490
        %v1675 = vpack.c.b16 %v1495, %v1491
        %v1676 = vpack.c.b16 %v1500, %v1496
        %v1677 = vpack.c.b16 %v1501, %v1497
        %v1678 = vpack.c.b16 %v1502, %v1498
        %v1679 = vpack.c.b16 %v1503, %v1499
        %v1680 = vpack.c.b16 %v1508, %v1504
        %v1681 = vpack.c.b16 %v1509, %v1505
        %v1682 = vpack.c.b16 %v1510, %v1506
        %v1683 = vpack.c.b16 %v1511, %v1507
        %v1684 = vpack.c.b16 %v1516, %v1512
        %v1685 = vpack.c.b16 %v1517, %v1513
        %v1686 = vpack.c.b16 %v1518, %v1514
        %v1687 = vpack.c.b16 %v1519, %v1515
        %v1688 = vpack.c.b16 %v1524, %v1520
        %v1689 = vpack.c.b16 %v1525, %v1521
        %v1690 = vpack.c.b16 %v1526, %v1522
        %v1691 = vpack.c.b16 %v1527, %v1523
        %v1692 = vpack.c.b16 %v1532, %v1528
        %v1693 = vpack.c.b16 %v1533, %v1529
        %v1694 = vpack.c.b16 %v1534, %v1530
        %v1695 = vpack.c.b16 %v1535, %v1531
        %v1696 = vpack.c.b16 %v1540, %v1536
        %v1697 = vpack.c.b16 %v1541, %v1537
        %v1698 = vpack.c.b16 %v1542, %v1538
        %v1699 = vpack.c.b16 %v1543, %v1539
        %v1700 = vpack.c.b16 %v1548, %v1544
        %v1701 = vpack.c.b16 %v1549, %v1545
        %v1702 = vpack.c.b16 %v1550, %v1546
        %v1703 = vpack.c.b16 %v1551, %v1547
        %v1704 = vpack.c.b16 %v1556, %v1552
        %v1705 = vpack.c.b16 %v1557, %v1553
        %v1706 = vpack.c.b16 %v1558, %v1554
        %v1707 = vpack.c.b16 %v1559, %v1555
        %v1708 = vpack.c.b16 %v1564, %v1560
        %v1709 = vpack.c.b16 %v1565, %v1561
        %v1710 = vpack.c.b16 %v1566, %v1562
        %v1711 = vpack.c.b16 %v1567, %v1563
        %v1712 = vpack.c.b16 %v1572, %v1568
        %v1713 = vpack.c.b16 %v1573, %v1569
        %v1714 = vpack.c.b16 %v1574, %v1570
        %v1715 = vpack.c.b16 %v1575, %v1571
        %v1716 = vpack.c.b16 %v1580, %v1576
        %v1717 = vpack.c.b16 %v1581, %v1577
        %v1718 = vpack.c.b16 %v1582, %v1578
        %v1719 = vpack.c.b16 %v1583, %v1579
        %v1720 = vpack.c.b16 %v1588, %v1584
        %v1721 = vpack.c.b16 %v1589, %v1585
        %v1722 = vpack.c.b16 %v1590, %v1586
        %v1723 = vpack.c.b16 %v1591, %v1587
        %v1724 = vpack.c.b16 %v1596, %v1592
        %v1725 = vpack.c.b16 %v1597, %v1593
        %v1726 = vpack.c.b16 %v1598, %v1594
        %v1727 = vpack.c.b16 %v1599, %v1595
        %1856 = vmatprep.subr.bf16.mxu0 %v1601
        %1857 = vmatpush1.bf16.msra.mxu0 %v1600
        %1858 = vmatprep.subr.bf16.mxu0 %v1605
        %1859 = vmatpush1.bf16.msra.mxu0 %v1604
        %1860 = vmatprep.subr.bf16.mxu0 %v1609
        %1861 = vmatpush1.bf16.msra.mxu0 %v1608
        %1862 = vmatprep.subr.bf16.mxu0 %v1613
        %1863 = vmatpush1.bf16.msra.mxu0 %v1612
        %1864 = vmatprep.subr.bf16.mxu0 %v1617
        %1865 = vmatpush1.bf16.msra.mxu0 %v1616
        %1866 = vmatprep.subr.bf16.mxu0 %v1621
        %1867 = vmatpush1.bf16.msra.mxu0 %v1620
        %1868 = vmatprep.subr.bf16.mxu0 %v1625
        %1869 = vmatpush1.bf16.msra.mxu0 %v1624
        %1870 = vmatprep.subr.bf16.mxu0 %v1629
        %1871 = vmatpush1.bf16.msra.mxu0 %v1628
        %1872 = vmatprep.subr.bf16.mxu0 %v1633
        %1873 = vmatpush1.bf16.msra.mxu0 %v1632
        %1874 = vmatprep.subr.bf16.mxu0 %v1637
        %1875 = vmatpush1.bf16.msra.mxu0 %v1636
        %1876 = vmatprep.subr.bf16.mxu0 %v1641
        %1877 = vmatpush1.bf16.msra.mxu0 %v1640
        %1878 = vmatprep.subr.bf16.mxu0 %v1645
        %1879 = vmatpush1.bf16.msra.mxu0 %v1644
        %1880 = vmatprep.subr.bf16.mxu0 %v1649
        %1881 = vmatpush1.bf16.msra.mxu0 %v1648
        %1882 = vmatprep.subr.bf16.mxu0 %v1653
        %1883 = vmatpush1.bf16.msra.mxu0 %v1652
        %1884 = vmatprep.subr.bf16.mxu0 %v1657
        %1885 = vmatpush1.bf16.msra.mxu0 %v1656
        %1886 = vmatprep.subr.bf16.mxu0 %v1661
        %1887 = vmatpush1.bf16.msra.mxu0 %v1660
        %1888 = vmatprep.mubr.bf16.mxu0 %v1003
        %1889 = vmatmul.mubr.bf16.gmra.mrb[0].mxu0 %v1002
        %v1890 = vpop.f32.mrb[0].mxu0
        %v1891 = vadd.f32 %v1199, %v1890
        %v1892 = vpop.f32.mrb[0].mxu0
        %v1893 = vadd.f32 %v1203, %v1892
        %v1894 = vpop.f32.mrb[0].mxu0
        %v1895 = vadd.f32 %v1199, %v1894
        %v1896 = vpop.f32.mrb[0].mxu0
        %v1897 = vadd.f32 %v1203, %v1896
        %1898 = vmatprep.mubr.bf16.mxu0 %v1007
        %1899 = vmatmul.mubr.bf16.gmra.mrb[0].mxu0 %v1006
        %v1900 = vpop.f32.mrb[0].mxu0
        %v1901 = vadd.f32 %v1199, %v1900
        %v1902 = vpop.f32.mrb[0].mxu0
        %v1903 = vadd.f32 %v1203, %v1902
        %v1904 = vpop.f32.mrb[0].mxu0
        %v1905 = vadd.f32 %v1199, %v1904
        %v1906 = vpop.f32.mrb[0].mxu0
        %v1907 = vadd.f32 %v1203, %v1906
        %1908 = vmatprep.mubr.bf16.mxu0 %v1011
        %1909 = vmatmul.mubr.bf16.gmra.mrb[0].mxu0 %v1010
        %v1910 = vpop.f32.mrb[0].mxu0
        %v1911 = vadd.f32 %v1199, %v1910
        %v1912 = vpop.f32.mrb[0].mxu0
        %v1913 = vadd.f32 %v1203, %v1912
        %v1914 = vpop.f32.mrb[0].mxu0
        %v1915 = vadd.f32 %v1199, %v1914
        %v1916 = vpop.f32.mrb[0].mxu0
        %v1917 = vadd.f32 %v1203, %v1916
        %1918 = vmatprep.mubr.bf16.mxu0 %v1015
        %1919 = vmatmul.mubr.bf16.gmra.mrb[0].mxu0 %v1014
        %v1920 = vpop.f32.mrb[0].mxu0
        %v1921 = vadd.f32 %v1199, %v1920
        %v1922 = vpop.f32.mrb[0].mxu0
        %v1923 = vadd.f32 %v1203, %v1922
        %v1924 = vpop.f32.mrb[0].mxu0
        %v1925 = vadd.f32 %v1199, %v1924
        %v1926 = vpop.f32.mrb[0].mxu0
        %v1927 = vadd.f32 %v1203, %v1926
        %1928 = vmatprep.mubr.bf16.mxu0 %v1019
        %1929 = vmatmul.mubr.bf16.gmra.mrb[0].mxu0 %v1018
        %v1930 = vpop.f32.mrb[0].mxu0
        %v1931 = vadd.f32 %v1199, %v1930
        %v1932 = vpop.f32.mrb[0].mxu0
        %v1933 = vadd.f32 %v1203, %v1932
        %v1934 = vpop.f32.mrb[0].mxu0
        %v1935 = vadd.f32 %v1199, %v1934
        %v1936 = vpop.f32.mrb[0].mxu0
        %v1937 = vadd.f32 %v1203, %v1936
        %1938 = vmatprep.mubr.bf16.mxu0 %v1023
        %1939 = vmatmul.mubr.bf16.gmra.mrb[0].mxu0 %v1022
        %v1940 = vpop.f32.mrb[0].mxu0
        %v1941 = vadd.f32 %v1199, %v1940
        %v1942 = vpop.f32.mrb[0].mxu0
        %v1943 = vadd.f32 %v1203, %v1942
        %v1944 = vpop.f32.mrb[0].mxu0
        %v1945 = vadd.f32 %v1199, %v1944
        %v1946 = vpop.f32.mrb[0].mxu0
        %v1947 = vadd.f32 %v1203, %v1946
        %1948 = vmatprep.mubr.bf16.mxu0 %v1027
        %1949 = vmatmul.mubr.bf16.gmra.mrb[0].mxu0 %v1026
        %v1950 = vpop.f32.mrb[0].mxu0
        %v1951 = vadd.f32 %v1199, %v1950
        %v1952 = vpop.f32.mrb[0].mxu0
        %v1953 = vadd.f32 %v1203, %v1952
        %v1954 = vpop.f32.mrb[0].mxu0
        %v1955 = vadd.f32 %v1199, %v1954
        %v1956 = vpop.f32.mrb[0].mxu0
        %v1957 = vadd.f32 %v1203, %v1956
        %1958 = vmatprep.mubr.bf16.mxu0 %v1031
        %1959 = vmatmul.mubr.bf16.gmra.mrb[0].mxu0 %v1030
        %v1960 = vpop.f32.mrb[0].mxu0
        %v1961 = vadd.f32 %v1199, %v1960
        %v1962 = vpop.f32.mrb[0].mxu0
        %v1963 = vadd.f32 %v1203, %v1962
        %v1964 = vpop.f32.mrb[0].mxu0
        %v1965 = vadd.f32 %v1199, %v1964
        %v1966 = vpop.f32.mrb[0].mxu0
        %v1967 = vadd.f32 %v1203, %v1966
        %1968 = vmatprep.mubr.bf16.mxu0 %v1035
        %1969 = vmatmul.mubr.bf16.gmra.mrb[0].mxu0 %v1034
        %v1970 = vpop.f32.mrb[0].mxu0
        %v1971 = vadd.f32 %v1199, %v1970
        %v1972 = vpop.f32.mrb[0].mxu0
        %v1973 = vadd.f32 %v1203, %v1972
        %v1974 = vpop.f32.mrb[0].mxu0
        %v1975 = vadd.f32 %v1199, %v1974
        %v1976 = vpop.f32.mrb[0].mxu0
        %v1977 = vadd.f32 %v1203, %v1976
        %1978 = vmatprep.mubr.bf16.mxu0 %v1039
        %1979 = vmatmul.mubr.bf16.gmra.mrb[0].mxu0 %v1038
        %v1980 = vpop.f32.mrb[0].mxu0
        %v1981 = vadd.f32 %v1199, %v1980
        %v1982 = vpop.f32.mrb[0].mxu0
        %v1983 = vadd.f32 %v1203, %v1982
        %v1984 = vpop.f32.mrb[0].mxu0
        %v1985 = vadd.f32 %v1199, %v1984
        %v1986 = vpop.f32.mrb[0].mxu0
        %v1987 = vadd.f32 %v1203, %v1986
        %1988 = vmatprep.mubr.bf16.mxu0 %v1043
        %1989 = vmatmul.mubr.bf16.gmra.mrb[0].mxu0 %v1042
        %v1990 = vpop.f32.mrb[0].mxu0
        %v1991 = vadd.f32 %v1199, %v1990
        %v1992 = vpop.f32.mrb[0].mxu0
        %v1993 = vadd.f32 %v1203, %v1992
        %v1994 = vpop.f32.mrb[0].mxu0
        %v1995 = vadd.f32 %v1199, %v1994
        %v1996 = vpop.f32.mrb[0].mxu0
        %v1997 = vadd.f32 %v1203, %v1996
        %1998 = vmatprep.mubr.bf16.mxu0 %v1047
        %1999 = vmatmul.mubr.bf16.gmra.mrb[0].mxu0 %v1046
        %v2000 = vpop.f32.mrb[0].mxu0
        %v2001 = vadd.f32 %v1199, %v2000
        %v2002 = vpop.f32.mrb[0].mxu0
        %v2003 = vadd.f32 %v1203, %v2002
        %v2004 = vpop.f32.mrb[0].mxu0
        %v2005 = vadd.f32 %v1199, %v2004
        %v2006 = vpop.f32.mrb[0].mxu0
        %v2007 = vadd.f32 %v1203, %v2006
        %2008 = vmatprep.mubr.bf16.mxu0 %v1051
        %2009 = vmatmul.mubr.bf16.gmra.mrb[0].mxu0 %v1050
        %v2010 = vpop.f32.mrb[0].mxu0
        %v2011 = vadd.f32 %v1199, %v2010
        %v2012 = vpop.f32.mrb[0].mxu0
        %v2013 = vadd.f32 %v1203, %v2012
        %v2014 = vpop.f32.mrb[0].mxu0
        %v2015 = vadd.f32 %v1199, %v2014
        %v2016 = vpop.f32.mrb[0].mxu0
        %v2017 = vadd.f32 %v1203, %v2016
        %2018 = vmatprep.mubr.bf16.mxu0 %v1055
        %2019 = vmatmul.mubr.bf16.gmra.mrb[0].mxu0 %v1054
        %v2020 = vpop.f32.mrb[0].mxu0
        %v2021 = vadd.f32 %v1199, %v2020
        %v2022 = vpop.f32.mrb[0].mxu0
        %v2023 = vadd.f32 %v1203, %v2022
        %v2024 = vpop.f32.mrb[0].mxu0
        %v2025 = vadd.f32 %v1199, %v2024
        %v2026 = vpop.f32.mrb[0].mxu0
        %v2027 = vadd.f32 %v1203, %v2026
        %2028 = vmatprep.mubr.bf16.mxu0 %v1059
        %2029 = vmatmul.mubr.bf16.gmra.mrb[0].mxu0 %v1058
        %v2030 = vpop.f32.mrb[0].mxu0
        %v2031 = vadd.f32 %v1199, %v2030
        %v2032 = vpop.f32.mrb[0].mxu0
        %v2033 = vadd.f32 %v1203, %v2032
        %v2034 = vpop.f32.mrb[0].mxu0
        %v2035 = vadd.f32 %v1199, %v2034
        %v2036 = vpop.f32.mrb[0].mxu0
        %v2037 = vadd.f32 %v1203, %v2036
        %2038 = vmatprep.mubr.bf16.mxu0 %v1063
        %2039 = vmatmul.mubr.bf16.gmra.mrb[0].mxu0 %v1062
        %v2040 = vpop.f32.mrb[0].mxu0
        %v2041 = vadd.f32 %v1199, %v2040
        %v2042 = vpop.f32.mrb[0].mxu0
        %v2043 = vadd.f32 %v1203, %v2042
        %v2044 = vpop.f32.mrb[0].mxu0
        %v2045 = vadd.f32 %v1199, %v2044
        %v2046 = vpop.f32.mrb[0].mxu0
        %v2047 = vadd.f32 %v1203, %v2046
        %2048 = vdwg.mxu0
        %2049 = vmatprep.subr.bf16.mxu0 %v1665
        %2050 = vmatpush1.bf16.msra.mxu0 %v1664
        %2051 = vmatprep.subr.bf16.mxu0 %v1669
        %2052 = vmatpush1.bf16.msra.mxu0 %v1668
        %2053 = vmatprep.subr.bf16.mxu0 %v1673
        %2054 = vmatpush1.bf16.msra.mxu0 %v1672
        %2055 = vmatprep.subr.bf16.mxu0 %v1677
        %2056 = vmatpush1.bf16.msra.mxu0 %v1676
        %2057 = vmatprep.subr.bf16.mxu0 %v1681
        %2058 = vmatpush1.bf16.msra.mxu0 %v1680
        %2059 = vmatprep.subr.bf16.mxu0 %v1685
        %2060 = vmatpush1.bf16.msra.mxu0 %v1684
        %2061 = vmatprep.subr.bf16.mxu0 %v1689
        %2062 = vmatpush1.bf16.msra.mxu0 %v1688
        %2063 = vmatprep.subr.bf16.mxu0 %v1693
        %2064 = vmatpush1.bf16.msra.mxu0 %v1692
        %2065 = vmatprep.subr.bf16.mxu0 %v1697
        %2066 = vmatpush1.bf16.msra.mxu0 %v1696
        %2067 = vmatprep.subr.bf16.mxu0 %v1701
        %2068 = vmatpush1.bf16.msra.mxu0 %v1700
        %2069 = vmatprep.subr.bf16.mxu0 %v1705
        %2070 = vmatpush1.bf16.msra.mxu0 %v1704
        %2071 = vmatprep.subr.bf16.mxu0 %v1709
        %2072 = vmatpush1.bf16.msra.mxu0 %v1708
        %2073 = vmatprep.subr.bf16.mxu0 %v1713
        %2074 = vmatpush1.bf16.msra.mxu0 %v1712
        %2075 = vmatprep.subr.bf16.mxu0 %v1717
        %2076 = vmatpush1.bf16.msra.mxu0 %v1716
        %2077 = vmatprep.subr.bf16.mxu0 %v1721
        %2078 = vmatpush1.bf16.msra.mxu0 %v1720
        %2079 = vmatprep.subr.bf16.mxu0 %v1725
        %2080 = vmatpush1.bf16.msra.mxu0 %v1724
        %2081 = vmatprep.mubr.bf16.mxu0 %v1005
        %2082 = vmatmul.mubr.bf16.gmra.mrb[0].mxu0 %v1004
        %v2083 = vpop.f32.mrb[0].mxu0
        %v2084 = vadd.f32 %v1891, %v2083
        %v2085 = vpop.f32.mrb[0].mxu0
        %v2086 = vadd.f32 %v1893, %v2085
        %v2087 = vpop.f32.mrb[0].mxu0
        %v2088 = vadd.f32 %v1895, %v2087
        %v2089 = vpop.f32.mrb[0].mxu0
        %v2090 = vadd.f32 %v1897, %v2089
        %2091 = vmatprep.mubr.bf16.mxu0 %v1009
        %2092 = vmatmul.mubr.bf16.gmra.mrb[0].mxu0 %v1008
        %v2093 = vpop.f32.mrb[0].mxu0
        %v2094 = vadd.f32 %v1901, %v2093
        %v2095 = vpop.f32.mrb[0].mxu0
        %v2096 = vadd.f32 %v1903, %v2095
        %v2097 = vpop.f32.mrb[0].mxu0
        %v2098 = vadd.f32 %v1905, %v2097
        %v2099 = vpop.f32.mrb[0].mxu0
        %v2100 = vadd.f32 %v1907, %v2099
        %2101 = vmatprep.mubr.bf16.mxu0 %v1013
        %2102 = vmatmul.mubr.bf16.gmra.mrb[0].mxu0 %v1012
        %v2103 = vpop.f32.mrb[0].mxu0
        %v2104 = vadd.f32 %v1911, %v2103
        %v2105 = vpop.f32.mrb[0].mxu0
        %v2106 = vadd.f32 %v1913, %v2105
        %v2107 = vpop.f32.mrb[0].mxu0
        %v2108 = vadd.f32 %v1915, %v2107
        %v2109 = vpop.f32.mrb[0].mxu0
        %v2110 = vadd.f32 %v1917, %v2109
        %2111 = vmatprep.mubr.bf16.mxu0 %v1017
        %2112 = vmatmul.mubr.bf16.gmra.mrb[0].mxu0 %v1016
        %v2113 = vpop.f32.mrb[0].mxu0
        %v2114 = vadd.f32 %v1921, %v2113
        %v2115 = vpop.f32.mrb[0].mxu0
        %v2116 = vadd.f32 %v1923, %v2115
        %v2117 = vpop.f32.mrb[0].mxu0
        %v2118 = vadd.f32 %v1925, %v2117
        %v2119 = vpop.f32.mrb[0].mxu0
        %v2120 = vadd.f32 %v1927, %v2119
        %2121 = vmatprep.mubr.bf16.mxu0 %v1021
        %2122 = vmatmul.mubr.bf16.gmra.mrb[0].mxu0 %v1020
        %v2123 = vpop.f32.mrb[0].mxu0
        %v2124 = vadd.f32 %v1931, %v2123
        %v2125 = vpop.f32.mrb[0].mxu0
        %v2126 = vadd.f32 %v1933, %v2125
        %v2127 = vpop.f32.mrb[0].mxu0
        %v2128 = vadd.f32 %v1935, %v2127
        %v2129 = vpop.f32.mrb[0].mxu0
        %v2130 = vadd.f32 %v1937, %v2129
        %2131 = vmatprep.mubr.bf16.mxu0 %v1025
        %2132 = vmatmul.mubr.bf16.gmra.mrb[0].mxu0 %v1024
        %v2133 = vpop.f32.mrb[0].mxu0
        %v2134 = vadd.f32 %v1941, %v2133
        %v2135 = vpop.f32.mrb[0].mxu0
        %v2136 = vadd.f32 %v1943, %v2135
        %v2137 = vpop.f32.mrb[0].mxu0
        %v2138 = vadd.f32 %v1945, %v2137
        %v2139 = vpop.f32.mrb[0].mxu0
        %v2140 = vadd.f32 %v1947, %v2139
        %2141 = vmatprep.mubr.bf16.mxu0 %v1029
        %2142 = vmatmul.mubr.bf16.gmra.mrb[0].mxu0 %v1028
        %v2143 = vpop.f32.mrb[0].mxu0
        %v2144 = vadd.f32 %v1951, %v2143
        %v2145 = vpop.f32.mrb[0].mxu0
        %v2146 = vadd.f32 %v1953, %v2145
        %v2147 = vpop.f32.mrb[0].mxu0
        %v2148 = vadd.f32 %v1955, %v2147
        %v2149 = vpop.f32.mrb[0].mxu0
        %v2150 = vadd.f32 %v1957, %v2149
        %2151 = vmatprep.mubr.bf16.mxu0 %v1033
        %2152 = vmatmul.mubr.bf16.gmra.mrb[0].mxu0 %v1032
        %v2153 = vpop.f32.mrb[0].mxu0
        %v2154 = vadd.f32 %v1961, %v2153
        %v2155 = vpop.f32.mrb[0].mxu0
        %v2156 = vadd.f32 %v1963, %v2155
        %v2157 = vpop.f32.mrb[0].mxu0
        %v2158 = vadd.f32 %v1965, %v2157
        %v2159 = vpop.f32.mrb[0].mxu0
        %v2160 = vadd.f32 %v1967, %v2159
        %2161 = vmatprep.mubr.bf16.mxu0 %v1037
        %2162 = vmatmul.mubr.bf16.gmra.mrb[0].mxu0 %v1036
        %v2163 = vpop.f32.mrb[0].mxu0
        %v2164 = vadd.f32 %v1971, %v2163
        %v2165 = vpop.f32.mrb[0].mxu0
        %v2166 = vadd.f32 %v1973, %v2165
        %v2167 = vpop.f32.mrb[0].mxu0
        %v2168 = vadd.f32 %v1975, %v2167
        %v2169 = vpop.f32.mrb[0].mxu0
        %v2170 = vadd.f32 %v1977, %v2169
        %2171 = vmatprep.mubr.bf16.mxu0 %v1041
        %2172 = vmatmul.mubr.bf16.gmra.mrb[0].mxu0 %v1040
        %v2173 = vpop.f32.mrb[0].mxu0
        %v2174 = vadd.f32 %v1981, %v2173
        %v2175 = vpop.f32.mrb[0].mxu0
        %v2176 = vadd.f32 %v1983, %v2175
        %v2177 = vpop.f32.mrb[0].mxu0
        %v2178 = vadd.f32 %v1985, %v2177
        %v2179 = vpop.f32.mrb[0].mxu0
        %v2180 = vadd.f32 %v1987, %v2179
        %2181 = vmatprep.mubr.bf16.mxu0 %v1045
        %2182 = vmatmul.mubr.bf16.gmra.mrb[0].mxu0 %v1044
        %v2183 = vpop.f32.mrb[0].mxu0
        %v2184 = vadd.f32 %v1991, %v2183
        %v2185 = vpop.f32.mrb[0].mxu0
        %v2186 = vadd.f32 %v1993, %v2185
        %v2187 = vpop.f32.mrb[0].mxu0
        %v2188 = vadd.f32 %v1995, %v2187
        %v2189 = vpop.f32.mrb[0].mxu0
        %v2190 = vadd.f32 %v1997, %v2189
        %2191 = vmatprep.mubr.bf16.mxu0 %v1049
        %2192 = vmatmul.mubr.bf16.gmra.mrb[0].mxu0 %v1048
        %v2193 = vpop.f32.mrb[0].mxu0
        %v2194 = vadd.f32 %v2001, %v2193
        %v2195 = vpop.f32.mrb[0].mxu0
        %v2196 = vadd.f32 %v2003, %v2195
        %v2197 = vpop.f32.mrb[0].mxu0
        %v2198 = vadd.f32 %v2005, %v2197
        %v2199 = vpop.f32.mrb[0].mxu0
        %v2200 = vadd.f32 %v2007, %v2199
        %2201 = vmatprep.mubr.bf16.mxu0 %v1053
        %2202 = vmatmul.mubr.bf16.gmra.mrb[0].mxu0 %v1052
        %v2203 = vpop.f32.mrb[0].mxu0
        %v2204 = vadd.f32 %v2011, %v2203
        %v2205 = vpop.f32.mrb[0].mxu0
        %v2206 = vadd.f32 %v2013, %v2205
        %v2207 = vpop.f32.mrb[0].mxu0
        %v2208 = vadd.f32 %v2015, %v2207
        %v2209 = vpop.f32.mrb[0].mxu0
        %v2210 = vadd.f32 %v2017, %v2209
        %2211 = vmatprep.mubr.bf16.mxu0 %v1057
        %2212 = vmatmul.mubr.bf16.gmra.mrb[0].mxu0 %v1056
        %v2213 = vpop.f32.mrb[0].mxu0
        %v2214 = vadd.f32 %v2021, %v2213
        %v2215 = vpop.f32.mrb[0].mxu0
        %v2216 = vadd.f32 %v2023, %v2215
        %v2217 = vpop.f32.mrb[0].mxu0
        %v2218 = vadd.f32 %v2025, %v2217
        %v2219 = vpop.f32.mrb[0].mxu0
        %v2220 = vadd.f32 %v2027, %v2219
        %2221 = vmatprep.mubr.bf16.mxu0 %v1061
        %2222 = vmatmul.mubr.bf16.gmra.mrb[0].mxu0 %v1060
        %v2223 = vpop.f32.mrb[0].mxu0
        %v2224 = vadd.f32 %v2031, %v2223
        %v2225 = vpop.f32.mrb[0].mxu0
        %v2226 = vadd.f32 %v2033, %v2225
        %v2227 = vpop.f32.mrb[0].mxu0
        %v2228 = vadd.f32 %v2035, %v2227
        %v2229 = vpop.f32.mrb[0].mxu0
        %v2230 = vadd.f32 %v2037, %v2229
        %2231 = vmatprep.mubr.bf16.mxu0 %v1065
        %2232 = vmatmul.mubr.bf16.gmra.mrb[0].mxu0 %v1064
        %v2233 = vpop.f32.mrb[0].mxu0
        %v2234 = vadd.f32 %v2041, %v2233
        %v2235 = vpop.f32.mrb[0].mxu0
        %v2236 = vadd.f32 %v2043, %v2235
        %v2237 = vpop.f32.mrb[0].mxu0
        %v2238 = vadd.f32 %v2045, %v2237
        %v2239 = vpop.f32.mrb[0].mxu0
        %v2240 = vadd.f32 %v2047, %v2239
        %2241 = vdwg.mxu0
        %2242 = vmatprep.subr.bf16.mxu0 %v1603
        %2243 = vmatpush1.bf16.msra.mxu0 %v1602
        %2244 = vmatprep.subr.bf16.mxu0 %v1607
        %2245 = vmatpush1.bf16.msra.mxu0 %v1606
        %2246 = vmatprep.subr.bf16.mxu0 %v1611
        %2247 = vmatpush1.bf16.msra.mxu0 %v1610
        %2248 = vmatprep.subr.bf16.mxu0 %v1615
        %2249 = vmatpush1.bf16.msra.mxu0 %v1614
        %2250 = vmatprep.subr.bf16.mxu0 %v1619
        %2251 = vmatpush1.bf16.msra.mxu0 %v1618
        %2252 = vmatprep.subr.bf16.mxu0 %v1623
        %2253 = vmatpush1.bf16.msra.mxu0 %v1622
        %2254 = vmatprep.subr.bf16.mxu0 %v1627
        %2255 = vmatpush1.bf16.msra.mxu0 %v1626
        %2256 = vmatprep.subr.bf16.mxu0 %v1631
        %2257 = vmatpush1.bf16.msra.mxu0 %v1630
        %2258 = vmatprep.subr.bf16.mxu0 %v1635
        %2259 = vmatpush1.bf16.msra.mxu0 %v1634
        %2260 = vmatprep.subr.bf16.mxu0 %v1639
        %2261 = vmatpush1.bf16.msra.mxu0 %v1638
        %2262 = vmatprep.subr.bf16.mxu0 %v1643
        %2263 = vmatpush1.bf16.msra.mxu0 %v1642
        %2264 = vmatprep.subr.bf16.mxu0 %v1647
        %2265 = vmatpush1.bf16.msra.mxu0 %v1646
        %2266 = vmatprep.subr.bf16.mxu0 %v1651
        %2267 = vmatpush1.bf16.msra.mxu0 %v1650
        %2268 = vmatprep.subr.bf16.mxu0 %v1655
        %2269 = vmatpush1.bf16.msra.mxu0 %v1654
        %2270 = vmatprep.subr.bf16.mxu0 %v1659
        %2271 = vmatpush1.bf16.msra.mxu0 %v1658
        %2272 = vmatprep.subr.bf16.mxu0 %v1663
        %2273 = vmatpush1.bf16.msra.mxu0 %v1662
        %2274 = vmatprep.mubr.bf16.mxu0 %v1003
        %2275 = vmatmul.mubr.bf16.gmra.mrb[0].mxu0 %v1002
        %v2276 = vpop.f32.mrb[0].mxu0
        %v2277 = vadd.f32 %v1207, %v2276
        %v2278 = vpop.f32.mrb[0].mxu0
        %v2279 = vadd.f32 %v1211, %v2278
        %v2280 = vpop.f32.mrb[0].mxu0
        %v2281 = vadd.f32 %v1207, %v2280
        %v2282 = vpop.f32.mrb[0].mxu0
        %v2283 = vadd.f32 %v1211, %v2282
        %2284 = vmatprep.mubr.bf16.mxu0 %v1007
        %2285 = vmatmul.mubr.bf16.gmra.mrb[0].mxu0 %v1006
        %v2286 = vpop.f32.mrb[0].mxu0
        %v2287 = vadd.f32 %v1207, %v2286
        %v2288 = vpop.f32.mrb[0].mxu0
        %v2289 = vadd.f32 %v1211, %v2288
        %v2290 = vpop.f32.mrb[0].mxu0
        %v2291 = vadd.f32 %v1207, %v2290
        %v2292 = vpop.f32.mrb[0].mxu0
        %v2293 = vadd.f32 %v1211, %v2292
        %2294 = vmatprep.mubr.bf16.mxu0 %v1011
        %2295 = vmatmul.mubr.bf16.gmra.mrb[0].mxu0 %v1010
        %v2296 = vpop.f32.mrb[0].mxu0
        %v2297 = vadd.f32 %v1207, %v2296
        %v2298 = vpop.f32.mrb[0].mxu0
        %v2299 = vadd.f32 %v1211, %v2298
        %v2300 = vpop.f32.mrb[0].mxu0
        %v2301 = vadd.f32 %v1207, %v2300
        %v2302 = vpop.f32.mrb[0].mxu0
        %v2303 = vadd.f32 %v1211, %v2302
        %2304 = vmatprep.mubr.bf16.mxu0 %v1015
        %2305 = vmatmul.mubr.bf16.gmra.mrb[0].mxu0 %v1014
        %v2306 = vpop.f32.mrb[0].mxu0
        %v2307 = vadd.f32 %v1207, %v2306
        %v2308 = vpop.f32.mrb[0].mxu0
        %v2309 = vadd.f32 %v1211, %v2308
        %v2310 = vpop.f32.mrb[0].mxu0
        %v2311 = vadd.f32 %v1207, %v2310
        %v2312 = vpop.f32.mrb[0].mxu0
        %v2313 = vadd.f32 %v1211, %v2312
        %2314 = vmatprep.mubr.bf16.mxu0 %v1019
        %2315 = vmatmul.mubr.bf16.gmra.mrb[0].mxu0 %v1018
        %v2316 = vpop.f32.mrb[0].mxu0
        %v2317 = vadd.f32 %v1207, %v2316
        %v2318 = vpop.f32.mrb[0].mxu0
        %v2319 = vadd.f32 %v1211, %v2318
        %v2320 = vpop.f32.mrb[0].mxu0
        %v2321 = vadd.f32 %v1207, %v2320
        %v2322 = vpop.f32.mrb[0].mxu0
        %v2323 = vadd.f32 %v1211, %v2322
        %2324 = vmatprep.mubr.bf16.mxu0 %v1023
        %2325 = vmatmul.mubr.bf16.gmra.mrb[0].mxu0 %v1022
        %v2326 = vpop.f32.mrb[0].mxu0
        %v2327 = vadd.f32 %v1207, %v2326
        %v2328 = vpop.f32.mrb[0].mxu0
        %v2329 = vadd.f32 %v1211, %v2328
        %v2330 = vpop.f32.mrb[0].mxu0
        %v2331 = vadd.f32 %v1207, %v2330
        %v2332 = vpop.f32.mrb[0].mxu0
        %v2333 = vadd.f32 %v1211, %v2332
        %2334 = vmatprep.mubr.bf16.mxu0 %v1027
        %2335 = vmatmul.mubr.bf16.gmra.mrb[0].mxu0 %v1026
        %v2336 = vpop.f32.mrb[0].mxu0
        %v2337 = vadd.f32 %v1207, %v2336
        %v2338 = vpop.f32.mrb[0].mxu0
        %v2339 = vadd.f32 %v1211, %v2338
        %v2340 = vpop.f32.mrb[0].mxu0
        %v2341 = vadd.f32 %v1207, %v2340
        %v2342 = vpop.f32.mrb[0].mxu0
        %v2343 = vadd.f32 %v1211, %v2342
        %2344 = vmatprep.mubr.bf16.mxu0 %v1031
        %2345 = vmatmul.mubr.bf16.gmra.mrb[0].mxu0 %v1030
        %v2346 = vpop.f32.mrb[0].mxu0
        %v2347 = vadd.f32 %v1207, %v2346
        %v2348 = vpop.f32.mrb[0].mxu0
        %v2349 = vadd.f32 %v1211, %v2348
        %v2350 = vpop.f32.mrb[0].mxu0
        %v2351 = vadd.f32 %v1207, %v2350
        %v2352 = vpop.f32.mrb[0].mxu0
        %v2353 = vadd.f32 %v1211, %v2352
        %2354 = vmatprep.mubr.bf16.mxu0 %v1035
        %2355 = vmatmul.mubr.bf16.gmra.mrb[0].mxu0 %v1034
        %v2356 = vpop.f32.mrb[0].mxu0
        %v2357 = vadd.f32 %v1207, %v2356
        %v2358 = vpop.f32.mrb[0].mxu0
        %v2359 = vadd.f32 %v1211, %v2358
        %v2360 = vpop.f32.mrb[0].mxu0
        %v2361 = vadd.f32 %v1207, %v2360
        %v2362 = vpop.f32.mrb[0].mxu0
        %v2363 = vadd.f32 %v1211, %v2362
        %2364 = vmatprep.mubr.bf16.mxu0 %v1039
        %2365 = vmatmul.mubr.bf16.gmra.mrb[0].mxu0 %v1038
        %v2366 = vpop.f32.mrb[0].mxu0
        %v2367 = vadd.f32 %v1207, %v2366
        %v2368 = vpop.f32.mrb[0].mxu0
        %v2369 = vadd.f32 %v1211, %v2368
        %v2370 = vpop.f32.mrb[0].mxu0
        %v2371 = vadd.f32 %v1207, %v2370
        %v2372 = vpop.f32.mrb[0].mxu0
        %v2373 = vadd.f32 %v1211, %v2372
        %2374 = vmatprep.mubr.bf16.mxu0 %v1043
        %2375 = vmatmul.mubr.bf16.gmra.mrb[0].mxu0 %v1042
        %v2376 = vpop.f32.mrb[0].mxu0
        %v2377 = vadd.f32 %v1207, %v2376
        %v2378 = vpop.f32.mrb[0].mxu0
        %v2379 = vadd.f32 %v1211, %v2378
        %v2380 = vpop.f32.mrb[0].mxu0
        %v2381 = vadd.f32 %v1207, %v2380
        %v2382 = vpop.f32.mrb[0].mxu0
        %v2383 = vadd.f32 %v1211, %v2382
        %2384 = vmatprep.mubr.bf16.mxu0 %v1047
        %2385 = vmatmul.mubr.bf16.gmra.mrb[0].mxu0 %v1046
        %v2386 = vpop.f32.mrb[0].mxu0
        %v2387 = vadd.f32 %v1207, %v2386
        %v2388 = vpop.f32.mrb[0].mxu0
        %v2389 = vadd.f32 %v1211, %v2388
        %v2390 = vpop.f32.mrb[0].mxu0
        %v2391 = vadd.f32 %v1207, %v2390
        %v2392 = vpop.f32.mrb[0].mxu0
        %v2393 = vadd.f32 %v1211, %v2392
        %2394 = vmatprep.mubr.bf16.mxu0 %v1051
        %2395 = vmatmul.mubr.bf16.gmra.mrb[0].mxu0 %v1050
        %v2396 = vpop.f32.mrb[0].mxu0
        %v2397 = vadd.f32 %v1207, %v2396
        %v2398 = vpop.f32.mrb[0].mxu0
        %v2399 = vadd.f32 %v1211, %v2398
        %v2400 = vpop.f32.mrb[0].mxu0
        %v2401 = vadd.f32 %v1207, %v2400
        %v2402 = vpop.f32.mrb[0].mxu0
        %v2403 = vadd.f32 %v1211, %v2402
        %2404 = vmatprep.mubr.bf16.mxu0 %v1055
        %2405 = vmatmul.mubr.bf16.gmra.mrb[0].mxu0 %v1054
        %v2406 = vpop.f32.mrb[0].mxu0
        %v2407 = vadd.f32 %v1207, %v2406
        %v2408 = vpop.f32.mrb[0].mxu0
        %v2409 = vadd.f32 %v1211, %v2408
        %v2410 = vpop.f32.mrb[0].mxu0
        %v2411 = vadd.f32 %v1207, %v2410
        %v2412 = vpop.f32.mrb[0].mxu0
        %v2413 = vadd.f32 %v1211, %v2412
        %2414 = vmatprep.mubr.bf16.mxu0 %v1059
        %2415 = vmatmul.mubr.bf16.gmra.mrb[0].mxu0 %v1058
        %v2416 = vpop.f32.mrb[0].mxu0
        %v2417 = vadd.f32 %v1207, %v2416
        %v2418 = vpop.f32.mrb[0].mxu0
        %v2419 = vadd.f32 %v1211, %v2418
        %v2420 = vpop.f32.mrb[0].mxu0
        %v2421 = vadd.f32 %v1207, %v2420
        %v2422 = vpop.f32.mrb[0].mxu0
        %v2423 = vadd.f32 %v1211, %v2422
        %2424 = vmatprep.mubr.bf16.mxu0 %v1063
        %2425 = vmatmul.mubr.bf16.gmra.mrb[0].mxu0 %v1062
        %v2426 = vpop.f32.mrb[0].mxu0
        %v2427 = vadd.f32 %v1207, %v2426
        %v2428 = vpop.f32.mrb[0].mxu0
        %v2429 = vadd.f32 %v1211, %v2428
        %v2430 = vpop.f32.mrb[0].mxu0
        %v2431 = vadd.f32 %v1207, %v2430
        %v2432 = vpop.f32.mrb[0].mxu0
        %v2433 = vadd.f32 %v1211, %v2432
        %2434 = vdwg.mxu0
        %2435 = vmatprep.subr.bf16.mxu0 %v1667
        %2436 = vmatpush1.bf16.msra.mxu0 %v1666
        %2437 = vmatprep.subr.bf16.mxu0 %v1671
        %2438 = vmatpush1.bf16.msra.mxu0 %v1670
        %2439 = vmatprep.subr.bf16.mxu0 %v1675
        %2440 = vmatpush1.bf16.msra.mxu0 %v1674
        %2441 = vmatprep.subr.bf16.mxu0 %v1679
        %2442 = vmatpush1.bf16.msra.mxu0 %v1678
        %2443 = vmatprep.subr.bf16.mxu0 %v1683
        %2444 = vmatpush1.bf16.msra.mxu0 %v1682
        %2445 = vmatprep.subr.bf16.mxu0 %v1687
        %2446 = vmatpush1.bf16.msra.mxu0 %v1686
        %2447 = vmatprep.subr.bf16.mxu0 %v1691
        %2448 = vmatpush1.bf16.msra.mxu0 %v1690
        %2449 = vmatprep.subr.bf16.mxu0 %v1695
        %2450 = vmatpush1.bf16.msra.mxu0 %v1694
        %2451 = vmatprep.subr.bf16.mxu0 %v1699
        %2452 = vmatpush1.bf16.msra.mxu0 %v1698
        %2453 = vmatprep.subr.bf16.mxu0 %v1703
        %2454 = vmatpush1.bf16.msra.mxu0 %v1702
        %2455 = vmatprep.subr.bf16.mxu0 %v1707
        %2456 = vmatpush1.bf16.msra.mxu0 %v1706
        %2457 = vmatprep.subr.bf16.mxu0 %v1711
        %2458 = vmatpush1.bf16.msra.mxu0 %v1710
        %2459 = vmatprep.subr.bf16.mxu0 %v1715
        %2460 = vmatpush1.bf16.msra.mxu0 %v1714
        %2461 = vmatprep.subr.bf16.mxu0 %v1719
        %2462 = vmatpush1.bf16.msra.mxu0 %v1718
        %2463 = vmatprep.subr.bf16.mxu0 %v1723
        %2464 = vmatpush1.bf16.msra.mxu0 %v1722
        %2465 = vmatprep.subr.bf16.mxu0 %v1727
        %2466 = vmatpush1.bf16.msra.mxu0 %v1726
        %2467 = vmatprep.mubr.bf16.mxu0 %v1005
        %2468 = vmatmul.mubr.bf16.gmra.mrb[0].mxu0 %v1004
        %v2469 = vpop.f32.mrb[0].mxu0
        %v2470 = vadd.f32 %v2277, %v2469
        %v2471 = vpop.f32.mrb[0].mxu0
        %v2472 = vadd.f32 %v2279, %v2471
        %v2473 = vpop.f32.mrb[0].mxu0
        %v2474 = vadd.f32 %v2281, %v2473
        %v2475 = vpop.f32.mrb[0].mxu0
        %v2476 = vadd.f32 %v2283, %v2475
        %2477 = vmatprep.mubr.bf16.mxu0 %v1009
        %2478 = vmatmul.mubr.bf16.gmra.mrb[0].mxu0 %v1008
        %v2479 = vpop.f32.mrb[0].mxu0
        %v2480 = vadd.f32 %v2287, %v2479
        %v2481 = vpop.f32.mrb[0].mxu0
        %v2482 = vadd.f32 %v2289, %v2481
        %v2483 = vpop.f32.mrb[0].mxu0
        %v2484 = vadd.f32 %v2291, %v2483
        %v2485 = vpop.f32.mrb[0].mxu0
        %v2486 = vadd.f32 %v2293, %v2485
        %2487 = vmatprep.mubr.bf16.mxu0 %v1013
        %2488 = vmatmul.mubr.bf16.gmra.mrb[0].mxu0 %v1012
        %v2489 = vpop.f32.mrb[0].mxu0
        %v2490 = vadd.f32 %v2297, %v2489
        %v2491 = vpop.f32.mrb[0].mxu0
        %v2492 = vadd.f32 %v2299, %v2491
        %v2493 = vpop.f32.mrb[0].mxu0
        %v2494 = vadd.f32 %v2301, %v2493
        %v2495 = vpop.f32.mrb[0].mxu0
        %v2496 = vadd.f32 %v2303, %v2495
        %2497 = vmatprep.mubr.bf16.mxu0 %v1017
        %2498 = vmatmul.mubr.bf16.gmra.mrb[0].mxu0 %v1016
        %v2499 = vpop.f32.mrb[0].mxu0
        %v2500 = vadd.f32 %v2307, %v2499
        %v2501 = vpop.f32.mrb[0].mxu0
        %v2502 = vadd.f32 %v2309, %v2501
        %v2503 = vpop.f32.mrb[0].mxu0
        %v2504 = vadd.f32 %v2311, %v2503
        %v2505 = vpop.f32.mrb[0].mxu0
        %v2506 = vadd.f32 %v2313, %v2505
        %2507 = vmatprep.mubr.bf16.mxu0 %v1021
        %2508 = vmatmul.mubr.bf16.gmra.mrb[0].mxu0 %v1020
        %v2509 = vpop.f32.mrb[0].mxu0
        %v2510 = vadd.f32 %v2317, %v2509
        %v2511 = vpop.f32.mrb[0].mxu0
        %v2512 = vadd.f32 %v2319, %v2511
        %v2513 = vpop.f32.mrb[0].mxu0
        %v2514 = vadd.f32 %v2321, %v2513
        %v2515 = vpop.f32.mrb[0].mxu0
        %v2516 = vadd.f32 %v2323, %v2515
        %2517 = vmatprep.mubr.bf16.mxu0 %v1025
        %2518 = vmatmul.mubr.bf16.gmra.mrb[0].mxu0 %v1024
        %v2519 = vpop.f32.mrb[0].mxu0
        %v2520 = vadd.f32 %v2327, %v2519
        %v2521 = vpop.f32.mrb[0].mxu0
        %v2522 = vadd.f32 %v2329, %v2521
        %v2523 = vpop.f32.mrb[0].mxu0
        %v2524 = vadd.f32 %v2331, %v2523
        %v2525 = vpop.f32.mrb[0].mxu0
        %v2526 = vadd.f32 %v2333, %v2525
        %2527 = vmatprep.mubr.bf16.mxu0 %v1029
        %2528 = vmatmul.mubr.bf16.gmra.mrb[0].mxu0 %v1028
        %v2529 = vpop.f32.mrb[0].mxu0
        %v2530 = vadd.f32 %v2337, %v2529
        %v2531 = vpop.f32.mrb[0].mxu0
        %v2532 = vadd.f32 %v2339, %v2531
        %v2533 = vpop.f32.mrb[0].mxu0
        %v2534 = vadd.f32 %v2341, %v2533
        %v2535 = vpop.f32.mrb[0].mxu0
        %v2536 = vadd.f32 %v2343, %v2535
        %2537 = vmatprep.mubr.bf16.mxu0 %v1033
        %2538 = vmatmul.mubr.bf16.gmra.mrb[0].mxu0 %v1032
        %v2539 = vpop.f32.mrb[0].mxu0
        %v2540 = vadd.f32 %v2347, %v2539
        %v2541 = vpop.f32.mrb[0].mxu0
        %v2542 = vadd.f32 %v2349, %v2541
        %v2543 = vpop.f32.mrb[0].mxu0
        %v2544 = vadd.f32 %v2351, %v2543
        %v2545 = vpop.f32.mrb[0].mxu0
        %v2546 = vadd.f32 %v2353, %v2545
        %2547 = vmatprep.mubr.bf16.mxu0 %v1037
        %2548 = vmatmul.mubr.bf16.gmra.mrb[0].mxu0 %v1036
        %v2549 = vpop.f32.mrb[0].mxu0
        %v2550 = vadd.f32 %v2357, %v2549
        %v2551 = vpop.f32.mrb[0].mxu0
        %v2552 = vadd.f32 %v2359, %v2551
        %v2553 = vpop.f32.mrb[0].mxu0
        %v2554 = vadd.f32 %v2361, %v2553
        %v2555 = vpop.f32.mrb[0].mxu0
        %v2556 = vadd.f32 %v2363, %v2555
        %2557 = vmatprep.mubr.bf16.mxu0 %v1041
        %2558 = vmatmul.mubr.bf16.gmra.mrb[0].mxu0 %v1040
        %v2559 = vpop.f32.mrb[0].mxu0
        %v2560 = vadd.f32 %v2367, %v2559
        %v2561 = vpop.f32.mrb[0].mxu0
        %v2562 = vadd.f32 %v2369, %v2561
        %v2563 = vpop.f32.mrb[0].mxu0
        %v2564 = vadd.f32 %v2371, %v2563
        %v2565 = vpop.f32.mrb[0].mxu0
        %v2566 = vadd.f32 %v2373, %v2565
        %2567 = vmatprep.mubr.bf16.mxu0 %v1045
        %2568 = vmatmul.mubr.bf16.gmra.mrb[0].mxu0 %v1044
        %v2569 = vpop.f32.mrb[0].mxu0
        %v2570 = vadd.f32 %v2377, %v2569
        %v2571 = vpop.f32.mrb[0].mxu0
        %v2572 = vadd.f32 %v2379, %v2571
        %v2573 = vpop.f32.mrb[0].mxu0
        %v2574 = vadd.f32 %v2381, %v2573
        %v2575 = vpop.f32.mrb[0].mxu0
        %v2576 = vadd.f32 %v2383, %v2575
        %2577 = vmatprep.mubr.bf16.mxu0 %v1049
        %2578 = vmatmul.mubr.bf16.gmra.mrb[0].mxu0 %v1048
        %v2579 = vpop.f32.mrb[0].mxu0
        %v2580 = vadd.f32 %v2387, %v2579
        %v2581 = vpop.f32.mrb[0].mxu0
        %v2582 = vadd.f32 %v2389, %v2581
        %v2583 = vpop.f32.mrb[0].mxu0
        %v2584 = vadd.f32 %v2391, %v2583
        %v2585 = vpop.f32.mrb[0].mxu0
        %v2586 = vadd.f32 %v2393, %v2585
        %2587 = vmatprep.mubr.bf16.mxu0 %v1053
        %2588 = vmatmul.mubr.bf16.gmra.mrb[0].mxu0 %v1052
        %v2589 = vpop.f32.mrb[0].mxu0
        %v2590 = vadd.f32 %v2397, %v2589
        %v2591 = vpop.f32.mrb[0].mxu0
        %v2592 = vadd.f32 %v2399, %v2591
        %v2593 = vpop.f32.mrb[0].mxu0
        %v2594 = vadd.f32 %v2401, %v2593
        %v2595 = vpop.f32.mrb[0].mxu0
        %v2596 = vadd.f32 %v2403, %v2595
        %2597 = vmatprep.mubr.bf16.mxu0 %v1057
        %2598 = vmatmul.mubr.bf16.gmra.mrb[0].mxu0 %v1056
        %v2599 = vpop.f32.mrb[0].mxu0
        %v2600 = vadd.f32 %v2407, %v2599
        %v2601 = vpop.f32.mrb[0].mxu0
        %v2602 = vadd.f32 %v2409, %v2601
        %v2603 = vpop.f32.mrb[0].mxu0
        %v2604 = vadd.f32 %v2411, %v2603
        %v2605 = vpop.f32.mrb[0].mxu0
        %v2606 = vadd.f32 %v2413, %v2605
        %2607 = vmatprep.mubr.bf16.mxu0 %v1061
        %2608 = vmatmul.mubr.bf16.gmra.mrb[0].mxu0 %v1060
        %v2609 = vpop.f32.mrb[0].mxu0
        %v2610 = vadd.f32 %v2417, %v2609
        %v2611 = vpop.f32.mrb[0].mxu0
        %v2612 = vadd.f32 %v2419, %v2611
        %v2613 = vpop.f32.mrb[0].mxu0
        %v2614 = vadd.f32 %v2421, %v2613
        %v2615 = vpop.f32.mrb[0].mxu0
        %v2616 = vadd.f32 %v2423, %v2615
        %2617 = vmatprep.mubr.bf16.mxu0 %v1065
        %2618 = vmatmul.mubr.bf16.gmra.mrb[0].mxu0 %v1064
        %v2619 = vpop.f32.mrb[0].mxu0
        %v2620 = vadd.f32 %v2427, %v2619
        %v2621 = vpop.f32.mrb[0].mxu0
        %v2622 = vadd.f32 %v2429, %v2621
        %v2623 = vpop.f32.mrb[0].mxu0
        %v2624 = vadd.f32 %v2431, %v2623
        %v2625 = vpop.f32.mrb[0].mxu0
        %v2626 = vadd.f32 %v2433, %v2625
        %2627 = vdwg.mxu0
        %v2628 = vmax.f32 %v2084, 0.0
        %v2629 = vmax.f32 %v2086, 0.0
        %v2630 = vmax.f32 %v2470, 0.0
        %v2631 = vmax.f32 %v2472, 0.0
        %v2632 = vmax.f32 %v2088, 0.0
        %v2633 = vmax.f32 %v2090, 0.0
        %v2634 = vmax.f32 %v2474, 0.0
        %v2635 = vmax.f32 %v2476, 0.0
        %v2636 = vmax.f32 %v2094, 0.0
        %v2637 = vmax.f32 %v2096, 0.0
        %v2638 = vmax.f32 %v2480, 0.0
        %v2639 = vmax.f32 %v2482, 0.0
        %v2640 = vmax.f32 %v2098, 0.0
        %v2641 = vmax.f32 %v2100, 0.0
        %v2642 = vmax.f32 %v2484, 0.0
        %v2643 = vmax.f32 %v2486, 0.0
        %v2644 = vmax.f32 %v2104, 0.0
        %v2645 = vmax.f32 %v2106, 0.0
        %v2646 = vmax.f32 %v2490, 0.0
        %v2647 = vmax.f32 %v2492, 0.0
        %v2648 = vmax.f32 %v2108, 0.0
        %v2649 = vmax.f32 %v2110, 0.0
        %v2650 = vmax.f32 %v2494, 0.0
        %v2651 = vmax.f32 %v2496, 0.0
        %v2652 = vmax.f32 %v2114, 0.0
        %v2653 = vmax.f32 %v2116, 0.0
        %v2654 = vmax.f32 %v2500, 0.0
        %v2655 = vmax.f32 %v2502, 0.0
        %v2656 = vmax.f32 %v2118, 0.0
        %v2657 = vmax.f32 %v2120, 0.0
        %v2658 = vmax.f32 %v2504, 0.0
        %v2659 = vmax.f32 %v2506, 0.0
        %v2660 = vmax.f32 %v2124, 0.0
        %v2661 = vmax.f32 %v2126, 0.0
        %v2662 = vmax.f32 %v2510, 0.0
        %v2663 = vmax.f32 %v2512, 0.0
        %v2664 = vmax.f32 %v2128, 0.0
        %v2665 = vmax.f32 %v2130, 0.0
        %v2666 = vmax.f32 %v2514, 0.0
        %v2667 = vmax.f32 %v2516, 0.0
        %v2668 = vmax.f32 %v2134, 0.0
        %v2669 = vmax.f32 %v2136, 0.0
        %v2670 = vmax.f32 %v2520, 0.0
        %v2671 = vmax.f32 %v2522, 0.0
        %v2672 = vmax.f32 %v2138, 0.0
        %v2673 = vmax.f32 %v2140, 0.0
        %v2674 = vmax.f32 %v2524, 0.0
        %v2675 = vmax.f32 %v2526, 0.0
        %v2676 = vmax.f32 %v2144, 0.0
        %v2677 = vmax.f32 %v2146, 0.0
        %v2678 = vmax.f32 %v2530, 0.0
        %v2679 = vmax.f32 %v2532, 0.0
        %v2680 = vmax.f32 %v2148, 0.0
        %v2681 = vmax.f32 %v2150, 0.0
        %v2682 = vmax.f32 %v2534, 0.0
        %v2683 = vmax.f32 %v2536, 0.0
        %v2684 = vmax.f32 %v2154, 0.0
        %v2685 = vmax.f32 %v2156, 0.0
        %v2686 = vmax.f32 %v2540, 0.0
        %v2687 = vmax.f32 %v2542, 0.0
        %v2688 = vmax.f32 %v2158, 0.0
        %v2689 = vmax.f32 %v2160, 0.0
        %v2690 = vmax.f32 %v2544, 0.0
        %v2691 = vmax.f32 %v2546, 0.0
        %v2692 = vmax.f32 %v2164, 0.0
        %v2693 = vmax.f32 %v2166, 0.0
        %v2694 = vmax.f32 %v2550, 0.0
        %v2695 = vmax.f32 %v2552, 0.0
        %v2696 = vmax.f32 %v2168, 0.0
        %v2697 = vmax.f32 %v2170, 0.0
        %v2698 = vmax.f32 %v2554, 0.0
        %v2699 = vmax.f32 %v2556, 0.0
        %v2700 = vmax.f32 %v2174, 0.0
        %v2701 = vmax.f32 %v2176, 0.0
        %v2702 = vmax.f32 %v2560, 0.0
        %v2703 = vmax.f32 %v2562, 0.0
        %v2704 = vmax.f32 %v2178, 0.0
        %v2705 = vmax.f32 %v2180, 0.0
        %v2706 = vmax.f32 %v2564, 0.0
        %v2707 = vmax.f32 %v2566, 0.0
        %v2708 = vmax.f32 %v2184, 0.0
        %v2709 = vmax.f32 %v2186, 0.0
        %v2710 = vmax.f32 %v2570, 0.0
        %v2711 = vmax.f32 %v2572, 0.0
        %v2712 = vmax.f32 %v2188, 0.0
        %v2713 = vmax.f32 %v2190, 0.0
        %v2714 = vmax.f32 %v2574, 0.0
        %v2715 = vmax.f32 %v2576, 0.0
        %v2716 = vmax.f32 %v2194, 0.0
        %v2717 = vmax.f32 %v2196, 0.0
        %v2718 = vmax.f32 %v2580, 0.0
        %v2719 = vmax.f32 %v2582, 0.0
        %v2720 = vmax.f32 %v2198, 0.0
        %v2721 = vmax.f32 %v2200, 0.0
        %v2722 = vmax.f32 %v2584, 0.0
        %v2723 = vmax.f32 %v2586, 0.0
        %v2724 = vmax.f32 %v2204, 0.0
        %v2725 = vmax.f32 %v2206, 0.0
        %v2726 = vmax.f32 %v2590, 0.0
        %v2727 = vmax.f32 %v2592, 0.0
        %v2728 = vmax.f32 %v2208, 0.0
        %v2729 = vmax.f32 %v2210, 0.0
        %v2730 = vmax.f32 %v2594, 0.0
        %v2731 = vmax.f32 %v2596, 0.0
        %v2732 = vmax.f32 %v2214, 0.0
        %v2733 = vmax.f32 %v2216, 0.0
        %v2734 = vmax.f32 %v2600, 0.0
        %v2735 = vmax.f32 %v2602, 0.0
        %v2736 = vmax.f32 %v2218, 0.0
        %v2737 = vmax.f32 %v2220, 0.0
        %v2738 = vmax.f32 %v2604, 0.0
        %v2739 = vmax.f32 %v2606, 0.0
        %v2740 = vmax.f32 %v2224, 0.0
        %v2741 = vmax.f32 %v2226, 0.0
        %v2742 = vmax.f32 %v2610, 0.0
        %v2743 = vmax.f32 %v2612, 0.0
        %v2744 = vmax.f32 %v2228, 0.0
        %v2745 = vmax.f32 %v2230, 0.0
        %v2746 = vmax.f32 %v2614, 0.0
        %v2747 = vmax.f32 %v2616, 0.0
        %v2748 = vmax.f32 %v2234, 0.0
        %v2749 = vmax.f32 %v2236, 0.0
        %v2750 = vmax.f32 %v2620, 0.0
        %v2751 = vmax.f32 %v2622, 0.0
        %v2752 = vmax.f32 %v2238, 0.0
        %v2753 = vmax.f32 %v2240, 0.0
        %v2754 = vmax.f32 %v2624, 0.0
        %v2755 = vmax.f32 %v2626, 0.0
        %v2756 = vpack.c.bf16 %v2632, %v2628
        %v2757 = vpack.c.bf16 %v2633, %v2629
        %v2758 = vpack.c.bf16 %v2634, %v2630
        %v2759 = vpack.c.bf16 %v2635, %v2631
        %v2760 = vpack.c.bf16 %v2640, %v2636
        %v2761 = vpack.c.bf16 %v2641, %v2637
        %v2762 = vpack.c.bf16 %v2642, %v2638
        %v2763 = vpack.c.bf16 %v2643, %v2639
        %v2764 = vpack.c.bf16 %v2648, %v2644
        %v2765 = vpack.c.bf16 %v2649, %v2645
        %v2766 = vpack.c.bf16 %v2650, %v2646
        %v2767 = vpack.c.bf16 %v2651, %v2647
        %v2768 = vpack.c.bf16 %v2656, %v2652
        %v2769 = vpack.c.bf16 %v2657, %v2653
        %v2770 = vpack.c.bf16 %v2658, %v2654
        %v2771 = vpack.c.bf16 %v2659, %v2655
        %v2772 = vpack.c.bf16 %v2664, %v2660
        %v2773 = vpack.c.bf16 %v2665, %v2661
        %v2774 = vpack.c.bf16 %v2666, %v2662
        %v2775 = vpack.c.bf16 %v2667, %v2663
        %v2776 = vpack.c.bf16 %v2672, %v2668
        %v2777 = vpack.c.bf16 %v2673, %v2669
        %v2778 = vpack.c.bf16 %v2674, %v2670
        %v2779 = vpack.c.bf16 %v2675, %v2671
        %v2780 = vpack.c.bf16 %v2680, %v2676
        %v2781 = vpack.c.bf16 %v2681, %v2677
        %v2782 = vpack.c.bf16 %v2682, %v2678
        %v2783 = vpack.c.bf16 %v2683, %v2679
        %v2784 = vpack.c.bf16 %v2688, %v2684
        %v2785 = vpack.c.bf16 %v2689, %v2685
        %v2786 = vpack.c.bf16 %v2690, %v2686
        %v2787 = vpack.c.bf16 %v2691, %v2687
        %v2788 = vpack.c.bf16 %v2696, %v2692
        %v2789 = vpack.c.bf16 %v2697, %v2693
        %v2790 = vpack.c.bf16 %v2698, %v2694
        %v2791 = vpack.c.bf16 %v2699, %v2695
        %v2792 = vpack.c.bf16 %v2704, %v2700
        %v2793 = vpack.c.bf16 %v2705, %v2701
        %v2794 = vpack.c.bf16 %v2706, %v2702
        %v2795 = vpack.c.bf16 %v2707, %v2703
        %v2796 = vpack.c.bf16 %v2712, %v2708
        %v2797 = vpack.c.bf16 %v2713, %v2709
        %v2798 = vpack.c.bf16 %v2714, %v2710
        %v2799 = vpack.c.bf16 %v2715, %v2711
        %v2800 = vpack.c.bf16 %v2720, %v2716
        %v2801 = vpack.c.bf16 %v2721, %v2717
        %v2802 = vpack.c.bf16 %v2722, %v2718
        %v2803 = vpack.c.bf16 %v2723, %v2719
        %v2804 = vpack.c.bf16 %v2728, %v2724
        %v2805 = vpack.c.bf16 %v2729, %v2725
        %v2806 = vpack.c.bf16 %v2730, %v2726
        %v2807 = vpack.c.bf16 %v2731, %v2727
        %v2808 = vpack.c.bf16 %v2736, %v2732
        %v2809 = vpack.c.bf16 %v2737, %v2733
        %v2810 = vpack.c.bf16 %v2738, %v2734
        %v2811 = vpack.c.bf16 %v2739, %v2735
        %v2812 = vpack.c.bf16 %v2744, %v2740
        %v2813 = vpack.c.bf16 %v2745, %v2741
        %v2814 = vpack.c.bf16 %v2746, %v2742
        %v2815 = vpack.c.bf16 %v2747, %v2743
        %v2816 = vpack.c.bf16 %v2752, %v2748
        %v2817 = vpack.c.bf16 %v2753, %v2749
        %v2818 = vpack.c.bf16 %v2754, %v2750
        %v2819 = vpack.c.bf16 %v2755, %v2751
        %v2820 = vld [vmem:[%s5] sm:$0xf]
        %v2821 = vld [vmem:[%s5 + $0x4] sm:$0xf]
        %v2822 = vld [vmem:[%s5 + $0x8] sm:$0xf]
        %v2823 = vld [vmem:[%s5 + $0xc] sm:$0xf]
        %v2824 = vld [vmem:[%s5 + $0x10] sm:$0xf]
        %v2825 = vld [vmem:[%s5 + $0x14] sm:$0xf]
        %v2826 = vld [vmem:[%s5 + $0x18] sm:$0xf]
        %v2827 = vld [vmem:[%s5 + $0x1c] sm:$0xf]
        %v2828 = vld [vmem:[%s5 + $0x20] sm:$0xf]
        %v2829 = vld [vmem:[%s5 + $0x24] sm:$0xf]
        %v2830 = vld [vmem:[%s5 + $0x28] sm:$0xf]
        %v2831 = vld [vmem:[%s5 + $0x2c] sm:$0xf]
        %v2832 = vld [vmem:[%s5 + $0x30] sm:$0xf]
        %v2833 = vld [vmem:[%s5 + $0x34] sm:$0xf]
        %v2834 = vld [vmem:[%s5 + $0x38] sm:$0xf]
        %v2835 = vld [vmem:[%s5 + $0x3c] sm:$0xf]
        %v2836 = vld [vmem:[%s5 + $0x40] sm:$0xf]
        %v2837 = vld [vmem:[%s5 + $0x44] sm:$0xf]
        %v2838 = vld [vmem:[%s5 + $0x48] sm:$0xf]
        %v2839 = vld [vmem:[%s5 + $0x4c] sm:$0xf]
        %v2840 = vld [vmem:[%s5 + $0x50] sm:$0xf]
        %v2841 = vld [vmem:[%s5 + $0x54] sm:$0xf]
        %v2842 = vld [vmem:[%s5 + $0x58] sm:$0xf]
        %v2843 = vld [vmem:[%s5 + $0x5c] sm:$0xf]
        %v2844 = vld [vmem:[%s5 + $0x60] sm:$0xf]
        %v2845 = vld [vmem:[%s5 + $0x64] sm:$0xf]
        %v2846 = vld [vmem:[%s5 + $0x68] sm:$0xf]
        %v2847 = vld [vmem:[%s5 + $0x6c] sm:$0xf]
        %v2848 = vld [vmem:[%s5 + $0x70] sm:$0xf]
        %v2849 = vld [vmem:[%s5 + $0x74] sm:$0xf]
        %v2850 = vld [vmem:[%s5 + $0x78] sm:$0xf]
        %v2851 = vld [vmem:[%s5 + $0x7c] sm:$0xf]
        %v2852 = vld [vmem:[%s5 + $0x80] sm:$0xf]
        %v2853 = vld [vmem:[%s5 + $0x84] sm:$0xf]
        %v2854 = vld [vmem:[%s5 + $0x88] sm:$0xf]
        %v2855 = vld [vmem:[%s5 + $0x8c] sm:$0xf]
        %v2856 = vld [vmem:[%s5 + $0x90] sm:$0xf]
        %v2857 = vld [vmem:[%s5 + $0x94] sm:$0xf]
        %v2858 = vld [vmem:[%s5 + $0x98] sm:$0xf]
        %v2859 = vld [vmem:[%s5 + $0x9c] sm:$0xf]
        %v2860 = vld [vmem:[%s5 + $0xa0] sm:$0xf]
        %v2861 = vld [vmem:[%s5 + $0xa4] sm:$0xf]
        %v2862 = vld [vmem:[%s5 + $0xa8] sm:$0xf]
        %v2863 = vld [vmem:[%s5 + $0xac] sm:$0xf]
        %v2864 = vld [vmem:[%s5 + $0xb0] sm:$0xf]
        %v2865 = vld [vmem:[%s5 + $0xb4] sm:$0xf]
        %v2866 = vld [vmem:[%s5 + $0xb8] sm:$0xf]
        %v2867 = vld [vmem:[%s5 + $0xbc] sm:$0xf]
        %v2868 = vld [vmem:[%s5 + $0xc0] sm:$0xf]
        %v2869 = vld [vmem:[%s5 + $0xc4] sm:$0xf]
        %v2870 = vld [vmem:[%s5 + $0xc8] sm:$0xf]
        %v2871 = vld [vmem:[%s5 + $0xcc] sm:$0xf]
        %v2872 = vld [vmem:[%s5 + $0xd0] sm:$0xf]
        %v2873 = vld [vmem:[%s5 + $0xd4] sm:$0xf]
        %v2874 = vld [vmem:[%s5 + $0xd8] sm:$0xf]
        %v2875 = vld [vmem:[%s5 + $0xdc] sm:$0xf]
        %v2876 = vld [vmem:[%s5 + $0xe0] sm:$0xf]
        %v2877 = vld [vmem:[%s5 + $0xe4] sm:$0xf]
        %v2878 = vld [vmem:[%s5 + $0xe8] sm:$0xf]
        %v2879 = vld [vmem:[%s5 + $0xec] sm:$0xf]
        %v2880 = vld [vmem:[%s5 + $0xf0] sm:$0xf]
        %v2881 = vld [vmem:[%s5 + $0xf4] sm:$0xf]
        %v2882 = vld [vmem:[%s5 + $0xf8] sm:$0xf]
        %v2883 = vld [vmem:[%s5 + $0xfc] sm:$0xf]
        %v2884 = vld [vmem:[%s6] sm:$0x1]
        %v2886 = vlaneseq
        %v2887 = vshrl.u32 %v2886, 7
        %v2888 = vsub.s32 0, %v2887
        %v2889 = vrot.slane %v2884, %v2888
        %v2955 = vunpack.c.l.b16 %v2820
        %v2956 = vunpack.c.l.b16 %v2821
        %v2957 = vunpack.c.l.b16 %v2822
        %v2958 = vunpack.c.l.b16 %v2823
        %v2959 = vunpack.c.l.b16 %v2824
        %v2960 = vunpack.c.l.b16 %v2825
        %v2961 = vunpack.c.l.b16 %v2826
        %v2962 = vunpack.c.l.b16 %v2827
        %v2963 = vunpack.c.l.b16 %v2828
        %v2964 = vunpack.c.l.b16 %v2829
        %v2965 = vunpack.c.l.b16 %v2830
        %v2966 = vunpack.c.l.b16 %v2831
        %v2967 = vunpack.c.l.b16 %v2832
        %v2968 = vunpack.c.l.b16 %v2833
        %v2969 = vunpack.c.l.b16 %v2834
        %v2970 = vunpack.c.l.b16 %v2835
        %v2971 = vunpack.c.l.b16 %v2836
        %v2972 = vunpack.c.l.b16 %v2837
        %v2973 = vunpack.c.l.b16 %v2838
        %v2974 = vunpack.c.l.b16 %v2839
        %v2975 = vunpack.c.l.b16 %v2840
        %v2976 = vunpack.c.l.b16 %v2841
        %v2977 = vunpack.c.l.b16 %v2842
        %v2978 = vunpack.c.l.b16 %v2843
        %v2979 = vunpack.c.l.b16 %v2844
        %v2980 = vunpack.c.l.b16 %v2845
        %v2981 = vunpack.c.l.b16 %v2846
        %v2982 = vunpack.c.l.b16 %v2847
        %v2983 = vunpack.c.l.b16 %v2848
        %v2984 = vunpack.c.l.b16 %v2849
        %v2985 = vunpack.c.l.b16 %v2850
        %v2986 = vunpack.c.l.b16 %v2851
        %v2987 = vunpack.c.l.b16 %v2852
        %v2988 = vunpack.c.l.b16 %v2853
        %v2989 = vunpack.c.l.b16 %v2854
        %v2990 = vunpack.c.l.b16 %v2855
        %v2991 = vunpack.c.l.b16 %v2856
        %v2992 = vunpack.c.l.b16 %v2857
        %v2993 = vunpack.c.l.b16 %v2858
        %v2994 = vunpack.c.l.b16 %v2859
        %v2995 = vunpack.c.l.b16 %v2860
        %v2996 = vunpack.c.l.b16 %v2861
        %v2997 = vunpack.c.l.b16 %v2862
        %v2998 = vunpack.c.l.b16 %v2863
        %v2999 = vunpack.c.l.b16 %v2864
        %v3000 = vunpack.c.l.b16 %v2865
        %v3001 = vunpack.c.l.b16 %v2866
        %v3002 = vunpack.c.l.b16 %v2867
        %v3003 = vunpack.c.l.b16 %v2868
        %v3004 = vunpack.c.l.b16 %v2869
        %v3005 = vunpack.c.l.b16 %v2870
        %v3006 = vunpack.c.l.b16 %v2871
        %v3007 = vunpack.c.l.b16 %v2872
        %v3008 = vunpack.c.l.b16 %v2873
        %v3009 = vunpack.c.l.b16 %v2874
        %v3010 = vunpack.c.l.b16 %v2875
        %v3011 = vunpack.c.l.b16 %v2876
        %v3012 = vunpack.c.l.b16 %v2877
        %v3013 = vunpack.c.l.b16 %v2878
        %v3014 = vunpack.c.l.b16 %v2879
        %v3015 = vunpack.c.l.b16 %v2880
        %v3016 = vunpack.c.l.b16 %v2881
        %v3017 = vunpack.c.l.b16 %v2882
        %v3018 = vunpack.c.l.b16 %v2883
        %v3019 = vpack.c.b16 %v2956, %v2955
        %v3020 = vpack.c.b16 %v2958, %v2957
        %v3021 = vpack.c.b16 %v2960, %v2959
        %v3022 = vpack.c.b16 %v2962, %v2961
        %v3023 = vpack.c.b16 %v2964, %v2963
        %v3024 = vpack.c.b16 %v2966, %v2965
        %v3025 = vpack.c.b16 %v2968, %v2967
        %v3026 = vpack.c.b16 %v2970, %v2969
        %v3027 = vpack.c.b16 %v2972, %v2971
        %v3028 = vpack.c.b16 %v2974, %v2973
        %v3029 = vpack.c.b16 %v2976, %v2975
        %v3030 = vpack.c.b16 %v2978, %v2977
        %v3031 = vpack.c.b16 %v2980, %v2979
        %v3032 = vpack.c.b16 %v2982, %v2981
        %v3033 = vpack.c.b16 %v2984, %v2983
        %v3034 = vpack.c.b16 %v2986, %v2985
        %v3035 = vpack.c.b16 %v2988, %v2987
        %v3036 = vpack.c.b16 %v2990, %v2989
        %v3037 = vpack.c.b16 %v2992, %v2991
        %v3038 = vpack.c.b16 %v2994, %v2993
        %v3039 = vpack.c.b16 %v2996, %v2995
        %v3040 = vpack.c.b16 %v2998, %v2997
        %v3041 = vpack.c.b16 %v3000, %v2999
        %v3042 = vpack.c.b16 %v3002, %v3001
        %v3043 = vpack.c.b16 %v3004, %v3003
        %v3044 = vpack.c.b16 %v3006, %v3005
        %v3045 = vpack.c.b16 %v3008, %v3007
        %v3046 = vpack.c.b16 %v3010, %v3009
        %v3047 = vpack.c.b16 %v3012, %v3011
        %v3048 = vpack.c.b16 %v3014, %v3013
        %v3049 = vpack.c.b16 %v3016, %v3015
        %v3050 = vpack.c.b16 %v3018, %v3017
        %3083 = vmatprep.subr.bf16.mxu0 0
        %3084 = vmatpush1.bf16.msra.mxu0 %v3019
        %3085 = vmatprep.subr.bf16.mxu0 0
        %3086 = vmatpush1.bf16.msra.mxu0 %v3020
        %3087 = vmatprep.subr.bf16.mxu0 0
        %3088 = vmatpush1.bf16.msra.mxu0 %v3021
        %3089 = vmatprep.subr.bf16.mxu0 0
        %3090 = vmatpush1.bf16.msra.mxu0 %v3022
        %3091 = vmatprep.subr.bf16.mxu0 0
        %3092 = vmatpush1.bf16.msra.mxu0 %v3023
        %3093 = vmatprep.subr.bf16.mxu0 0
        %3094 = vmatpush1.bf16.msra.mxu0 %v3024
        %3095 = vmatprep.subr.bf16.mxu0 0
        %3096 = vmatpush1.bf16.msra.mxu0 %v3025
        %3097 = vmatprep.subr.bf16.mxu0 0
        %3098 = vmatpush1.bf16.msra.mxu0 %v3026
        %3099 = vmatprep.subr.bf16.mxu0 0
        %3100 = vmatpush1.bf16.msra.mxu0 %v3027
        %3101 = vmatprep.subr.bf16.mxu0 0
        %3102 = vmatpush1.bf16.msra.mxu0 %v3028
        %3103 = vmatprep.subr.bf16.mxu0 0
        %3104 = vmatpush1.bf16.msra.mxu0 %v3029
        %3105 = vmatprep.subr.bf16.mxu0 0
        %3106 = vmatpush1.bf16.msra.mxu0 %v3030
        %3107 = vmatprep.subr.bf16.mxu0 0
        %3108 = vmatpush1.bf16.msra.mxu0 %v3031
        %3109 = vmatprep.subr.bf16.mxu0 0
        %3110 = vmatpush1.bf16.msra.mxu0 %v3032
        %3111 = vmatprep.subr.bf16.mxu0 0
        %3112 = vmatpush1.bf16.msra.mxu0 %v3033
        %3113 = vmatprep.subr.bf16.mxu0 0
        %3114 = vmatpush1.bf16.msra.mxu0 %v3034
        %3115 = vmatprep.mubr.bf16.mxu0 %v2757
        %3116 = vmatmul.mubr.bf16.gmra.mrb[0].mxu0 %v2756
        %v3117 = vpop.f32.mrb[0].mxu0
        %v3118 = vadd.f32 %v2889, %v3117
        %v3119 = vpop.f32.mrb[0].mxu0
        %v3120 = vpop.f32.mrb[0].mxu0
        %v3121 = vadd.f32 %v2889, %v3120
        %v3122 = vpop.f32.mrb[0].mxu0
        %3123 = vmatprep.mubr.bf16.mxu0 %v2761
        %3124 = vmatmul.mubr.bf16.gmra.mrb[0].mxu0 %v2760
        %v3125 = vpop.f32.mrb[0].mxu0
        %v3126 = vadd.f32 %v2889, %v3125
        %v3127 = vpop.f32.mrb[0].mxu0
        %v3128 = vpop.f32.mrb[0].mxu0
        %v3129 = vadd.f32 %v2889, %v3128
        %v3130 = vpop.f32.mrb[0].mxu0
        %3131 = vmatprep.mubr.bf16.mxu0 %v2765
        %3132 = vmatmul.mubr.bf16.gmra.mrb[0].mxu0 %v2764
        %v3133 = vpop.f32.mrb[0].mxu0
        %v3134 = vadd.f32 %v2889, %v3133
        %v3135 = vpop.f32.mrb[0].mxu0
        %v3136 = vpop.f32.mrb[0].mxu0
        %v3137 = vadd.f32 %v2889, %v3136
        %v3138 = vpop.f32.mrb[0].mxu0
        %3139 = vmatprep.mubr.bf16.mxu0 %v2769
        %3140 = vmatmul.mubr.bf16.gmra.mrb[0].mxu0 %v2768
        %v3141 = vpop.f32.mrb[0].mxu0
        %v3142 = vadd.f32 %v2889, %v3141
        %v3143 = vpop.f32.mrb[0].mxu0
        %v3144 = vpop.f32.mrb[0].mxu0
        %v3145 = vadd.f32 %v2889, %v3144
        %v3146 = vpop.f32.mrb[0].mxu0
        %3147 = vmatprep.mubr.bf16.mxu0 %v2773
        %3148 = vmatmul.mubr.bf16.gmra.mrb[0].mxu0 %v2772
        %v3149 = vpop.f32.mrb[0].mxu0
        %v3150 = vadd.f32 %v2889, %v3149
        %v3151 = vpop.f32.mrb[0].mxu0
        %v3152 = vpop.f32.mrb[0].mxu0
        %v3153 = vadd.f32 %v2889, %v3152
        %v3154 = vpop.f32.mrb[0].mxu0
        %3155 = vmatprep.mubr.bf16.mxu0 %v2777
        %3156 = vmatmul.mubr.bf16.gmra.mrb[0].mxu0 %v2776
        %v3157 = vpop.f32.mrb[0].mxu0
        %v3158 = vadd.f32 %v2889, %v3157
        %v3159 = vpop.f32.mrb[0].mxu0
        %v3160 = vpop.f32.mrb[0].mxu0
        %v3161 = vadd.f32 %v2889, %v3160
        %v3162 = vpop.f32.mrb[0].mxu0
        %3163 = vmatprep.mubr.bf16.mxu0 %v2781
        %3164 = vmatmul.mubr.bf16.gmra.mrb[0].mxu0 %v2780
        %v3165 = vpop.f32.mrb[0].mxu0
        %v3166 = vadd.f32 %v2889, %v3165
        %v3167 = vpop.f32.mrb[0].mxu0
        %v3168 = vpop.f32.mrb[0].mxu0
        %v3169 = vadd.f32 %v2889, %v3168
        %v3170 = vpop.f32.mrb[0].mxu0
        %3171 = vmatprep.mubr.bf16.mxu0 %v2785
        %3172 = vmatmul.mubr.bf16.gmra.mrb[0].mxu0 %v2784
        %v3173 = vpop.f32.mrb[0].mxu0
        %v3174 = vadd.f32 %v2889, %v3173
        %v3175 = vpop.f32.mrb[0].mxu0
        %v3176 = vpop.f32.mrb[0].mxu0
        %v3177 = vadd.f32 %v2889, %v3176
        %v3178 = vpop.f32.mrb[0].mxu0
        %3179 = vmatprep.mubr.bf16.mxu0 %v2789
        %3180 = vmatmul.mubr.bf16.gmra.mrb[0].mxu0 %v2788
        %v3181 = vpop.f32.mrb[0].mxu0
        %v3182 = vadd.f32 %v2889, %v3181
        %v3183 = vpop.f32.mrb[0].mxu0
        %v3184 = vpop.f32.mrb[0].mxu0
        %v3185 = vadd.f32 %v2889, %v3184
        %v3186 = vpop.f32.mrb[0].mxu0
        %3187 = vmatprep.mubr.bf16.mxu0 %v2793
        %3188 = vmatmul.mubr.bf16.gmra.mrb[0].mxu0 %v2792
        %v3189 = vpop.f32.mrb[0].mxu0
        %v3190 = vadd.f32 %v2889, %v3189
        %v3191 = vpop.f32.mrb[0].mxu0
        %v3192 = vpop.f32.mrb[0].mxu0
        %v3193 = vadd.f32 %v2889, %v3192
        %v3194 = vpop.f32.mrb[0].mxu0
        %3195 = vmatprep.mubr.bf16.mxu0 %v2797
        %3196 = vmatmul.mubr.bf16.gmra.mrb[0].mxu0 %v2796
        %v3197 = vpop.f32.mrb[0].mxu0
        %v3198 = vadd.f32 %v2889, %v3197
        %v3199 = vpop.f32.mrb[0].mxu0
        %v3200 = vpop.f32.mrb[0].mxu0
        %v3201 = vadd.f32 %v2889, %v3200
        %v3202 = vpop.f32.mrb[0].mxu0
        %3203 = vmatprep.mubr.bf16.mxu0 %v2801
        %3204 = vmatmul.mubr.bf16.gmra.mrb[0].mxu0 %v2800
        %v3205 = vpop.f32.mrb[0].mxu0
        %v3206 = vadd.f32 %v2889, %v3205
        %v3207 = vpop.f32.mrb[0].mxu0
        %v3208 = vpop.f32.mrb[0].mxu0
        %v3209 = vadd.f32 %v2889, %v3208
        %v3210 = vpop.f32.mrb[0].mxu0
        %3211 = vmatprep.mubr.bf16.mxu0 %v2805
        %3212 = vmatmul.mubr.bf16.gmra.mrb[0].mxu0 %v2804
        %v3213 = vpop.f32.mrb[0].mxu0
        %v3214 = vadd.f32 %v2889, %v3213
        %v3215 = vpop.f32.mrb[0].mxu0
        %v3216 = vpop.f32.mrb[0].mxu0
        %v3217 = vadd.f32 %v2889, %v3216
        %v3218 = vpop.f32.mrb[0].mxu0
        %3219 = vmatprep.mubr.bf16.mxu0 %v2809
        %3220 = vmatmul.mubr.bf16.gmra.mrb[0].mxu0 %v2808
        %v3221 = vpop.f32.mrb[0].mxu0
        %v3222 = vadd.f32 %v2889, %v3221
        %v3223 = vpop.f32.mrb[0].mxu0
        %v3224 = vpop.f32.mrb[0].mxu0
        %v3225 = vadd.f32 %v2889, %v3224
        %v3226 = vpop.f32.mrb[0].mxu0
        %3227 = vmatprep.mubr.bf16.mxu0 %v2813
        %3228 = vmatmul.mubr.bf16.gmra.mrb[0].mxu0 %v2812
        %v3229 = vpop.f32.mrb[0].mxu0
        %v3230 = vadd.f32 %v2889, %v3229
        %v3231 = vpop.f32.mrb[0].mxu0
        %v3232 = vpop.f32.mrb[0].mxu0
        %v3233 = vadd.f32 %v2889, %v3232
        %v3234 = vpop.f32.mrb[0].mxu0
        %3235 = vmatprep.mubr.bf16.mxu0 %v2817
        %3236 = vmatmul.mubr.bf16.gmra.mrb[0].mxu0 %v2816
        %v3237 = vpop.f32.mrb[0].mxu0
        %v3238 = vadd.f32 %v2889, %v3237
        %v3239 = vpop.f32.mrb[0].mxu0
        %v3240 = vpop.f32.mrb[0].mxu0
        %v3241 = vadd.f32 %v2889, %v3240
        %v3242 = vpop.f32.mrb[0].mxu0
        %3243 = vdwg.mxu0
        %3244 = vmatprep.subr.bf16.mxu0 0
        %3245 = vmatpush1.bf16.msra.mxu0 %v3035
        %3246 = vmatprep.subr.bf16.mxu0 0
        %3247 = vmatpush1.bf16.msra.mxu0 %v3036
        %3248 = vmatprep.subr.bf16.mxu0 0
        %3249 = vmatpush1.bf16.msra.mxu0 %v3037
        %3250 = vmatprep.subr.bf16.mxu0 0
        %3251 = vmatpush1.bf16.msra.mxu0 %v3038
        %3252 = vmatprep.subr.bf16.mxu0 0
        %3253 = vmatpush1.bf16.msra.mxu0 %v3039
        %3254 = vmatprep.subr.bf16.mxu0 0
        %3255 = vmatpush1.bf16.msra.mxu0 %v3040
        %3256 = vmatprep.subr.bf16.mxu0 0
        %3257 = vmatpush1.bf16.msra.mxu0 %v3041
        %3258 = vmatprep.subr.bf16.mxu0 0
        %3259 = vmatpush1.bf16.msra.mxu0 %v3042
        %3260 = vmatprep.subr.bf16.mxu0 0
        %3261 = vmatpush1.bf16.msra.mxu0 %v3043
        %3262 = vmatprep.subr.bf16.mxu0 0
        %3263 = vmatpush1.bf16.msra.mxu0 %v3044
        %3264 = vmatprep.subr.bf16.mxu0 0
        %3265 = vmatpush1.bf16.msra.mxu0 %v3045
        %3266 = vmatprep.subr.bf16.mxu0 0
        %3267 = vmatpush1.bf16.msra.mxu0 %v3046
        %3268 = vmatprep.subr.bf16.mxu0 0
        %3269 = vmatpush1.bf16.msra.mxu0 %v3047
        %3270 = vmatprep.subr.bf16.mxu0 0
        %3271 = vmatpush1.bf16.msra.mxu0 %v3048
        %3272 = vmatprep.subr.bf16.mxu0 0
        %3273 = vmatpush1.bf16.msra.mxu0 %v3049
        %3274 = vmatprep.subr.bf16.mxu0 0
        %3275 = vmatpush1.bf16.msra.mxu0 %v3050
        %3276 = vmatprep.mubr.bf16.mxu0 %v2759
        %3277 = vmatmul.mubr.bf16.gmra.mrb[0].mxu0 %v2758
        %v3278 = vpop.f32.mrb[0].mxu0
        %v3279 = vadd.f32 %v3118, %v3278
        %v3280 = vpop.f32.mrb[0].mxu0
        %v3281 = vpop.f32.mrb[0].mxu0
        %v3282 = vadd.f32 %v3121, %v3281
        %v3283 = vpop.f32.mrb[0].mxu0
        %3284 = vmatprep.mubr.bf16.mxu0 %v2763
        %3285 = vmatmul.mubr.bf16.gmra.mrb[0].mxu0 %v2762
        %v3286 = vpop.f32.mrb[0].mxu0
        %v3287 = vadd.f32 %v3126, %v3286
        %v3288 = vpop.f32.mrb[0].mxu0
        %v3289 = vpop.f32.mrb[0].mxu0
        %v3290 = vadd.f32 %v3129, %v3289
        %v3291 = vpop.f32.mrb[0].mxu0
        %3292 = vmatprep.mubr.bf16.mxu0 %v2767
        %3293 = vmatmul.mubr.bf16.gmra.mrb[0].mxu0 %v2766
        %v3294 = vpop.f32.mrb[0].mxu0
        %v3295 = vadd.f32 %v3134, %v3294
        %v3296 = vpop.f32.mrb[0].mxu0
        %v3297 = vpop.f32.mrb[0].mxu0
        %v3298 = vadd.f32 %v3137, %v3297
        %v3299 = vpop.f32.mrb[0].mxu0
        %3300 = vmatprep.mubr.bf16.mxu0 %v2771
        %3301 = vmatmul.mubr.bf16.gmra.mrb[0].mxu0 %v2770
        %v3302 = vpop.f32.mrb[0].mxu0
        %v3303 = vadd.f32 %v3142, %v3302
        %v3304 = vpop.f32.mrb[0].mxu0
        %v3305 = vpop.f32.mrb[0].mxu0
        %v3306 = vadd.f32 %v3145, %v3305
        %v3307 = vpop.f32.mrb[0].mxu0
        %3308 = vmatprep.mubr.bf16.mxu0 %v2775
        %3309 = vmatmul.mubr.bf16.gmra.mrb[0].mxu0 %v2774
        %v3310 = vpop.f32.mrb[0].mxu0
        %v3311 = vadd.f32 %v3150, %v3310
        %v3312 = vpop.f32.mrb[0].mxu0
        %v3313 = vpop.f32.mrb[0].mxu0
        %v3314 = vadd.f32 %v3153, %v3313
        %v3315 = vpop.f32.mrb[0].mxu0
        %3316 = vmatprep.mubr.bf16.mxu0 %v2779
        %3317 = vmatmul.mubr.bf16.gmra.mrb[0].mxu0 %v2778
        %v3318 = vpop.f32.mrb[0].mxu0
        %v3319 = vadd.f32 %v3158, %v3318
        %v3320 = vpop.f32.mrb[0].mxu0
        %v3321 = vpop.f32.mrb[0].mxu0
        %v3322 = vadd.f32 %v3161, %v3321
        %v3323 = vpop.f32.mrb[0].mxu0
        %3324 = vmatprep.mubr.bf16.mxu0 %v2783
        %3325 = vmatmul.mubr.bf16.gmra.mrb[0].mxu0 %v2782
        %v3326 = vpop.f32.mrb[0].mxu0
        %v3327 = vadd.f32 %v3166, %v3326
        %v3328 = vpop.f32.mrb[0].mxu0
        %v3329 = vpop.f32.mrb[0].mxu0
        %v3330 = vadd.f32 %v3169, %v3329
        %v3331 = vpop.f32.mrb[0].mxu0
        %3332 = vmatprep.mubr.bf16.mxu0 %v2787
        %3333 = vmatmul.mubr.bf16.gmra.mrb[0].mxu0 %v2786
        %v3334 = vpop.f32.mrb[0].mxu0
        %v3335 = vadd.f32 %v3174, %v3334
        %v3336 = vpop.f32.mrb[0].mxu0
        %v3337 = vpop.f32.mrb[0].mxu0
        %v3338 = vadd.f32 %v3177, %v3337
        %v3339 = vpop.f32.mrb[0].mxu0
        %3340 = vmatprep.mubr.bf16.mxu0 %v2791
        %3341 = vmatmul.mubr.bf16.gmra.mrb[0].mxu0 %v2790
        %v3342 = vpop.f32.mrb[0].mxu0
        %v3343 = vadd.f32 %v3182, %v3342
        %v3344 = vpop.f32.mrb[0].mxu0
        %v3345 = vpop.f32.mrb[0].mxu0
        %v3346 = vadd.f32 %v3185, %v3345
        %v3347 = vpop.f32.mrb[0].mxu0
        %3348 = vmatprep.mubr.bf16.mxu0 %v2795
        %3349 = vmatmul.mubr.bf16.gmra.mrb[0].mxu0 %v2794
        %v3350 = vpop.f32.mrb[0].mxu0
        %v3351 = vadd.f32 %v3190, %v3350
        %v3352 = vpop.f32.mrb[0].mxu0
        %v3353 = vpop.f32.mrb[0].mxu0
        %v3354 = vadd.f32 %v3193, %v3353
        %v3355 = vpop.f32.mrb[0].mxu0
        %3356 = vmatprep.mubr.bf16.mxu0 %v2799
        %3357 = vmatmul.mubr.bf16.gmra.mrb[0].mxu0 %v2798
        %v3358 = vpop.f32.mrb[0].mxu0
        %v3359 = vadd.f32 %v3198, %v3358
        %v3360 = vpop.f32.mrb[0].mxu0
        %v3361 = vpop.f32.mrb[0].mxu0
        %v3362 = vadd.f32 %v3201, %v3361
        %v3363 = vpop.f32.mrb[0].mxu0
        %3364 = vmatprep.mubr.bf16.mxu0 %v2803
        %3365 = vmatmul.mubr.bf16.gmra.mrb[0].mxu0 %v2802
        %v3366 = vpop.f32.mrb[0].mxu0
        %v3367 = vadd.f32 %v3206, %v3366
        %v3368 = vpop.f32.mrb[0].mxu0
        %v3369 = vpop.f32.mrb[0].mxu0
        %v3370 = vadd.f32 %v3209, %v3369
        %v3371 = vpop.f32.mrb[0].mxu0
        %3372 = vmatprep.mubr.bf16.mxu0 %v2807
        %3373 = vmatmul.mubr.bf16.gmra.mrb[0].mxu0 %v2806
        %v3374 = vpop.f32.mrb[0].mxu0
        %v3375 = vadd.f32 %v3214, %v3374
        %v3376 = vpop.f32.mrb[0].mxu0
        %v3377 = vpop.f32.mrb[0].mxu0
        %v3378 = vadd.f32 %v3217, %v3377
        %v3379 = vpop.f32.mrb[0].mxu0
        %3380 = vmatprep.mubr.bf16.mxu0 %v2811
        %3381 = vmatmul.mubr.bf16.gmra.mrb[0].mxu0 %v2810
        %v3382 = vpop.f32.mrb[0].mxu0
        %v3383 = vadd.f32 %v3222, %v3382
        %v3384 = vpop.f32.mrb[0].mxu0
        %v3385 = vpop.f32.mrb[0].mxu0
        %v3386 = vadd.f32 %v3225, %v3385
        %v3387 = vpop.f32.mrb[0].mxu0
        %3388 = vmatprep.mubr.bf16.mxu0 %v2815
        %3389 = vmatmul.mubr.bf16.gmra.mrb[0].mxu0 %v2814
        %v3390 = vpop.f32.mrb[0].mxu0
        %v3391 = vadd.f32 %v3230, %v3390
        %v3392 = vpop.f32.mrb[0].mxu0
        %v3393 = vpop.f32.mrb[0].mxu0
        %v3394 = vadd.f32 %v3233, %v3393
        %v3395 = vpop.f32.mrb[0].mxu0
        %3396 = vmatprep.mubr.bf16.mxu0 %v2819
        %3397 = vmatmul.mubr.bf16.gmra.mrb[0].mxu0 %v2818
        %v3398 = vpop.f32.mrb[0].mxu0
        %v3399 = vadd.f32 %v3238, %v3398
        %v3400 = vpop.f32.mrb[0].mxu0
        %v3401 = vpop.f32.mrb[0].mxu0
        %v3402 = vadd.f32 %v3241, %v3401
        %v3403 = vpop.f32.mrb[0].mxu0
        %3404 = vdwg.mxu0
        %v3405 = vmax.f32 %v3279, 0.0
        %v3406 = vmax.f32 %v3282, 0.0
        %v3407 = vmax.f32 %v3287, 0.0
        %v3408 = vmax.f32 %v3290, 0.0
        %v3409 = vmax.f32 %v3295, 0.0
        %v3410 = vmax.f32 %v3298, 0.0
        %v3411 = vmax.f32 %v3303, 0.0
        %v3412 = vmax.f32 %v3306, 0.0
        %v3413 = vmax.f32 %v3311, 0.0
        %v3414 = vmax.f32 %v3314, 0.0
        %v3415 = vmax.f32 %v3319, 0.0
        %v3416 = vmax.f32 %v3322, 0.0
        %v3417 = vmax.f32 %v3327, 0.0
        %v3418 = vmax.f32 %v3330, 0.0
        %v3419 = vmax.f32 %v3335, 0.0
        %v3420 = vmax.f32 %v3338, 0.0
        %v3421 = vmax.f32 %v3343, 0.0
        %v3422 = vmax.f32 %v3346, 0.0
        %v3423 = vmax.f32 %v3351, 0.0
        %v3424 = vmax.f32 %v3354, 0.0
        %v3425 = vmax.f32 %v3359, 0.0
        %v3426 = vmax.f32 %v3362, 0.0
        %v3427 = vmax.f32 %v3367, 0.0
        %v3428 = vmax.f32 %v3370, 0.0
        %v3429 = vmax.f32 %v3375, 0.0
        %v3430 = vmax.f32 %v3378, 0.0
        %v3431 = vmax.f32 %v3383, 0.0
        %v3432 = vmax.f32 %v3386, 0.0
        %v3433 = vmax.f32 %v3391, 0.0
        %v3434 = vmax.f32 %v3394, 0.0
        %v3435 = vmax.f32 %v3399, 0.0
        %v3436 = vmax.f32 %v3402, 0.0
        %3437 = vst [vmem:[%s272] sm:$0xff] %v3405
        %3438 = vst [vmem:[%s272 + $0x8] sm:$0xff] %v3406
        %3439 = vst [vmem:[%s272 + $0x10] sm:$0xff] %v3407
        %3440 = vst [vmem:[%s272 + $0x18] sm:$0xff] %v3408
        %3441 = vst [vmem:[%s272 + $0x20] sm:$0xff] %v3409
        %3442 = vst [vmem:[%s272 + $0x28] sm:$0xff] %v3410
        %3443 = vst [vmem:[%s272 + $0x30] sm:$0xff] %v3411
        %3444 = vst [vmem:[%s272 + $0x38] sm:$0xff] %v3412
        %3445 = vst [vmem:[%s272 + $0x40] sm:$0xff] %v3413
        %3446 = vst [vmem:[%s272 + $0x48] sm:$0xff] %v3414
        %3447 = vst [vmem:[%s272 + $0x50] sm:$0xff] %v3415
        %3448 = vst [vmem:[%s272 + $0x58] sm:$0xff] %v3416
        %3449 = vst [vmem:[%s272 + $0x60] sm:$0xff] %v3417
        %3450 = vst [vmem:[%s272 + $0x68] sm:$0xff] %v3418
        %3451 = vst [vmem:[%s272 + $0x70] sm:$0xff] %v3419
        %3452 = vst [vmem:[%s272 + $0x78] sm:$0xff] %v3420
        %3453 = vst [vmem:[%s272 + $0x80] sm:$0xff] %v3421
        %3454 = vst [vmem:[%s272 + $0x88] sm:$0xff] %v3422
        %3455 = vst [vmem:[%s272 + $0x90] sm:$0xff] %v3423
        %3456 = vst [vmem:[%s272 + $0x98] sm:$0xff] %v3424
        %3457 = vst [vmem:[%s272 + $0xa0] sm:$0xff] %v3425
        %3458 = vst [vmem:[%s272 + $0xa8] sm:$0xff] %v3426
        %3459 = vst [vmem:[%s272 + $0xb0] sm:$0xff] %v3427
        %3460 = vst [vmem:[%s272 + $0xb8] sm:$0xff] %v3428
        %3461 = vst [vmem:[%s272 + $0xc0] sm:$0xff] %v3429
        %3462 = vst [vmem:[%s272 + $0xc8] sm:$0xff] %v3430
        %3463 = vst [vmem:[%s272 + $0xd0] sm:$0xff] %v3431
        %3464 = vst [vmem:[%s272 + $0xd8] sm:$0xff] %v3432
        %3465 = vst [vmem:[%s272 + $0xe0] sm:$0xff] %v3433
        %3466 = vst [vmem:[%s272 + $0xe8] sm:$0xff] %v3434
        %3467 = vst [vmem:[%s272 + $0xf0] sm:$0xff] %v3435
        %3468 = vst [vmem:[%s272 + $0xf8] sm:$0xff] %v3436
        %s3469 = sand.u32 %s181, 1
        %s3470 = scalar_lea.sflag [#allocation3], %s3469
        %s3471 = sand.u32 %s181, 1
        %s3472 = smul.addr %s3471, 256
        %s3473 = scalar_lea.vmem [#allocation2], %s3472
        // Predicated region
        $region49: #{mlp_forward.1} parent=47 // pred_check
          %p3474 = pneg %p191
        $region50: #{mlp_forward.1} parent=47 // pred_check_branch
          %3476 = sbr.rel (%p3474) target = $region52
        $region51: #{mlp_forward.1} parent=47 // pred_region
          %s3477 = smul.u32 32, %s21
          %s3479 = ssub.s32 4096, 4096
          %3480 = vsyncadd %s3470, %s3479
          %s3481 = smul.addr %s3477, 128
          %s3482 = scalar_lea.hbm %s7, %s3481
          %s3483 = sshll.u32 %s3473, 4
          %s3484 = int_to_ptr.vmem [resolvable:$true] %s3483
          %3489 = dma.vmem_to_hbm [thread:$0]  %s3484, 4096, %s3482, %s3470, 128, 128, 8
        $region52: #{mlp_forward.1} parent=47 // pred_fallthru
          _
      $region48: #{mlp_forward.1} parent=5 // pred_fallthru
        _
      %p3490 = scmp.le.s32.totalorder 2, %s16
      // Predicated region
      $region53: #{mlp_forward.1} parent=5 // pred_check
        %p3491 = pneg %p3490
      $region54: #{mlp_forward.1} parent=5 // pred_check_branch
        %3493 = sbr.rel (%p3491) target = $region56
      $region55: #{mlp_forward.1} parent=5 // pred_region
        %s3494 = ssub.s32 %s16, 2
        // Predicated region
        $region57: #{mlp_forward.1} parent=55 // pred_check
          %p3495 = pneg %p197
        $region58: #{mlp_forward.1} parent=55 // pred_check_branch
          %3497 = sbr.rel (%p3495) target = $region60
        $region59: #{mlp_forward.1} parent=55 // pred_region
          %s3498 = sand.u32 %s182, 1
          %s3499 = scalar_lea.sflag [#allocation3], %s3498
          %s3500 = sand.u32 %s182, 1
          %s3501 = smul.addr %s3500, 256
          %s3502 = scalar_lea.vmem [#allocation2], %s3501
          %3503 = dma.done %s3499, 4096
        $region60: #{mlp_forward.1} parent=55 // pred_fallthru
          _
      $region56: #{mlp_forward.1} parent=5 // pred_fallthru
        _
    $region6: #{mlp_forward.1} parent=1 // loop_footer
      %s20 = sadd.s32 1, %s16
    $region7: #{mlp_forward.1} parent=1 // loop_footer_branch
      %15 = sbr.rel target = $region3
    $region8: #{mlp_forward.1} parent=1 // loop_exit
      _
    %3504 = vsyncpa [#allocation3], 1
    %s3505 = scalar_lea.sflag [#allocation3], 1
    %3506 = vsyncpa %s3505, 1

</llo_original>
